<compile_context>
chip_gen: v7x
topology: tpu7x:2x2x1
jax: 0.10.0
libtpu: 0.0.40
codegen_flags: <defaults>
</compile_context>

<pallas_src>
import functools
import math

import jax
import jax.numpy as jnp
from jax.experimental import pallas as pl
from jax.experimental.pallas import tpu as pltpu


_NEG_BIG = -3.0e38  # finite "-inf" for max-reduction padding


def _round_up(x, m):
    return ((x + m - 1) // m) * m


def _pick_tile(total, cap, unit):
    """Largest multiple of `unit` dividing `total` (itself a multiple of unit), <= cap."""
    t = min(cap, total)
    t -= t % unit
    while total % t:
        t -= unit
    return t


# --------------------------------------------------------------------------
# Kernel 1: fused per-row avg + max over the last axis.
# Grid = (row blocks [parallel], HW blocks [arbitrary, accumulated in-output]).
# --------------------------------------------------------------------------
def _avgmax_kernel(x_ref, avg_ref, max_ref, *, real_p, inv_p, need_mask):
    k = pl.program_id(1)
    tk = x_ref.shape[1]
    x = x_ref[...]
    if need_mask:
        cols = jax.lax.broadcasted_iota(jnp.int32, x.shape, 1) + k * tk
        valid = cols < real_p
        xs = jnp.where(valid, x, 0.0)
        xm = jnp.where(valid, x, _NEG_BIG)
    else:
        xs, xm = x, x
    psum = jnp.sum(xs, axis=1, keepdims=True)
    pmax = jnp.max(xm, axis=1, keepdims=True)

    @pl.when(k == 0)
    def _():
        avg_ref[...] = psum
        max_ref[...] = pmax

    @pl.when(k > 0)
    def _():
        avg_ref[...] = avg_ref[...] + psum
        max_ref[...] = jnp.maximum(max_ref[...], pmax)

    @pl.when(k == pl.num_programs(1) - 1)
    def _():
        avg_ref[...] = avg_ref[...] * inv_p


def pallas_avgmax_rows(x2d):
    """x2d: (R, P) -> (avg (R,), max (R,)) reduced over the last axis."""
    R, P = x2d.shape
    tr = min(256, _round_up(R, 8))
    Rp = _round_up(R, tr)
    Pp = _round_up(P, 128)
    tk = _pick_tile(Pp, 2048, 128)          # block <= 256*2048*4B = 2 MiB
    xp = jnp.pad(x2d, ((0, Rp - R), (0, Pp - P)))
    avg, mx = pl.pallas_call(
        functools.partial(_avgmax_kernel, real_p=P, inv_p=1.0 / P,
                          need_mask=(P != Pp)),
        out_shape=(jax.ShapeDtypeStruct((Rp, 1), jnp.float32),
                   jax.ShapeDtypeStruct((Rp, 1), jnp.float32)),
        grid=(Rp // tr, Pp // tk),
        in_specs=[pl.BlockSpec((tr, tk), lambda i, k: (i, k))],
        out_specs=(pl.BlockSpec((tr, 1), lambda i, k: (i, 0)),
                   pl.BlockSpec((tr, 1), lambda i, k: (i, 0))),
        compiler_params=pltpu.CompilerParams(
            dimension_semantics=("parallel", "arbitrary")),
    )(xp)
    return avg[:R, 0], mx[:R, 0]


# --------------------------------------------------------------------------
# Kernel 2: channel-attention MLP, fully fused:
#   sigmoid( fc2(relu(fc1(avg))) + fc2(relu(fc1(max))) )
# Both weight matrices stay resident in VMEM; everything (8,128)-padded.
# --------------------------------------------------------------------------
def _ca_mlp_kernel(avg_ref, max_ref, w1_ref, w2_ref, o_ref):
    def mlp(v):
        h = jnp.maximum(
            jnp.dot(v, w1_ref[...], preferred_element_type=jnp.float32), 0.0)
        return jnp.dot(h, w2_ref[...], preferred_element_type=jnp.float32)

    o_ref[...] = jax.nn.sigmoid(mlp(avg_ref[...]) + mlp(max_ref[...]))


def pallas_ca_mlp(avg_bc, max_bc, fc1, fc2):
    """avg/max: (B, C); fc1: (mid, C, 1, 1); fc2: (C, mid, 1, 1) -> (B, C)."""
    B, C = avg_bc.shape
    mid = fc1.shape[0]
    Bp = _round_up(B, 8)
    Cp = _round_up(C, 128)
    Mp = _round_up(mid, 128)
    ap = jnp.pad(avg_bc, ((0, Bp - B), (0, Cp - C)))
    mp_ = jnp.pad(max_bc, ((0, Bp - B), (0, Cp - C)))
    w1m = jnp.pad(fc1.reshape(mid, C).T, ((0, Cp - C), (0, Mp - mid)))
    w2m = jnp.pad(fc2.reshape(C, mid).T, ((0, Mp - mid), (0, Cp - C)))
    att = pl.pallas_call(
        _ca_mlp_kernel,
        out_shape=jax.ShapeDtypeStruct((Bp, Cp), jnp.float32),
    )(ap, mp_, w1m, w2m)
    return att[:B, :C]


# --------------------------------------------------------------------------
# Kernel 3: channel gating (recomputed in-register, never written to HBM) +
#           fused spatial avg/max over channels of the gated map.
# x: (B, Cp, HWp), ca: (B, Cp, 1) -> savg, smax: (B, 1, HWp)
# --------------------------------------------------------------------------
def _chstats_kernel(x_ref, a_ref, avg_ref, max_ref, *, real_c, inv_c):
    y = x_ref[...] * a_ref[...]                 # (1, Cp, t): broadcast over lanes
    if real_c == x_ref.shape[1]:
        ym = y
    else:
        ch = jax.lax.broadcasted_iota(jnp.int32, y.shape, 1)
        ym = jnp.where(ch < real_c, y, _NEG_BIG)
    avg_ref[...] = jnp.sum(y, axis=1, keepdims=True) * inv_c
    max_ref[...] = jnp.max(ym, axis=1, keepdims=True)


def pallas_chgate_spatial_stats(xp, cap_, real_c):
    B, Cp, HWp = xp.shape
    t = _pick_tile(HWp, 512, 128)
    return pl.pallas_call(
        functools.partial(_chstats_kernel, real_c=real_c, inv_c=1.0 / real_c),
        out_shape=(jax.ShapeDtypeStruct((B, 1, HWp), jnp.float32),
                   jax.ShapeDtypeStruct((B, 1, HWp), jnp.float32)),
        grid=(B, HWp // t),
        in_specs=[pl.BlockSpec((1, Cp, t), lambda b, j: (b, 0, j)),
                  pl.BlockSpec((1, Cp, 1), lambda b, j: (b, 0, 0))],
        out_specs=(pl.BlockSpec((1, 1, t), lambda b, j: (b, 0, j)),
                   pl.BlockSpec((1, 1, t), lambda b, j: (b, 0, j))),
        compiler_params=pltpu.CompilerParams(
            dimension_semantics=("parallel", "parallel")),
    )(xp, cap_)


# --------------------------------------------------------------------------
# Kernel 4: 7x7 spatial conv (2 -> 1 channel, no bias) + sigmoid, done as
# shifted-window MACs directly on the tiny zero-padded stats map.  Weights
# (2*k*k scalars) live in SMEM; no im2col / patches matrix in HBM.
# --------------------------------------------------------------------------
def _sa_conv_kernel(m_ref, w_ref, o_ref, *, ksize, h, w):
    m = m_ref[...]                               # (1, 2, h+k-1, w+k-1)
    acc = jnp.zeros((1, h, w), jnp.float32)
    idx = 0
    for c in range(2):
        for i in range(ksize):
            for j in range(ksize):
                acc = acc + m[:, c, i:i + h, j:j + w] * w_ref[idx]
                idx += 1
    o_ref[...] = jax.nn.sigmoid(acc)


def pallas_sa_conv(cat_bchw, w_oihw):
    """cat: (B, 2, H, W); w: (1, 2, k, k) -> sigmoid(conv2d(cat, w)): (B, H, W)."""
    B, _, H, W = cat_bchw.shape
    k = w_oihw.shape[-1]
    pad = (k - 1) // 2
    mp = jnp.pad(cat_bchw, ((0, 0), (0, 0), (pad, pad), (pad, pad)))
    hp, wp = H + 2 * pad, W + 2 * pad
    w_flat = w_oihw.reshape(-1).astype(jnp.float32)    # order (c, ki, kj)
    return pl.pallas_call(
        functools.partial(_sa_conv_kernel, ksize=k, h=H, w=W),
        out_shape=jax.ShapeDtypeStruct((B, H, W), jnp.float32),
        grid=(B,),
        in_specs=[pl.BlockSpec((1, 2, hp, wp), lambda b: (b, 0, 0, 0)),
                  pl.BlockSpec(memory_space=pltpu.MemorySpace.SMEM)],
        out_specs=pl.BlockSpec((1, H, W), lambda b: (b, 0, 0)),
        compiler_params=pltpu.CompilerParams(dimension_semantics=("parallel",)),
    )(mp, w_flat)


# --------------------------------------------------------------------------
# Kernel 5: final fused gate  out = x * ca * sa  (both attentions broadcast
# inside the kernel; nothing broadcast/materialized in HBM).
# --------------------------------------------------------------------------
def _gate_kernel(x_ref, a_ref, s_ref, o_ref):
    o_ref[...] = x_ref[...] * a_ref[...] * s_ref[...]


def pallas_cbam_gate(xp, cap_, sap):
    B, Cp, HWp = xp.shape
    t = _pick_tile(HWp, 512, 128)
    return pl.pallas_call(
        _gate_kernel,
        out_shape=jax.ShapeDtypeStruct((B, Cp, HWp), jnp.float32),
        grid=(B, HWp // t),
        in_specs=[pl.BlockSpec((1, Cp, t), lambda b, j: (b, 0, j)),
                  pl.BlockSpec((1, Cp, 1), lambda b, j: (b, 0, 0)),
                  pl.BlockSpec((1, 1, t), lambda b, j: (b, 0, j))],
        out_specs=pl.BlockSpec((1, Cp, t), lambda b, j: (b, 0, j)),
        compiler_params=pltpu.CompilerParams(
            dimension_semantics=("parallel", "parallel")),
    )(xp, cap_, sap)


# --------------------------------------------------------------------------
# JAX-level glue
# --------------------------------------------------------------------------
def cbam_forward(x, p):
    """x: (B, C, H, W) NCHW, p: dict with fc1 (mid,C,1,1), fc2 (C,mid,1,1),
    sa (1,2,k,k).  Matches cbam_block.forward of the PyTorch reference."""
    B, C, H, W = x.shape
    HW = H * W

    # ---- channel attention: fused global avg+max pooling + fused MLP ----
    avg, mx = pallas_avgmax_rows(x.reshape(B * C, HW))
    ca = pallas_ca_mlp(avg.reshape(B, C), mx.reshape(B, C),
                       p["fc1"], p["fc2"])                     # (B, C)

    # ---- channel gate + spatial avg/max over channels (fused, one pass) ----
    Cp = _round_up(C, 8)
    HWp = _round_up(HW, 128)
    xp = jnp.pad(x.reshape(B, C, HW), ((0, 0), (0, Cp - C), (0, HWp - HW)))
    cap_ = jnp.pad(ca.reshape(B, C, 1), ((0, 0), (0, Cp - C), (0, 0)))
    savg, smax = pallas_chgate_spatial_stats(xp, cap_, C)      # (B, 1, HWp)
    savg = savg[:, :, :HW].reshape(B, 1, H, W)
    smax = smax[:, :, :HW].reshape(B, 1, H, W)

    # ---- spatial attention: 7x7 conv over [avg; max] + sigmoid (one kernel) --
    cat = jnp.concatenate([savg, smax], axis=1)                # (B, 2, H, W)
    sa = pallas_sa_conv(cat, p["sa"])                          # (B, H, W)
    sap = jnp.pad(sa.reshape(B, 1, HW), ((0, 0), (0, 0), (0, HWp - HW)))

    # ---- final fused gate: out = x * ca * sa ----
    out = pallas_cbam_gate(xp, cap_, sap)                      # (B, Cp, HWp)
    return out[:, :C, :HW].reshape(B, C, H, W)


# --------------------------------------------------------------------------
# Pure-JAX reference (for self-check) and parameter construction
# --------------------------------------------------------------------------
def cbam_reference(x, p):
    B, C, H, W = x.shape
    mid = p["fc1"].shape[0]
    avg = jnp.mean(x, axis=(2, 3))
    mx = jnp.max(x, axis=(2, 3))
    w1 = p["fc1"].reshape(mid, C)
    w2 = p["fc2"].reshape(C, mid)

    def mlp(v):
        return jnp.maximum(v @ w1.T, 0.0) @ w2.T

    ca = jax.nn.sigmoid(mlp(avg) + mlp(mx))
    x1 = x * ca[:, :, None, None]
    savg = jnp.mean(x1, axis=1, keepdims=True)
    smax = jnp.max(x1, axis=1, keepdims=True)
    cat = jnp.concatenate([savg, smax], axis=1)
    pad = (p["sa"].shape[-1] - 1) // 2
    sa = jax.lax.conv_general_dilated(
        cat, p["sa"], window_strides=(1, 1), padding=((pad, pad), (pad, pad)),
        dimension_numbers=("NCHW", "OIHW", "NCHW"))
    return x1 * jax.nn.sigmoid(sa)


def build_cbam_params(key, channel, ratio=8, kernel_size=7):
    k1, k2, k3 = jax.random.split(key, 3)
    mid = channel // ratio

    def conv_w(k, cout, cin, kh, kw):
        fan_in = cin * kh * kw
        bound = 1.0 / math.sqrt(fan_in)
        return jax.random.uniform(k, (cout, cin, kh, kw), jnp.float32,
                                  -bound, bound)

    return {"fc1": conv_w(k1, mid, channel, 1, 1),
            "fc2": conv_w(k2, channel, mid, 1, 1),
            "sa": conv_w(k3, 1, 2, kernel_size, kernel_size)}


# --------------------------------------------------------------------------
if __name__ == "__main__":
    key = jax.random.PRNGKey(0)
    kp, kx = jax.random.split(key)
    B, C, H, W = 2, 32, 16, 16          # ratio=8 -> hidden 4 (needs C >= 8)
    params = build_cbam_params(kp, C, ratio=8, kernel_size=7)
    x = jax.random.normal(kx, (B, C, H, W), jnp.float32)

    out = jax.jit(cbam_forward)(x, params)
    out = jax.block_until_ready(out)

    assert out.shape == (B, C, H, W)
    assert bool(jnp.all(jnp.isfinite(out)))
    ref = cbam_reference(x, params)
    assert bool(jnp.allclose(out, ref, atol=2e-2, rtol=2e-2)), \
        float(jnp.max(jnp.abs(out - ref)))
    print("KERNEL_OK")
</pallas_src>

<mosaic_0001>
module attributes {stable_mosaic.version = 11 : i64} {
  func.func @_avgmax_kernel(%arg0: i32, %arg1: i32, %arg2: memref<64x256xf32, #tpu.memory_space<vmem>>, %arg3: memref<64x1xf32, #tpu.memory_space<vmem>>, %arg4: memref<64x1xf32, #tpu.memory_space<vmem>>) attributes {dimension_semantics = [#tpu.dimension_semantics<parallel>, #tpu.dimension_semantics<arbitrary>], iteration_bounds = array<i64: 1, 1>, scalar_prefetch = 0 : i64, scratch_operands = 0 : i64, tpu.core_type = #tpu.core_type<tc>, window_params = [{transform_indices = @transform_0, window_bounds = array<i64: 64, 256>}, {transform_indices = @transform_1, window_bounds = array<i64: 64, 1>}, {transform_indices = @transform_2, window_bounds = array<i64: 64, 1>}]} {
    %c0 = arith.constant 0 : index
    %c0_0 = arith.constant 0 : index
    %0 = vector.load %arg2[%c0, %c0_0] : memref<64x256xf32, #tpu.memory_space<vmem>>, vector<64x256xf32>
    %cst = arith.constant dense<0.000000e+00> : vector<64xf32>
    %1 = vector.multi_reduction <add>, %0, %cst [1] : vector<64x256xf32> to vector<64xf32>
    %2 = vector.shape_cast %1 : vector<64xf32> to vector<64x1xf32>
    %cst_1 = arith.constant dense<0xFF800000> : vector<64xf32>
    %3 = vector.multi_reduction <maximumf>, %0, %cst_1 [1] : vector<64x256xf32> to vector<64xf32>
    %4 = vector.shape_cast %3 : vector<64xf32> to vector<64x1xf32>
    %c0_i32 = arith.constant 0 : i32
    %5 = arith.cmpi eq, %arg1, %c0_i32 : i32
    %6 = arith.extui %5 : i1 to i32
    %c0_i32_2 = arith.constant 0 : i32
    %7 = arith.cmpi ne, %6, %c0_i32_2 : i32
    scf.if %7 {
      %c0_7 = arith.constant 0 : index
      %c0_8 = arith.constant 0 : index
      %14 = vector.load %arg3[%c0_7, %c0_8] : memref<64x1xf32, #tpu.memory_space<vmem>>, vector<64x1xf32>
      tpu.vector_store %arg3[%c0_7, %c0_8], %2 {strides = array<i32>} : memref<64x1xf32, #tpu.memory_space<vmem>>, vector<64x1xf32>,
      %c0_9 = arith.constant 0 : index
      %c0_10 = arith.constant 0 : index
      %15 = vector.load %arg4[%c0_9, %c0_10] : memref<64x1xf32, #tpu.memory_space<vmem>>, vector<64x1xf32>
      tpu.vector_store %arg4[%c0_9, %c0_10], %4 {strides = array<i32>} : memref<64x1xf32, #tpu.memory_space<vmem>>, vector<64x1xf32>,
    } else {
    }
    %c0_i32_3 = arith.constant 0 : i32
    %8 = arith.cmpi sgt, %arg1, %c0_i32_3 : i32
    %9 = arith.extui %8 : i1 to i32
    %c0_i32_4 = arith.constant 0 : i32
    %10 = arith.cmpi ne, %9, %c0_i32_4 : i32
    scf.if %10 {
      %c0_7 = arith.constant 0 : index
      %c0_8 = arith.constant 0 : index
      %14 = vector.load %arg3[%c0_7, %c0_8] : memref<64x1xf32, #tpu.memory_space<vmem>>, vector<64x1xf32>
      %15 = arith.addf %14, %2 : vector<64x1xf32>
      %c0_9 = arith.constant 0 : index
      %c0_10 = arith.constant 0 : index
      %16 = vector.load %arg3[%c0_9, %c0_10] : memref<64x1xf32, #tpu.memory_space<vmem>>, vector<64x1xf32>
      tpu.vector_store %arg3[%c0_9, %c0_10], %15 {strides = array<i32>} : memref<64x1xf32, #tpu.memory_space<vmem>>, vector<64x1xf32>,
      %c0_11 = arith.constant 0 : index
      %c0_12 = arith.constant 0 : index
      %17 = vector.load %arg4[%c0_11, %c0_12] : memref<64x1xf32, #tpu.memory_space<vmem>>, vector<64x1xf32>
      %18 = arith.maximumf %17, %4 : vector<64x1xf32>
      %c0_13 = arith.constant 0 : index
      %c0_14 = arith.constant 0 : index
      %19 = vector.load %arg4[%c0_13, %c0_14] : memref<64x1xf32, #tpu.memory_space<vmem>>, vector<64x1xf32>
      tpu.vector_store %arg4[%c0_13, %c0_14], %18 {strides = array<i32>} : memref<64x1xf32, #tpu.memory_space<vmem>>, vector<64x1xf32>,
    } else {
    }
    %c0_i32_5 = arith.constant 0 : i32
    %11 = arith.cmpi eq, %arg1, %c0_i32_5 : i32
    %12 = arith.extui %11 : i1 to i32
    %c0_i32_6 = arith.constant 0 : i32
    %13 = arith.cmpi ne, %12, %c0_i32_6 : i32
    scf.if %13 {
      %c0_7 = arith.constant 0 : index
      %c0_8 = arith.constant 0 : index
      %14 = vector.load %arg3[%c0_7, %c0_8] : memref<64x1xf32, #tpu.memory_space<vmem>>, vector<64x1xf32>
      %cst_9 = arith.constant 3.906250e-03 : f32
      %15 = vector.broadcast %cst_9 : f32 to vector<64x1xf32>
      %16 = arith.mulf %14, %15 : vector<64x1xf32>
      %c0_10 = arith.constant 0 : index
      %c0_11 = arith.constant 0 : index
      %17 = vector.load %arg3[%c0_10, %c0_11] : memref<64x1xf32, #tpu.memory_space<vmem>>, vector<64x1xf32>
      tpu.vector_store %arg3[%c0_10, %c0_11], %16 {strides = array<i32>} : memref<64x1xf32, #tpu.memory_space<vmem>>, vector<64x1xf32>,
    } else {
    }
    return
  }
  func.func @transform_0(%arg0: i32, %arg1: i32) -> (i32, i32) {
    %c0_i32 = arith.constant 0 : i32
    return %arg0, %arg1 : i32, i32
  }
  func.func @transform_1(%arg0: i32, %arg1: i32) -> (i32, i32) {
    %c0_i32 = arith.constant 0 : i32
    %c0_i32_0 = arith.constant 0 : i32
    return %arg0, %c0_i32 : i32, i32
  }
  func.func @transform_2(%arg0: i32, %arg1: i32) -> (i32, i32) {
    %c0_i32 = arith.constant 0 : i32
    %c0_i32_0 = arith.constant 0 : i32
    return %arg0, %c0_i32 : i32, i32
  }
}

module attributes {stable_mosaic.version = 11 : i64} {
  func.func @_ca_mlp_kernel(%arg0: memref<8x128xf32, #tpu.memory_space<vmem>>, %arg1: memref<8x128xf32, #tpu.memory_space<vmem>>, %arg2: memref<128x128xf32, #tpu.memory_space<vmem>>, %arg3: memref<128x128xf32, #tpu.memory_space<vmem>>, %arg4: memref<8x128xf32, #tpu.memory_space<vmem>>) attributes {dimension_semantics = [], scalar_prefetch = 0 : i64, scratch_operands = 0 : i64, tpu.core_type = #tpu.core_type<tc>} {
    %c0 = arith.constant 0 : index
    %c0_0 = arith.constant 0 : index
    %0 = vector.load %arg0[%c0, %c0_0] : memref<8x128xf32, #tpu.memory_space<vmem>>, vector<8x128xf32>
    %c0_1 = arith.constant 0 : index
    %c0_2 = arith.constant 0 : index
    %1 = vector.load %arg2[%c0_1, %c0_2] : memref<128x128xf32, #tpu.memory_space<vmem>>, vector<128x128xf32>
    %cst = arith.constant dense<0.000000e+00> : vector<8x128xf32>
    %2 = tpu.matmul %0, %1, %cst {dimension_numbers = #tpu.dot_dimension_numbers<[1], [0], [0], [1], [0, 0, 1, 1], [], []>} : vector<8x128xf32>, vector<128x128xf32>, vector<8x128xf32> -> vector<8x128xf32>
    %cst_3 = arith.constant 0.000000e+00 : f32
    %3 = vector.broadcast %cst_3 : f32 to vector<8x128xf32>
    %4 = arith.maximumf %2, %3 : vector<8x128xf32>
    %c0_4 = arith.constant 0 : index
    %c0_5 = arith.constant 0 : index
    %5 = vector.load %arg3[%c0_4, %c0_5] : memref<128x128xf32, #tpu.memory_space<vmem>>, vector<128x128xf32>
    %cst_6 = arith.constant dense<0.000000e+00> : vector<8x128xf32>
    %6 = tpu.matmul %4, %5, %cst_6 {dimension_numbers = #tpu.dot_dimension_numbers<[1], [0], [0], [1], [0, 0, 1, 1], [], []>} : vector<8x128xf32>, vector<128x128xf32>, vector<8x128xf32> -> vector<8x128xf32>
    %c0_7 = arith.constant 0 : index
    %c0_8 = arith.constant 0 : index
    %7 = vector.load %arg1[%c0_7, %c0_8] : memref<8x128xf32, #tpu.memory_space<vmem>>, vector<8x128xf32>
    %c0_9 = arith.constant 0 : index
    %c0_10 = arith.constant 0 : index
    %8 = vector.load %arg2[%c0_9, %c0_10] : memref<128x128xf32, #tpu.memory_space<vmem>>, vector<128x128xf32>
    %cst_11 = arith.constant dense<0.000000e+00> : vector<8x128xf32>
    %9 = tpu.matmul %7, %8, %cst_11 {dimension_numbers = #tpu.dot_dimension_numbers<[1], [0], [0], [1], [0, 0, 1, 1], [], []>} : vector<8x128xf32>, vector<128x128xf32>, vector<8x128xf32> -> vector<8x128xf32>
    %cst_12 = arith.constant 0.000000e+00 : f32
    %10 = vector.broadcast %cst_12 : f32 to vector<8x128xf32>
    %11 = arith.maximumf %9, %10 : vector<8x128xf32>
    %c0_13 = arith.constant 0 : index
    %c0_14 = arith.constant 0 : index
    %12 = vector.load %arg3[%c0_13, %c0_14] : memref<128x128xf32, #tpu.memory_space<vmem>>, vector<128x128xf32>
    %cst_15 = arith.constant dense<0.000000e+00> : vector<8x128xf32>
    %13 = tpu.matmul %11, %12, %cst_15 {dimension_numbers = #tpu.dot_dimension_numbers<[1], [0], [0], [1], [0, 0, 1, 1], [], []>} : vector<8x128xf32>, vector<128x128xf32>, vector<8x128xf32> -> vector<8x128xf32>
    %14 = arith.addf %6, %13 : vector<8x128xf32>
    %15 = arith.negf %14 : vector<8x128xf32>
    %16 = math.exp %15 : vector<8x128xf32>
    %cst_16 = arith.constant 1.000000e+00 : f32
    %17 = vector.broadcast %cst_16 : f32 to vector<8x128xf32>
    %18 = arith.addf %17, %16 : vector<8x128xf32>
    %19 = arith.divf %17, %18 : vector<8x128xf32>
    %c0_17 = arith.constant 0 : index
    %c0_18 = arith.constant 0 : index
    %20 = vector.load %arg4[%c0_17, %c0_18] : memref<8x128xf32, #tpu.memory_space<vmem>>, vector<8x128xf32>
    tpu.vector_store %arg4[%c0_17, %c0_18], %19 {strides = array<i32>} : memref<8x128xf32, #tpu.memory_space<vmem>>, vector<8x128xf32>,
    return
  }
}

module attributes {stable_mosaic.version = 11 : i64} {
  func.func @_chstats_kernel(%arg0: i32, %arg1: i32, %arg2: memref<1x32x256xf32, #tpu.memory_space<vmem>>, %arg3: memref<1x32x1xf32, #tpu.memory_space<vmem>>, %arg4: memref<1x1x256xf32, #tpu.memory_space<vmem>>, %arg5: memref<1x1x256xf32, #tpu.memory_space<vmem>>) attributes {dimension_semantics = [#tpu.dimension_semantics<parallel>, #tpu.dimension_semantics<parallel>], iteration_bounds = array<i64: 2, 1>, scalar_prefetch = 0 : i64, scratch_operands = 0 : i64, tpu.core_type = #tpu.core_type<tc>, window_params = [{transform_indices = @transform_0, window_bounds = array<i64: 1, 32, 256>}, {transform_indices = @transform_1, window_bounds = array<i64: 1, 32, 1>}, {transform_indices = @transform_2, window_bounds = array<i64: 1, 1, 256>}, {transform_indices = @transform_3, window_bounds = array<i64: 1, 1, 256>}]} {
    %c0 = arith.constant 0 : index
    %c0_0 = arith.constant 0 : index
    %c0_1 = arith.constant 0 : index
    %0 = vector.load %arg2[%c0, %c0_0, %c0_1] : memref<1x32x256xf32, #tpu.memory_space<vmem>>, vector<1x32x256xf32>
    %c0_2 = arith.constant 0 : index
    %c0_3 = arith.constant 0 : index
    %c0_4 = arith.constant 0 : index
    %1 = vector.load %arg3[%c0_2, %c0_3, %c0_4] : memref<1x32x1xf32, #tpu.memory_space<vmem>>, vector<1x32x1xf32>
    %2 = vector.broadcast %1 : vector<1x32x1xf32> to vector<1x32x256xf32>
    %3 = arith.mulf %0, %2 : vector<1x32x256xf32>
    %cst = arith.constant dense<0.000000e+00> : vector<1x256xf32>
    %4 = vector.multi_reduction <add>, %3, %cst [1] : vector<1x32x256xf32> to vector<1x256xf32>
    %5 = vector.shape_cast %4 : vector<1x256xf32> to vector<1x1x256xf32>
    %cst_5 = arith.constant 3.125000e-02 : f32
    %6 = vector.broadcast %cst_5 : f32 to vector<1x1x256xf32>
    %7 = arith.mulf %5, %6 : vector<1x1x256xf32>
    %c0_6 = arith.constant 0 : index
    %c0_7 = arith.constant 0 : index
    %c0_8 = arith.constant 0 : index
    %8 = vector.load %arg4[%c0_6, %c0_7, %c0_8] : memref<1x1x256xf32, #tpu.memory_space<vmem>>, vector<1x1x256xf32>
    tpu.vector_store %arg4[%c0_6, %c0_7, %c0_8], %7 {strides = array<i32>} : memref<1x1x256xf32, #tpu.memory_space<vmem>>, vector<1x1x256xf32>,
    %cst_9 = arith.constant dense<0xFF800000> : vector<1x256xf32>
    %9 = vector.multi_reduction <maximumf>, %3, %cst_9 [1] : vector<1x32x256xf32> to vector<1x256xf32>
    %10 = vector.shape_cast %9 : vector<1x256xf32> to vector<1x1x256xf32>
    %c0_10 = arith.constant 0 : index
    %c0_11 = arith.constant 0 : index
    %c0_12 = arith.constant 0 : index
    %11 = vector.load %arg5[%c0_10, %c0_11, %c0_12] : memref<1x1x256xf32, #tpu.memory_space<vmem>>, vector<1x1x256xf32>
    tpu.vector_store %arg5[%c0_10, %c0_11, %c0_12], %10 {strides = array<i32>} : memref<1x1x256xf32, #tpu.memory_space<vmem>>, vector<1x1x256xf32>,
    return
  }
  func.func @transform_0(%arg0: i32, %arg1: i32) -> (i32, i32, i32) {
    %c0_i32 = arith.constant 0 : i32
    %c0_i32_0 = arith.constant 0 : i32
    return %arg0, %c0_i32, %arg1 : i32, i32, i32
  }
  func.func @transform_1(%arg0: i32, %arg1: i32) -> (i32, i32, i32) {
    %c0_i32 = arith.constant 0 : i32
    %c0_i32_0 = arith.constant 0 : i32
    %c0_i32_1 = arith.constant 0 : i32
    return %arg0, %c0_i32, %c0_i32_0 : i32, i32, i32
  }
  func.func @transform_2(%arg0: i32, %arg1: i32) -> (i32, i32, i32) {
    %c0_i32 = arith.constant 0 : i32
    %c0_i32_0 = arith.constant 0 : i32
    return %arg0, %c0_i32, %arg1 : i32, i32, i32
  }
  func.func @transform_3(%arg0: i32, %arg1: i32) -> (i32, i32, i32) {
    %c0_i32 = arith.constant 0 : i32
    %c0_i32_0 = arith.constant 0 : i32
    return %arg0, %c0_i32, %arg1 : i32, i32, i32
  }
}

module attributes {stable_mosaic.version = 11 : i64} {
  func.func @_gate_kernel(%arg0: i32, %arg1: i32, %arg2: memref<1x32x256xf32, #tpu.memory_space<vmem>>, %arg3: memref<1x32x1xf32, #tpu.memory_space<vmem>>, %arg4: memref<1x1x256xf32, #tpu.memory_space<vmem>>, %arg5: memref<1x32x256xf32, #tpu.memory_space<vmem>>) attributes {dimension_semantics = [#tpu.dimension_semantics<parallel>, #tpu.dimension_semantics<parallel>], iteration_bounds = array<i64: 2, 1>, scalar_prefetch = 0 : i64, scratch_operands = 0 : i64, tpu.core_type = #tpu.core_type<tc>, window_params = [{transform_indices = @transform_0, window_bounds = array<i64: 1, 32, 256>}, {transform_indices = @transform_1, window_bounds = array<i64: 1, 32, 1>}, {transform_indices = @transform_2, window_bounds = array<i64: 1, 1, 256>}, {transform_indices = @transform_3, window_bounds = array<i64: 1, 32, 256>}]} {
    %c0 = arith.constant 0 : index
    %c0_0 = arith.constant 0 : index
    %c0_1 = arith.constant 0 : index
    %0 = vector.load %arg2[%c0, %c0_0, %c0_1] : memref<1x32x256xf32, #tpu.memory_space<vmem>>, vector<1x32x256xf32>
    %c0_2 = arith.constant 0 : index
    %c0_3 = arith.constant 0 : index
    %c0_4 = arith.constant 0 : index
    %1 = vector.load %arg3[%c0_2, %c0_3, %c0_4] : memref<1x32x1xf32, #tpu.memory_space<vmem>>, vector<1x32x1xf32>
    %2 = vector.broadcast %1 : vector<1x32x1xf32> to vector<1x32x256xf32>
    %3 = arith.mulf %0, %2 : vector<1x32x256xf32>
    %c0_5 = arith.constant 0 : index
    %c0_6 = arith.constant 0 : index
    %c0_7 = arith.constant 0 : index
    %4 = vector.load %arg4[%c0_5, %c0_6, %c0_7] : memref<1x1x256xf32, #tpu.memory_space<vmem>>, vector<1x1x256xf32>
    %5 = vector.broadcast %4 : vector<1x1x256xf32> to vector<1x32x256xf32>
    %6 = arith.mulf %3, %5 : vector<1x32x256xf32>
    %c0_8 = arith.constant 0 : index
    %c0_9 = arith.constant 0 : index
    %c0_10 = arith.constant 0 : index
    %7 = vector.load %arg5[%c0_8, %c0_9, %c0_10] : memref<1x32x256xf32, #tpu.memory_space<vmem>>, vector<1x32x256xf32>
    tpu.vector_store %arg5[%c0_8, %c0_9, %c0_10], %6 {strides = array<i32>} : memref<1x32x256xf32, #tpu.memory_space<vmem>>, vector<1x32x256xf32>,
    return
  }
  func.func @transform_0(%arg0: i32, %arg1: i32) -> (i32, i32, i32) {
    %c0_i32 = arith.constant 0 : i32
    %c0_i32_0 = arith.constant 0 : i32
    return %arg0, %c0_i32, %arg1 : i32, i32, i32
  }
  func.func @transform_1(%arg0: i32, %arg1: i32) -> (i32, i32, i32) {
    %c0_i32 = arith.constant 0 : i32
    %c0_i32_0 = arith.constant 0 : i32
    %c0_i32_1 = arith.constant 0 : i32
    return %arg0, %c0_i32, %c0_i32_0 : i32, i32, i32
  }
  func.func @transform_2(%arg0: i32, %arg1: i32) -> (i32, i32, i32) {
    %c0_i32 = arith.constant 0 : i32
    %c0_i32_0 = arith.constant 0 : i32
    return %arg0, %c0_i32, %arg1 : i32, i32, i32
  }
  func.func @transform_3(%arg0: i32, %arg1: i32) -> (i32, i32, i32) {
    %c0_i32 = arith.constant 0 : i32
    %c0_i32_0 = arith.constant 0 : i32
    return %arg0, %c0_i32, %arg1 : i32, i32, i32
  }
}

module attributes {stable_mosaic.version = 11 : i64} {
  func.func @_sa_conv_kernel(%arg0: i32, %arg1: memref<1x2x22x22xf32, #tpu.memory_space<vmem>>, %arg2: memref<98xf32, #tpu.memory_space<smem>>, %arg3: memref<1x16x16xf32, #tpu.memory_space<vmem>>) attributes {dimension_semantics = [#tpu.dimension_semantics<parallel>], iteration_bounds = array<i64: 2>, scalar_prefetch = 0 : i64, scratch_operands = 0 : i64, tpu.core_type = #tpu.core_type<tc>, window_params = [{transform_indices = @transform_0, window_bounds = array<i64: 1, 2, 22, 22>}, {transform_indices = @transform_1, window_bounds = array<i64: 98>}, {transform_indices = @transform_2, window_bounds = array<i64: 1, 16, 16>}]} {
    %c0 = arith.constant 0 : index
    %c0_0 = arith.constant 0 : index
    %c0_1 = arith.constant 0 : index
    %c0_2 = arith.constant 0 : index
    %0 = vector.load %arg1[%c0, %c0_0, %c0_1, %c0_2] : memref<1x2x22x22xf32, #tpu.memory_space<vmem>>, vector<1x2x22x22xf32>
    %cst = arith.constant 0.000000e+00 : f32
    %1 = vector.broadcast %cst : f32 to vector<1x16x16xf32>
    %2 = vector.extract_strided_slice %0 {offsets = [0, 0, 0, 0], sizes = [1, 1, 16, 16], strides = [1, 1, 1, 1]} : vector<1x2x22x22xf32> to vector<1x1x16x16xf32>
    %3 = vector.shape_cast %2 : vector<1x1x16x16xf32> to vector<1x16x16xf32>
    %c0_3 = arith.constant 0 : index
    %4 = memref.load %arg2[%c0_3] : memref<98xf32, #tpu.memory_space<smem>>
    %5 = vector.broadcast %4 : f32 to vector<1x16x16xf32>
    %6 = arith.mulf %3, %5 : vector<1x16x16xf32>
    %7 = arith.addf %1, %6 : vector<1x16x16xf32>
    %8 = vector.extract_strided_slice %0 {offsets = [0, 0, 0, 1], sizes = [1, 1, 16, 16], strides = [1, 1, 1, 1]} : vector<1x2x22x22xf32> to vector<1x1x16x16xf32>
    %9 = vector.shape_cast %8 : vector<1x1x16x16xf32> to vector<1x16x16xf32>
    %c1 = arith.constant 1 : index
    %10 = memref.load %arg2[%c1] : memref<98xf32, #tpu.memory_space<smem>>
    %11 = vector.broadcast %10 : f32 to vector<1x16x16xf32>
    %12 = arith.mulf %9, %11 : vector<1x16x16xf32>
    %13 = arith.addf %7, %12 : vector<1x16x16xf32>
    %14 = vector.extract_strided_slice %0 {offsets = [0, 0, 0, 2], sizes = [1, 1, 16, 16], strides = [1, 1, 1, 1]} : vector<1x2x22x22xf32> to vector<1x1x16x16xf32>
    %15 = vector.shape_cast %14 : vector<1x1x16x16xf32> to vector<1x16x16xf32>
    %c2 = arith.constant 2 : index
    %16 = memref.load %arg2[%c2] : memref<98xf32, #tpu.memory_space<smem>>
    %17 = vector.broadcast %16 : f32 to vector<1x16x16xf32>
    %18 = arith.mulf %15, %17 : vector<1x16x16xf32>
    %19 = arith.addf %13, %18 : vector<1x16x16xf32>
    %20 = vector.extract_strided_slice %0 {offsets = [0, 0, 0, 3], sizes = [1, 1, 16, 16], strides = [1, 1, 1, 1]} : vector<1x2x22x22xf32> to vector<1x1x16x16xf32>
    %21 = vector.shape_cast %20 : vector<1x1x16x16xf32> to vector<1x16x16xf32>
    %c3 = arith.constant 3 : index
    %22 = memref.load %arg2[%c3] : memref<98xf32, #tpu.memory_space<smem>>
    %23 = vector.broadcast %22 : f32 to vector<1x16x16xf32>
    %24 = arith.mulf %21, %23 : vector<1x16x16xf32>
    %25 = arith.addf %19, %24 : vector<1x16x16xf32>
    %26 = vector.extract_strided_slice %0 {offsets = [0, 0, 0, 4], sizes = [1, 1, 16, 16], strides = [1, 1, 1, 1]} : vector<1x2x22x22xf32> to vector<1x1x16x16xf32>
    %27 = vector.shape_cast %26 : vector<1x1x16x16xf32> to vector<1x16x16xf32>
    %c4 = arith.constant 4 : index
    %28 = memref.load %arg2[%c4] : memref<98xf32, #tpu.memory_space<smem>>
    %29 = vector.broadcast %28 : f32 to vector<1x16x16xf32>
    %30 = arith.mulf %27, %29 : vector<1x16x16xf32>
    %31 = arith.addf %25, %30 : vector<1x16x16xf32>
    %32 = vector.extract_strided_slice %0 {offsets = [0, 0, 0, 5], sizes = [1, 1, 16, 16], strides = [1, 1, 1, 1]} : vector<1x2x22x22xf32> to vector<1x1x16x16xf32>
    %33 = vector.shape_cast %32 : vector<1x1x16x16xf32> to vector<1x16x16xf32>
    %c5 = arith.constant 5 : index
    %34 = memref.load %arg2[%c5] : memref<98xf32, #tpu.memory_space<smem>>
    %35 = vector.broadcast %34 : f32 to vector<1x16x16xf32>
    %36 = arith.mulf %33, %35 : vector<1x16x16xf32>
    %37 = arith.addf %31, %36 : vector<1x16x16xf32>
    %38 = vector.extract_strided_slice %0 {offsets = [0, 0, 0, 6], sizes = [1, 1, 16, 16], strides = [1, 1, 1, 1]} : vector<1x2x22x22xf32> to vector<1x1x16x16xf32>
    %39 = vector.shape_cast %38 : vector<1x1x16x16xf32> to vector<1x16x16xf32>
    %c6 = arith.constant 6 : index
    %40 = memref.load %arg2[%c6] : memref<98xf32, #tpu.memory_space<smem>>
    %41 = vector.broadcast %40 : f32 to vector<1x16x16xf32>
    %42 = arith.mulf %39, %41 : vector<1x16x16xf32>
    %43 = arith.addf %37, %42 : vector<1x16x16xf32>
    %44 = vector.extract_strided_slice %0 {offsets = [0, 0, 1, 0], sizes = [1, 1, 16, 16], strides = [1, 1, 1, 1]} : vector<1x2x22x22xf32> to vector<1x1x16x16xf32>
    %45 = vector.shape_cast %44 : vector<1x1x16x16xf32> to vector<1x16x16xf32>
    %c7 = arith.constant 7 : index
    %46 = memref.load %arg2[%c7] : memref<98xf32, #tpu.memory_space<smem>>
    %47 = vector.broadcast %46 : f32 to vector<1x16x16xf32>
    %48 = arith.mulf %45, %47 : vector<1x16x16xf32>
    %49 = arith.addf %43, %48 : vector<1x16x16xf32>
    %50 = vector.extract_strided_slice %0 {offsets = [0, 0, 1, 1], sizes = [1, 1, 16, 16], strides = [1, 1, 1, 1]} : vector<1x2x22x22xf32> to vector<1x1x16x16xf32>
    %51 = vector.shape_cast %50 : vector<1x1x16x16xf32> to vector<1x16x16xf32>
    %c8 = arith.constant 8 : index
    %52 = memref.load %arg2[%c8] : memref<98xf32, #tpu.memory_space<smem>>
    %53 = vector.broadcast %52 : f32 to vector<1x16x16xf32>
    %54 = arith.mulf %51, %53 : vector<1x16x16xf32>
    %55 = arith.addf %49, %54 : vector<1x16x16xf32>
    %56 = vector.extract_strided_slice %0 {offsets = [0, 0, 1, 2], sizes = [1, 1, 16, 16], strides = [1, 1, 1, 1]} : vector<1x2x22x22xf32> to vector<1x1x16x16xf32>
    %57 = vector.shape_cast %56 : vector<1x1x16x16xf32> to vector<1x16x16xf32>
    %c9 = arith.constant 9 : index
    %58 = memref.load %arg2[%c9] : memref<98xf32, #tpu.memory_space<smem>>
    %59 = vector.broadcast %58 : f32 to vector<1x16x16xf32>
    %60 = arith.mulf %57, %59 : vector<1x16x16xf32>
    %61 = arith.addf %55, %60 : vector<1x16x16xf32>
    %62 = vector.extract_strided_slice %0 {offsets = [0, 0, 1, 3], sizes = [1, 1, 16, 16], strides = [1, 1, 1, 1]} : vector<1x2x22x22xf32> to vector<1x1x16x16xf32>
    %63 = vector.shape_cast %62 : vector<1x1x16x16xf32> to vector<1x16x16xf32>
    %c10 = arith.constant 10 : index
    %64 = memref.load %arg2[%c10] : memref<98xf32, #tpu.memory_space<smem>>
    %65 = vector.broadcast %64 : f32 to vector<1x16x16xf32>
    %66 = arith.mulf %63, %65 : vector<1x16x16xf32>
    %67 = arith.addf %61, %66 : vector<1x16x16xf32>
    %68 = vector.extract_strided_slice %0 {offsets = [0, 0, 1, 4], sizes = [1, 1, 16, 16], strides = [1, 1, 1, 1]} : vector<1x2x22x22xf32> to vector<1x1x16x16xf32>
    %69 = vector.shape_cast %68 : vector<1x1x16x16xf32> to vector<1x16x16xf32>
    %c11 = arith.constant 11 : index
    %70 = memref.load %arg2[%c11] : memref<98xf32, #tpu.memory_space<smem>>
    %71 = vector.broadcast %70 : f32 to vector<1x16x16xf32>
    %72 = arith.mulf %69, %71 : vector<1x16x16xf32>
    %73 = arith.addf %67, %72 : vector<1x16x16xf32>
    %74 = vector.extract_strided_slice %0 {offsets = [0, 0, 1, 5], sizes = [1, 1, 16, 16], strides = [1, 1, 1, 1]} : vector<1x2x22x22xf32> to vector<1x1x16x16xf32>
    %75 = vector.shape_cast %74 : vector<1x1x16x16xf32> to vector<1x16x16xf32>
    %c12 = arith.constant 12 : index
    %76 = memref.load %arg2[%c12] : memref<98xf32, #tpu.memory_space<smem>>
    %77 = vector.broadcast %76 : f32 to vector<1x16x16xf32>
    %78 = arith.mulf %75, %77 : vector<1x16x16xf32>
    %79 = arith.addf %73, %78 : vector<1x16x16xf32>
    %80 = vector.extract_strided_slice %0 {offsets = [0, 0, 1, 6], sizes = [1, 1, 16, 16], strides = [1, 1, 1, 1]} : vector<1x2x22x22xf32> to vector<1x1x16x16xf32>
    %81 = vector.shape_cast %80 : vector<1x1x16x16xf32> to vector<1x16x16xf32>
    %c13 = arith.constant 13 : index
    %82 = memref.load %arg2[%c13] : memref<98xf32, #tpu.memory_space<smem>>
    %83 = vector.broadcast %82 : f32 to vector<1x16x16xf32>
    %84 = arith.mulf %81, %83 : vector<1x16x16xf32>
    %85 = arith.addf %79, %84 : vector<1x16x16xf32>
    %86 = vector.extract_strided_slice %0 {offsets = [0, 0, 2, 0], sizes = [1, 1, 16, 16], strides = [1, 1, 1, 1]} : vector<1x2x22x22xf32> to vector<1x1x16x16xf32>
    %87 = vector.shape_cast %86 : vector<1x1x16x16xf32> to vector<1x16x16xf32>
    %c14 = arith.constant 14 : index
    %88 = memref.load %arg2[%c14] : memref<98xf32, #tpu.memory_space<smem>>
    %89 = vector.broadcast %88 : f32 to vector<1x16x16xf32>
    %90 = arith.mulf %87, %89 : vector<1x16x16xf32>
    %91 = arith.addf %85, %90 : vector<1x16x16xf32>
    %92 = vector.extract_strided_slice %0 {offsets = [0, 0, 2, 1], sizes = [1, 1, 16, 16], strides = [1, 1, 1, 1]} : vector<1x2x22x22xf32> to vector<1x1x16x16xf32>
    %93 = vector.shape_cast %92 : vector<1x1x16x16xf32> to vector<1x16x16xf32>
    %c15 = arith.constant 15 : index
    %94 = memref.load %arg2[%c15] : memref<98xf32, #tpu.memory_space<smem>>
    %95 = vector.broadcast %94 : f32 to vector<1x16x16xf32>
    %96 = arith.mulf %93, %95 : vector<1x16x16xf32>
    %97 = arith.addf %91, %96 : vector<1x16x16xf32>
    %98 = vector.extract_strided_slice %0 {offsets = [0, 0, 2, 2], sizes = [1, 1, 16, 16], strides = [1, 1, 1, 1]} : vector<1x2x22x22xf32> to vector<1x1x16x16xf32>
    %99 = vector.shape_cast %98 : vector<1x1x16x16xf32> to vector<1x16x16xf32>
    %c16 = arith.constant 16 : index
    %100 = memref.load %arg2[%c16] : memref<98xf32, #tpu.memory_space<smem>>
    %101 = vector.broadcast %100 : f32 to vector<1x16x16xf32>
    %102 = arith.mulf %99, %101 : vector<1x16x16xf32>
    %103 = arith.addf %97, %102 : vector<1x16x16xf32>
    %104 = vector.extract_strided_slice %0 {offsets = [0, 0, 2, 3], sizes = [1, 1, 16, 16], strides = [1, 1, 1, 1]} : vector<1x2x22x22xf32> to vector<1x1x16x16xf32>
    %105 = vector.shape_cast %104 : vector<1x1x16x16xf32> to vector<1x16x16xf32>
    %c17 = arith.constant 17 : index
    %106 = memref.load %arg2[%c17] : memref<98xf32, #tpu.memory_space<smem>>
    %107 = vector.broadcast %106 : f32 to vector<1x16x16xf32>
    %108 = arith.mulf %105, %107 : vector<1x16x16xf32>
    %109 = arith.addf %103, %108 : vector<1x16x16xf32>
    %110 = vector.extract_strided_slice %0 {offsets = [0, 0, 2, 4], sizes = [1, 1, 16, 16], strides = [1, 1, 1, 1]} : vector<1x2x22x22xf32> to vector<1x1x16x16xf32>
    %111 = vector.shape_cast %110 : vector<1x1x16x16xf32> to vector<1x16x16xf32>
    %c18 = arith.constant 18 : index
    %112 = memref.load %arg2[%c18] : memref<98xf32, #tpu.memory_space<smem>>
    %113 = vector.broadcast %112 : f32 to vector<1x16x16xf32>
    %114 = arith.mulf %111, %113 : vector<1x16x16xf32>
    %115 = arith.addf %109, %114 : vector<1x16x16xf32>
    %116 = vector.extract_strided_slice %0 {offsets = [0, 0, 2, 5], sizes = [1, 1, 16, 16], strides = [1, 1, 1, 1]} : vector<1x2x22x22xf32> to vector<1x1x16x16xf32>
    %117 = vector.shape_cast %116 : vector<1x1x16x16xf32> to vector<1x16x16xf32>
    %c19 = arith.constant 19 : index
    %118 = memref.load %arg2[%c19] : memref<98xf32, #tpu.memory_space<smem>>
    %119 = vector.broadcast %118 : f32 to vector<1x16x16xf32>
    %120 = arith.mulf %117, %119 : vector<1x16x16xf32>
    %121 = arith.addf %115, %120 : vector<1x16x16xf32>
    %122 = vector.extract_strided_slice %0 {offsets = [0, 0, 2, 6], sizes = [1, 1, 16, 16], strides = [1, 1, 1, 1]} : vector<1x2x22x22xf32> to vector<1x1x16x16xf32>
    %123 = vector.shape_cast %122 : vector<1x1x16x16xf32> to vector<1x16x16xf32>
    %c20 = arith.constant 20 : index
    %124 = memref.load %arg2[%c20] : memref<98xf32, #tpu.memory_space<smem>>
    %125 = vector.broadcast %124 : f32 to vector<1x16x16xf32>
    %126 = arith.mulf %123, %125 : vector<1x16x16xf32>
    %127 = arith.addf %121, %126 : vector<1x16x16xf32>
    %128 = vector.extract_strided_slice %0 {offsets = [0, 0, 3, 0], sizes = [1, 1, 16, 16], strides = [1, 1, 1, 1]} : vector<1x2x22x22xf32> to vector<1x1x16x16xf32>
    %129 = vector.shape_cast %128 : vector<1x1x16x16xf32> to vector<1x16x16xf32>
    %c21 = arith.constant 21 : index
    %130 = memref.load %arg2[%c21] : memref<98xf32, #tpu.memory_space<smem>>
    %131 = vector.broadcast %130 : f32 to vector<1x16x16xf32>
    %132 = arith.mulf %129, %131 : vector<1x16x16xf32>
    %133 = arith.addf %127, %132 : vector<1x16x16xf32>
    %134 = vector.extract_strided_slice %0 {offsets = [0, 0, 3, 1], sizes = [1, 1, 16, 16], strides = [1, 1, 1, 1]} : vector<1x2x22x22xf32> to vector<1x1x16x16xf32>
    %135 = vector.shape_cast %134 : vector<1x1x16x16xf32> to vector<1x16x16xf32>
    %c22 = arith.constant 22 : index
    %136 = memref.load %arg2[%c22] : memref<98xf32, #tpu.memory_space<smem>>
    %137 = vector.broadcast %136 : f32 to vector<1x16x16xf32>
    %138 = arith.mulf %135, %137 : vector<1x16x16xf32>
    %139 = arith.addf %133, %138 : vector<1x16x16xf32>
    %140 = vector.extract_strided_slice %0 {offsets = [0, 0, 3, 2], sizes = [1, 1, 16, 16], strides = [1, 1, 1, 1]} : vector<1x2x22x22xf32> to vector<1x1x16x16xf32>
    %141 = vector.shape_cast %140 : vector<1x1x16x16xf32> to vector<1x16x16xf32>
    %c23 = arith.constant 23 : index
    %142 = memref.load %arg2[%c23] : memref<98xf32, #tpu.memory_space<smem>>
    %143 = vector.broadcast %142 : f32 to vector<1x16x16xf32>
    %144 = arith.mulf %141, %143 : vector<1x16x16xf32>
    %145 = arith.addf %139, %144 : vector<1x16x16xf32>
    %146 = vector.extract_strided_slice %0 {offsets = [0, 0, 3, 3], sizes = [1, 1, 16, 16], strides = [1, 1, 1, 1]} : vector<1x2x22x22xf32> to vector<1x1x16x16xf32>
    %147 = vector.shape_cast %146 : vector<1x1x16x16xf32> to vector<1x16x16xf32>
    %c24 = arith.constant 24 : index
    %148 = memref.load %arg2[%c24] : memref<98xf32, #tpu.memory_space<smem>>
    %149 = vector.broadcast %148 : f32 to vector<1x16x16xf32>
    %150 = arith.mulf %147, %149 : vector<1x16x16xf32>
    %151 = arith.addf %145, %150 : vector<1x16x16xf32>
    %152 = vector.extract_strided_slice %0 {offsets = [0, 0, 3, 4], sizes = [1, 1, 16, 16], strides = [1, 1, 1, 1]} : vector<1x2x22x22xf32> to vector<1x1x16x16xf32>
    %153 = vector.shape_cast %152 : vector<1x1x16x16xf32> to vector<1x16x16xf32>
    %c25 = arith.constant 25 : index
    %154 = memref.load %arg2[%c25] : memref<98xf32, #tpu.memory_space<smem>>
    %155 = vector.broadcast %154 : f32 to vector<1x16x16xf32>
    %156 = arith.mulf %153, %155 : vector<1x16x16xf32>
    %157 = arith.addf %151, %156 : vector<1x16x16xf32>
    %158 = vector.extract_strided_slice %0 {offsets = [0, 0, 3, 5], sizes = [1, 1, 16, 16], strides = [1, 1, 1, 1]} : vector<1x2x22x22xf32> to vector<1x1x16x16xf32>
    %159 = vector.shape_cast %158 : vector<1x1x16x16xf32> to vector<1x16x16xf32>
    %c26 = arith.constant 26 : index
    %160 = memref.load %arg2[%c26] : memref<98xf32, #tpu.memory_space<smem>>
    %161 = vector.broadcast %160 : f32 to vector<1x16x16xf32>
    %162 = arith.mulf %159, %161 : vector<1x16x16xf32>
    %163 = arith.addf %157, %162 : vector<1x16x16xf32>
    %164 = vector.extract_strided_slice %0 {offsets = [0, 0, 3, 6], sizes = [1, 1, 16, 16], strides = [1, 1, 1, 1]} : vector<1x2x22x22xf32> to vector<1x1x16x16xf32>
    %165 = vector.shape_cast %164 : vector<1x1x16x16xf32> to vector<1x16x16xf32>
    %c27 = arith.constant 27 : index
    %166 = memref.load %arg2[%c27] : memref<98xf32, #tpu.memory_space<smem>>
    %167 = vector.broadcast %166 : f32 to vector<1x16x16xf32>
    %168 = arith.mulf %165, %167 : vector<1x16x16xf32>
    %169 = arith.addf %163, %168 : vector<1x16x16xf32>
    %170 = vector.extract_strided_slice %0 {offsets = [0, 0, 4, 0], sizes = [1, 1, 16, 16], strides = [1, 1, 1, 1]} : vector<1x2x22x22xf32> to vector<1x1x16x16xf32>
    %171 = vector.shape_cast %170 : vector<1x1x16x16xf32> to vector<1x16x16xf32>
    %c28 = arith.constant 28 : index
    %172 = memref.load %arg2[%c28] : memref<98xf32, #tpu.memory_space<smem>>
    %173 = vector.broadcast %172 : f32 to vector<1x16x16xf32>
    %174 = arith.mulf %171, %173 : vector<1x16x16xf32>
    %175 = arith.addf %169, %174 : vector<1x16x16xf32>
    %176 = vector.extract_strided_slice %0 {offsets = [0, 0, 4, 1], sizes = [1, 1, 16, 16], strides = [1, 1, 1, 1]} : vector<1x2x22x22xf32> to vector<1x1x16x16xf32>
    %177 = vector.shape_cast %176 : vector<1x1x16x16xf32> to vector<1x16x16xf32>
    %c29 = arith.constant 29 : index
    %178 = memref.load %arg2[%c29] : memref<98xf32, #tpu.memory_space<smem>>
    %179 = vector.broadcast %178 : f32 to vector<1x16x16xf32>
    %180 = arith.mulf %177, %179 : vector<1x16x16xf32>
    %181 = arith.addf %175, %180 : vector<1x16x16xf32>
    %182 = vector.extract_strided_slice %0 {offsets = [0, 0, 4, 2], sizes = [1, 1, 16, 16], strides = [1, 1, 1, 1]} : vector<1x2x22x22xf32> to vector<1x1x16x16xf32>
    %183 = vector.shape_cast %182 : vector<1x1x16x16xf32> to vector<1x16x16xf32>
    %c30 = arith.constant 30 : index
    %184 = memref.load %arg2[%c30] : memref<98xf32, #tpu.memory_space<smem>>
    %185 = vector.broadcast %184 : f32 to vector<1x16x16xf32>
    %186 = arith.mulf %183, %185 : vector<1x16x16xf32>
    %187 = arith.addf %181, %186 : vector<1x16x16xf32>
    %188 = vector.extract_strided_slice %0 {offsets = [0, 0, 4, 3], sizes = [1, 1, 16, 16], strides = [1, 1, 1, 1]} : vector<1x2x22x22xf32> to vector<1x1x16x16xf32>
    %189 = vector.shape_cast %188 : vector<1x1x16x16xf32> to vector<1x16x16xf32>
    %c31 = arith.constant 31 : index
    %190 = memref.load %arg2[%c31] : memref<98xf32, #tpu.memory_space<smem>>
    %191 = vector.broadcast %190 : f32 to vector<1x16x16xf32>
    %192 = arith.mulf %189, %191 : vector<1x16x16xf32>
    %193 = arith.addf %187, %192 : vector<1x16x16xf32>
    %194 = vector.extract_strided_slice %0 {offsets = [0, 0, 4, 4], sizes = [1, 1, 16, 16], strides = [1, 1, 1, 1]} : vector<1x2x22x22xf32> to vector<1x1x16x16xf32>
    %195 = vector.shape_cast %194 : vector<1x1x16x16xf32> to vector<1x16x16xf32>
    %c32 = arith.constant 32 : index
    %196 = memref.load %arg2[%c32] : memref<98xf32, #tpu.memory_space<smem>>
    %197 = vector.broadcast %196 : f32 to vector<1x16x16xf32>
    %198 = arith.mulf %195, %197 : vector<1x16x16xf32>
    %199 = arith.addf %193, %198 : vector<1x16x16xf32>
    %200 = vector.extract_strided_slice %0 {offsets = [0, 0, 4, 5], sizes = [1, 1, 16, 16], strides = [1, 1, 1, 1]} : vector<1x2x22x22xf32> to vector<1x1x16x16xf32>
    %201 = vector.shape_cast %200 : vector<1x1x16x16xf32> to vector<1x16x16xf32>
    %c33 = arith.constant 33 : index
    %202 = memref.load %arg2[%c33] : memref<98xf32, #tpu.memory_space<smem>>
    %203 = vector.broadcast %202 : f32 to vector<1x16x16xf32>
    %204 = arith.mulf %201, %203 : vector<1x16x16xf32>
    %205 = arith.addf %199, %204 : vector<1x16x16xf32>
    %206 = vector.extract_strided_slice %0 {offsets = [0, 0, 4, 6], sizes = [1, 1, 16, 16], strides = [1, 1, 1, 1]} : vector<1x2x22x22xf32> to vector<1x1x16x16xf32>
    %207 = vector.shape_cast %206 : vector<1x1x16x16xf32> to vector<1x16x16xf32>
    %c34 = arith.constant 34 : index
    %208 = memref.load %arg2[%c34] : memref<98xf32, #tpu.memory_space<smem>>
    %209 = vector.broadcast %208 : f32 to vector<1x16x16xf32>
    %210 = arith.mulf %207, %209 : vector<1x16x16xf32>
    %211 = arith.addf %205, %210 : vector<1x16x16xf32>
    %212 = vector.extract_strided_slice %0 {offsets = [0, 0, 5, 0], sizes = [1, 1, 16, 16], strides = [1, 1, 1, 1]} : vector<1x2x22x22xf32> to vector<1x1x16x16xf32>
    %213 = vector.shape_cast %212 : vector<1x1x16x16xf32> to vector<1x16x16xf32>
    %c35 = arith.constant 35 : index
    %214 = memref.load %arg2[%c35] : memref<98xf32, #tpu.memory_space<smem>>
    %215 = vector.broadcast %214 : f32 to vector<1x16x16xf32>
    %216 = arith.mulf %213, %215 : vector<1x16x16xf32>
    %217 = arith.addf %211, %216 : vector<1x16x16xf32>
    %218 = vector.extract_strided_slice %0 {offsets = [0, 0, 5, 1], sizes = [1, 1, 16, 16], strides = [1, 1, 1, 1]} : vector<1x2x22x22xf32> to vector<1x1x16x16xf32>
    %219 = vector.shape_cast %218 : vector<1x1x16x16xf32> to vector<1x16x16xf32>
    %c36 = arith.constant 36 : index
    %220 = memref.load %arg2[%c36] : memref<98xf32, #tpu.memory_space<smem>>
    %221 = vector.broadcast %220 : f32 to vector<1x16x16xf32>
    %222 = arith.mulf %219, %221 : vector<1x16x16xf32>
    %223 = arith.addf %217, %222 : vector<1x16x16xf32>
    %224 = vector.extract_strided_slice %0 {offsets = [0, 0, 5, 2], sizes = [1, 1, 16, 16], strides = [1, 1, 1, 1]} : vector<1x2x22x22xf32> to vector<1x1x16x16xf32>
    %225 = vector.shape_cast %224 : vector<1x1x16x16xf32> to vector<1x16x16xf32>
    %c37 = arith.constant 37 : index
    %226 = memref.load %arg2[%c37] : memref<98xf32, #tpu.memory_space<smem>>
    %227 = vector.broadcast %226 : f32 to vector<1x16x16xf32>
    %228 = arith.mulf %225, %227 : vector<1x16x16xf32>
    %229 = arith.addf %223, %228 : vector<1x16x16xf32>
    %230 = vector.extract_strided_slice %0 {offsets = [0, 0, 5, 3], sizes = [1, 1, 16, 16], strides = [1, 1, 1, 1]} : vector<1x2x22x22xf32> to vector<1x1x16x16xf32>
    %231 = vector.shape_cast %230 : vector<1x1x16x16xf32> to vector<1x16x16xf32>
    %c38 = arith.constant 38 : index
    %232 = memref.load %arg2[%c38] : memref<98xf32, #tpu.memory_space<smem>>
    %233 = vector.broadcast %232 : f32 to vector<1x16x16xf32>
    %234 = arith.mulf %231, %233 : vector<1x16x16xf32>
    %235 = arith.addf %229, %234 : vector<1x16x16xf32>
    %236 = vector.extract_strided_slice %0 {offsets = [0, 0, 5, 4], sizes = [1, 1, 16, 16], strides = [1, 1, 1, 1]} : vector<1x2x22x22xf32> to vector<1x1x16x16xf32>
    %237 = vector.shape_cast %236 : vector<1x1x16x16xf32> to vector<1x16x16xf32>
    %c39 = arith.constant 39 : index
    %238 = memref.load %arg2[%c39] : memref<98xf32, #tpu.memory_space<smem>>
    %239 = vector.broadcast %238 : f32 to vector<1x16x16xf32>
    %240 = arith.mulf %237, %239 : vector<1x16x16xf32>
    %241 = arith.addf %235, %240 : vector<1x16x16xf32>
    %242 = vector.extract_strided_slice %0 {offsets = [0, 0, 5, 5], sizes = [1, 1, 16, 16], strides = [1, 1, 1, 1]} : vector<1x2x22x22xf32> to vector<1x1x16x16xf32>
    %243 = vector.shape_cast %242 : vector<1x1x16x16xf32> to vector<1x16x16xf32>
    %c40 = arith.constant 40 : index
    %244 = memref.load %arg2[%c40] : memref<98xf32, #tpu.memory_space<smem>>
    %245 = vector.broadcast %244 : f32 to vector<1x16x16xf32>
    %246 = arith.mulf %243, %245 : vector<1x16x16xf32>
    %247 = arith.addf %241, %246 : vector<1x16x16xf32>
    %248 = vector.extract_strided_slice %0 {offsets = [0, 0, 5, 6], sizes = [1, 1, 16, 16], strides = [1, 1, 1, 1]} : vector<1x2x22x22xf32> to vector<1x1x16x16xf32>
    %249 = vector.shape_cast %248 : vector<1x1x16x16xf32> to vector<1x16x16xf32>
    %c41 = arith.constant 41 : index
    %250 = memref.load %arg2[%c41] : memref<98xf32, #tpu.memory_space<smem>>
    %251 = vector.broadcast %250 : f32 to vector<1x16x16xf32>
    %252 = arith.mulf %249, %251 : vector<1x16x16xf32>
    %253 = arith.addf %247, %252 : vector<1x16x16xf32>
    %254 = vector.extract_strided_slice %0 {offsets = [0, 0, 6, 0], sizes = [1, 1, 16, 16], strides = [1, 1, 1, 1]} : vector<1x2x22x22xf32> to vector<1x1x16x16xf32>
    %255 = vector.shape_cast %254 : vector<1x1x16x16xf32> to vector<1x16x16xf32>
    %c42 = arith.constant 42 : index
    %256 = memref.load %arg2[%c42] : memref<98xf32, #tpu.memory_space<smem>>
    %257 = vector.broadcast %256 : f32 to vector<1x16x16xf32>
    %258 = arith.mulf %255, %257 : vector<1x16x16xf32>
    %259 = arith.addf %253, %258 : vector<1x16x16xf32>
    %260 = vector.extract_strided_slice %0 {offsets = [0, 0, 6, 1], sizes = [1, 1, 16, 16], strides = [1, 1, 1, 1]} : vector<1x2x22x22xf32> to vector<1x1x16x16xf32>
    %261 = vector.shape_cast %260 : vector<1x1x16x16xf32> to vector<1x16x16xf32>
    %c43 = arith.constant 43 : index
    %262 = memref.load %arg2[%c43] : memref<98xf32, #tpu.memory_space<smem>>
    %263 = vector.broadcast %262 : f32 to vector<1x16x16xf32>
    %264 = arith.mulf %261, %263 : vector<1x16x16xf32>
    %265 = arith.addf %259, %264 : vector<1x16x16xf32>
    %266 = vector.extract_strided_slice %0 {offsets = [0, 0, 6, 2], sizes = [1, 1, 16, 16], strides = [1, 1, 1, 1]} : vector<1x2x22x22xf32> to vector<1x1x16x16xf32>
    %267 = vector.shape_cast %266 : vector<1x1x16x16xf32> to vector<1x16x16xf32>
    %c44 = arith.constant 44 : index
    %268 = memref.load %arg2[%c44] : memref<98xf32, #tpu.memory_space<smem>>
    %269 = vector.broadcast %268 : f32 to vector<1x16x16xf32>
    %270 = arith.mulf %267, %269 : vector<1x16x16xf32>
    %271 = arith.addf %265, %270 : vector<1x16x16xf32>
    %272 = vector.extract_strided_slice %0 {offsets = [0, 0, 6, 3], sizes = [1, 1, 16, 16], strides = [1, 1, 1, 1]} : vector<1x2x22x22xf32> to vector<1x1x16x16xf32>
    %273 = vector.shape_cast %272 : vector<1x1x16x16xf32> to vector<1x16x16xf32>
    %c45 = arith.constant 45 : index
    %274 = memref.load %arg2[%c45] : memref<98xf32, #tpu.memory_space<smem>>
    %275 = vector.broadcast %274 : f32 to vector<1x16x16xf32>
    %276 = arith.mulf %273, %275 : vector<1x16x16xf32>
    %277 = arith.addf %271, %276 : vector<1x16x16xf32>
    %278 = vector.extract_strided_slice %0 {offsets = [0, 0, 6, 4], sizes = [1, 1, 16, 16], strides = [1, 1, 1, 1]} : vector<1x2x22x22xf32> to vector<1x1x16x16xf32>
    %279 = vector.shape_cast %278 : vector<1x1x16x16xf32> to vector<1x16x16xf32>
    %c46 = arith.constant 46 : index
    %280 = memref.load %arg2[%c46] : memref<98xf32, #tpu.memory_space<smem>>
    %281 = vector.broadcast %280 : f32 to vector<1x16x16xf32>
    %282 = arith.mulf %279, %281 : vector<1x16x16xf32>
    %283 = arith.addf %277, %282 : vector<1x16x16xf32>
    %284 = vector.extract_strided_slice %0 {offsets = [0, 0, 6, 5], sizes = [1, 1, 16, 16], strides = [1, 1, 1, 1]} : vector<1x2x22x22xf32> to vector<1x1x16x16xf32>
    %285 = vector.shape_cast %284 : vector<1x1x16x16xf32> to vector<1x16x16xf32>
    %c47 = arith.constant 47 : index
    %286 = memref.load %arg2[%c47] : memref<98xf32, #tpu.memory_space<smem>>
    %287 = vector.broadcast %286 : f32 to vector<1x16x16xf32>
    %288 = arith.mulf %285, %287 : vector<1x16x16xf32>
    %289 = arith.addf %283, %288 : vector<1x16x16xf32>
    %290 = vector.extract_strided_slice %0 {offsets = [0, 0, 6, 6], sizes = [1, 1, 16, 16], strides = [1, 1, 1, 1]} : vector<1x2x22x22xf32> to vector<1x1x16x16xf32>
    %291 = vector.shape_cast %290 : vector<1x1x16x16xf32> to vector<1x16x16xf32>
    %c48 = arith.constant 48 : index
    %292 = memref.load %arg2[%c48] : memref<98xf32, #tpu.memory_space<smem>>
    %293 = vector.broadcast %292 : f32 to vector<1x16x16xf32>
    %294 = arith.mulf %291, %293 : vector<1x16x16xf32>
    %295 = arith.addf %289, %294 : vector<1x16x16xf32>
    %296 = vector.extract_strided_slice %0 {offsets = [0, 1, 0, 0], sizes = [1, 1, 16, 16], strides = [1, 1, 1, 1]} : vector<1x2x22x22xf32> to vector<1x1x16x16xf32>
    %297 = vector.shape_cast %296 : vector<1x1x16x16xf32> to vector<1x16x16xf32>
    %c49 = arith.constant 49 : index
    %298 = memref.load %arg2[%c49] : memref<98xf32, #tpu.memory_space<smem>>
    %299 = vector.broadcast %298 : f32 to vector<1x16x16xf32>
    %300 = arith.mulf %297, %299 : vector<1x16x16xf32>
    %301 = arith.addf %295, %300 : vector<1x16x16xf32>
    %302 = vector.extract_strided_slice %0 {offsets = [0, 1, 0, 1], sizes = [1, 1, 16, 16], strides = [1, 1, 1, 1]} : vector<1x2x22x22xf32> to vector<1x1x16x16xf32>
    %303 = vector.shape_cast %302 : vector<1x1x16x16xf32> to vector<1x16x16xf32>
    %c50 = arith.constant 50 : index
    %304 = memref.load %arg2[%c50] : memref<98xf32, #tpu.memory_space<smem>>
    %305 = vector.broadcast %304 : f32 to vector<1x16x16xf32>
    %306 = arith.mulf %303, %305 : vector<1x16x16xf32>
    %307 = arith.addf %301, %306 : vector<1x16x16xf32>
    %308 = vector.extract_strided_slice %0 {offsets = [0, 1, 0, 2], sizes = [1, 1, 16, 16], strides = [1, 1, 1, 1]} : vector<1x2x22x22xf32> to vector<1x1x16x16xf32>
    %309 = vector.shape_cast %308 : vector<1x1x16x16xf32> to vector<1x16x16xf32>
    %c51 = arith.constant 51 : index
    %310 = memref.load %arg2[%c51] : memref<98xf32, #tpu.memory_space<smem>>
    %311 = vector.broadcast %310 : f32 to vector<1x16x16xf32>
    %312 = arith.mulf %309, %311 : vector<1x16x16xf32>
    %313 = arith.addf %307, %312 : vector<1x16x16xf32>
    %314 = vector.extract_strided_slice %0 {offsets = [0, 1, 0, 3], sizes = [1, 1, 16, 16], strides = [1, 1, 1, 1]} : vector<1x2x22x22xf32> to vector<1x1x16x16xf32>
    %315 = vector.shape_cast %314 : vector<1x1x16x16xf32> to vector<1x16x16xf32>
    %c52 = arith.constant 52 : index
    %316 = memref.load %arg2[%c52] : memref<98xf32, #tpu.memory_space<smem>>
    %317 = vector.broadcast %316 : f32 to vector<1x16x16xf32>
    %318 = arith.mulf %315, %317 : vector<1x16x16xf32>
    %319 = arith.addf %313, %318 : vector<1x16x16xf32>
    %320 = vector.extract_strided_slice %0 {offsets = [0, 1, 0, 4], sizes = [1, 1, 16, 16], strides = [1, 1, 1, 1]} : vector<1x2x22x22xf32> to vector<1x1x16x16xf32>
    %321 = vector.shape_cast %320 : vector<1x1x16x16xf32> to vector<1x16x16xf32>
    %c53 = arith.constant 53 : index
    %322 = memref.load %arg2[%c53] : memref<98xf32, #tpu.memory_space<smem>>
    %323 = vector.broadcast %322 : f32 to vector<1x16x16xf32>
    %324 = arith.mulf %321, %323 : vector<1x16x16xf32>
    %325 = arith.addf %319, %324 : vector<1x16x16xf32>
    %326 = vector.extract_strided_slice %0 {offsets = [0, 1, 0, 5], sizes = [1, 1, 16, 16], strides = [1, 1, 1, 1]} : vector<1x2x22x22xf32> to vector<1x1x16x16xf32>
    %327 = vector.shape_cast %326 : vector<1x1x16x16xf32> to vector<1x16x16xf32>
    %c54 = arith.constant 54 : index
    %328 = memref.load %arg2[%c54] : memref<98xf32, #tpu.memory_space<smem>>
    %329 = vector.broadcast %328 : f32 to vector<1x16x16xf32>
    %330 = arith.mulf %327, %329 : vector<1x16x16xf32>
    %331 = arith.addf %325, %330 : vector<1x16x16xf32>
    %332 = vector.extract_strided_slice %0 {offsets = [0, 1, 0, 6], sizes = [1, 1, 16, 16], strides = [1, 1, 1, 1]} : vector<1x2x22x22xf32> to vector<1x1x16x16xf32>
    %333 = vector.shape_cast %332 : vector<1x1x16x16xf32> to vector<1x16x16xf32>
    %c55 = arith.constant 55 : index
    %334 = memref.load %arg2[%c55] : memref<98xf32, #tpu.memory_space<smem>>
    %335 = vector.broadcast %334 : f32 to vector<1x16x16xf32>
    %336 = arith.mulf %333, %335 : vector<1x16x16xf32>
    %337 = arith.addf %331, %336 : vector<1x16x16xf32>
    %338 = vector.extract_strided_slice %0 {offsets = [0, 1, 1, 0], sizes = [1, 1, 16, 16], strides = [1, 1, 1, 1]} : vector<1x2x22x22xf32> to vector<1x1x16x16xf32>
    %339 = vector.shape_cast %338 : vector<1x1x16x16xf32> to vector<1x16x16xf32>
    %c56 = arith.constant 56 : index
    %340 = memref.load %arg2[%c56] : memref<98xf32, #tpu.memory_space<smem>>
    %341 = vector.broadcast %340 : f32 to vector<1x16x16xf32>
    %342 = arith.mulf %339, %341 : vector<1x16x16xf32>
    %343 = arith.addf %337, %342 : vector<1x16x16xf32>
    %344 = vector.extract_strided_slice %0 {offsets = [0, 1, 1, 1], sizes = [1, 1, 16, 16], strides = [1, 1, 1, 1]} : vector<1x2x22x22xf32> to vector<1x1x16x16xf32>
    %345 = vector.shape_cast %344 : vector<1x1x16x16xf32> to vector<1x16x16xf32>
    %c57 = arith.constant 57 : index
    %346 = memref.load %arg2[%c57] : memref<98xf32, #tpu.memory_space<smem>>
    %347 = vector.broadcast %346 : f32 to vector<1x16x16xf32>
    %348 = arith.mulf %345, %347 : vector<1x16x16xf32>
    %349 = arith.addf %343, %348 : vector<1x16x16xf32>
    %350 = vector.extract_strided_slice %0 {offsets = [0, 1, 1, 2], sizes = [1, 1, 16, 16], strides = [1, 1, 1, 1]} : vector<1x2x22x22xf32> to vector<1x1x16x16xf32>
    %351 = vector.shape_cast %350 : vector<1x1x16x16xf32> to vector<1x16x16xf32>
    %c58 = arith.constant 58 : index
    %352 = memref.load %arg2[%c58] : memref<98xf32, #tpu.memory_space<smem>>
    %353 = vector.broadcast %352 : f32 to vector<1x16x16xf32>
    %354 = arith.mulf %351, %353 : vector<1x16x16xf32>
    %355 = arith.addf %349, %354 : vector<1x16x16xf32>
    %356 = vector.extract_strided_slice %0 {offsets = [0, 1, 1, 3], sizes = [1, 1, 16, 16], strides = [1, 1, 1, 1]} : vector<1x2x22x22xf32> to vector<1x1x16x16xf32>
    %357 = vector.shape_cast %356 : vector<1x1x16x16xf32> to vector<1x16x16xf32>
    %c59 = arith.constant 59 : index
    %358 = memref.load %arg2[%c59] : memref<98xf32, #tpu.memory_space<smem>>
    %359 = vector.broadcast %358 : f32 to vector<1x16x16xf32>
    %360 = arith.mulf %357, %359 : vector<1x16x16xf32>
    %361 = arith.addf %355, %360 : vector<1x16x16xf32>
    %362 = vector.extract_strided_slice %0 {offsets = [0, 1, 1, 4], sizes = [1, 1, 16, 16], strides = [1, 1, 1, 1]} : vector<1x2x22x22xf32> to vector<1x1x16x16xf32>
    %363 = vector.shape_cast %362 : vector<1x1x16x16xf32> to vector<1x16x16xf32>
    %c60 = arith.constant 60 : index
    %364 = memref.load %arg2[%c60] : memref<98xf32, #tpu.memory_space<smem>>
    %365 = vector.broadcast %364 : f32 to vector<1x16x16xf32>
    %366 = arith.mulf %363, %365 : vector<1x16x16xf32>
    %367 = arith.addf %361, %366 : vector<1x16x16xf32>
    %368 = vector.extract_strided_slice %0 {offsets = [0, 1, 1, 5], sizes = [1, 1, 16, 16], strides = [1, 1, 1, 1]} : vector<1x2x22x22xf32> to vector<1x1x16x16xf32>
    %369 = vector.shape_cast %368 : vector<1x1x16x16xf32> to vector<1x16x16xf32>
    %c61 = arith.constant 61 : index
    %370 = memref.load %arg2[%c61] : memref<98xf32, #tpu.memory_space<smem>>
    %371 = vector.broadcast %370 : f32 to vector<1x16x16xf32>
    %372 = arith.mulf %369, %371 : vector<1x16x16xf32>
    %373 = arith.addf %367, %372 : vector<1x16x16xf32>
    %374 = vector.extract_strided_slice %0 {offsets = [0, 1, 1, 6], sizes = [1, 1, 16, 16], strides = [1, 1, 1, 1]} : vector<1x2x22x22xf32> to vector<1x1x16x16xf32>
    %375 = vector.shape_cast %374 : vector<1x1x16x16xf32> to vector<1x16x16xf32>
    %c62 = arith.constant 62 : index
    %376 = memref.load %arg2[%c62] : memref<98xf32, #tpu.memory_space<smem>>
    %377 = vector.broadcast %376 : f32 to vector<1x16x16xf32>
    %378 = arith.mulf %375, %377 : vector<1x16x16xf32>
    %379 = arith.addf %373, %378 : vector<1x16x16xf32>
    %380 = vector.extract_strided_slice %0 {offsets = [0, 1, 2, 0], sizes = [1, 1, 16, 16], strides = [1, 1, 1, 1]} : vector<1x2x22x22xf32> to vector<1x1x16x16xf32>
    %381 = vector.shape_cast %380 : vector<1x1x16x16xf32> to vector<1x16x16xf32>
    %c63 = arith.constant 63 : index
    %382 = memref.load %arg2[%c63] : memref<98xf32, #tpu.memory_space<smem>>
    %383 = vector.broadcast %382 : f32 to vector<1x16x16xf32>
    %384 = arith.mulf %381, %383 : vector<1x16x16xf32>
    %385 = arith.addf %379, %384 : vector<1x16x16xf32>
    %386 = vector.extract_strided_slice %0 {offsets = [0, 1, 2, 1], sizes = [1, 1, 16, 16], strides = [1, 1, 1, 1]} : vector<1x2x22x22xf32> to vector<1x1x16x16xf32>
    %387 = vector.shape_cast %386 : vector<1x1x16x16xf32> to vector<1x16x16xf32>
    %c64 = arith.constant 64 : index
    %388 = memref.load %arg2[%c64] : memref<98xf32, #tpu.memory_space<smem>>
    %389 = vector.broadcast %388 : f32 to vector<1x16x16xf32>
    %390 = arith.mulf %387, %389 : vector<1x16x16xf32>
    %391 = arith.addf %385, %390 : vector<1x16x16xf32>
    %392 = vector.extract_strided_slice %0 {offsets = [0, 1, 2, 2], sizes = [1, 1, 16, 16], strides = [1, 1, 1, 1]} : vector<1x2x22x22xf32> to vector<1x1x16x16xf32>
    %393 = vector.shape_cast %392 : vector<1x1x16x16xf32> to vector<1x16x16xf32>
    %c65 = arith.constant 65 : index
    %394 = memref.load %arg2[%c65] : memref<98xf32, #tpu.memory_space<smem>>
    %395 = vector.broadcast %394 : f32 to vector<1x16x16xf32>
    %396 = arith.mulf %393, %395 : vector<1x16x16xf32>
    %397 = arith.addf %391, %396 : vector<1x16x16xf32>
    %398 = vector.extract_strided_slice %0 {offsets = [0, 1, 2, 3], sizes = [1, 1, 16, 16], strides = [1, 1, 1, 1]} : vector<1x2x22x22xf32> to vector<1x1x16x16xf32>
    %399 = vector.shape_cast %398 : vector<1x1x16x16xf32> to vector<1x16x16xf32>
    %c66 = arith.constant 66 : index
    %400 = memref.load %arg2[%c66] : memref<98xf32, #tpu.memory_space<smem>>
    %401 = vector.broadcast %400 : f32 to vector<1x16x16xf32>
    %402 = arith.mulf %399, %401 : vector<1x16x16xf32>
    %403 = arith.addf %397, %402 : vector<1x16x16xf32>
    %404 = vector.extract_strided_slice %0 {offsets = [0, 1, 2, 4], sizes = [1, 1, 16, 16], strides = [1, 1, 1, 1]} : vector<1x2x22x22xf32> to vector<1x1x16x16xf32>
    %405 = vector.shape_cast %404 : vector<1x1x16x16xf32> to vector<1x16x16xf32>
    %c67 = arith.constant 67 : index
    %406 = memref.load %arg2[%c67] : memref<98xf32, #tpu.memory_space<smem>>
    %407 = vector.broadcast %406 : f32 to vector<1x16x16xf32>
    %408 = arith.mulf %405, %407 : vector<1x16x16xf32>
    %409 = arith.addf %403, %408 : vector<1x16x16xf32>
    %410 = vector.extract_strided_slice %0 {offsets = [0, 1, 2, 5], sizes = [1, 1, 16, 16], strides = [1, 1, 1, 1]} : vector<1x2x22x22xf32> to vector<1x1x16x16xf32>
    %411 = vector.shape_cast %410 : vector<1x1x16x16xf32> to vector<1x16x16xf32>
    %c68 = arith.constant 68 : index
    %412 = memref.load %arg2[%c68] : memref<98xf32, #tpu.memory_space<smem>>
    %413 = vector.broadcast %412 : f32 to vector<1x16x16xf32>
    %414 = arith.mulf %411, %413 : vector<1x16x16xf32>
    %415 = arith.addf %409, %414 : vector<1x16x16xf32>
    %416 = vector.extract_strided_slice %0 {offsets = [0, 1, 2, 6], sizes = [1, 1, 16, 16], strides = [1, 1, 1, 1]} : vector<1x2x22x22xf32> to vector<1x1x16x16xf32>
    %417 = vector.shape_cast %416 : vector<1x1x16x16xf32> to vector<1x16x16xf32>
    %c69 = arith.constant 69 : index
    %418 = memref.load %arg2[%c69] : memref<98xf32, #tpu.memory_space<smem>>
    %419 = vector.broadcast %418 : f32 to vector<1x16x16xf32>
    %420 = arith.mulf %417, %419 : vector<1x16x16xf32>
    %421 = arith.addf %415, %420 : vector<1x16x16xf32>
    %422 = vector.extract_strided_slice %0 {offsets = [0, 1, 3, 0], sizes = [1, 1, 16, 16], strides = [1, 1, 1, 1]} : vector<1x2x22x22xf32> to vector<1x1x16x16xf32>
    %423 = vector.shape_cast %422 : vector<1x1x16x16xf32> to vector<1x16x16xf32>
    %c70 = arith.constant 70 : index
    %424 = memref.load %arg2[%c70] : memref<98xf32, #tpu.memory_space<smem>>
    %425 = vector.broadcast %424 : f32 to vector<1x16x16xf32>
    %426 = arith.mulf %423, %425 : vector<1x16x16xf32>
    %427 = arith.addf %421, %426 : vector<1x16x16xf32>
    %428 = vector.extract_strided_slice %0 {offsets = [0, 1, 3, 1], sizes = [1, 1, 16, 16], strides = [1, 1, 1, 1]} : vector<1x2x22x22xf32> to vector<1x1x16x16xf32>
    %429 = vector.shape_cast %428 : vector<1x1x16x16xf32> to vector<1x16x16xf32>
    %c71 = arith.constant 71 : index
    %430 = memref.load %arg2[%c71] : memref<98xf32, #tpu.memory_space<smem>>
    %431 = vector.broadcast %430 : f32 to vector<1x16x16xf32>
    %432 = arith.mulf %429, %431 : vector<1x16x16xf32>
    %433 = arith.addf %427, %432 : vector<1x16x16xf32>
    %434 = vector.extract_strided_slice %0 {offsets = [0, 1, 3, 2], sizes = [1, 1, 16, 16], strides = [1, 1, 1, 1]} : vector<1x2x22x22xf32> to vector<1x1x16x16xf32>
    %435 = vector.shape_cast %434 : vector<1x1x16x16xf32> to vector<1x16x16xf32>
    %c72 = arith.constant 72 : index
    %436 = memref.load %arg2[%c72] : memref<98xf32, #tpu.memory_space<smem>>
    %437 = vector.broadcast %436 : f32 to vector<1x16x16xf32>
    %438 = arith.mulf %435, %437 : vector<1x16x16xf32>
    %439 = arith.addf %433, %438 : vector<1x16x16xf32>
    %440 = vector.extract_strided_slice %0 {offsets = [0, 1, 3, 3], sizes = [1, 1, 16, 16], strides = [1, 1, 1, 1]} : vector<1x2x22x22xf32> to vector<1x1x16x16xf32>
    %441 = vector.shape_cast %440 : vector<1x1x16x16xf32> to vector<1x16x16xf32>
    %c73 = arith.constant 73 : index
    %442 = memref.load %arg2[%c73] : memref<98xf32, #tpu.memory_space<smem>>
    %443 = vector.broadcast %442 : f32 to vector<1x16x16xf32>
    %444 = arith.mulf %441, %443 : vector<1x16x16xf32>
    %445 = arith.addf %439, %444 : vector<1x16x16xf32>
    %446 = vector.extract_strided_slice %0 {offsets = [0, 1, 3, 4], sizes = [1, 1, 16, 16], strides = [1, 1, 1, 1]} : vector<1x2x22x22xf32> to vector<1x1x16x16xf32>
    %447 = vector.shape_cast %446 : vector<1x1x16x16xf32> to vector<1x16x16xf32>
    %c74 = arith.constant 74 : index
    %448 = memref.load %arg2[%c74] : memref<98xf32, #tpu.memory_space<smem>>
    %449 = vector.broadcast %448 : f32 to vector<1x16x16xf32>
    %450 = arith.mulf %447, %449 : vector<1x16x16xf32>
    %451 = arith.addf %445, %450 : vector<1x16x16xf32>
    %452 = vector.extract_strided_slice %0 {offsets = [0, 1, 3, 5], sizes = [1, 1, 16, 16], strides = [1, 1, 1, 1]} : vector<1x2x22x22xf32> to vector<1x1x16x16xf32>
    %453 = vector.shape_cast %452 : vector<1x1x16x16xf32> to vector<1x16x16xf32>
    %c75 = arith.constant 75 : index
    %454 = memref.load %arg2[%c75] : memref<98xf32, #tpu.memory_space<smem>>
    %455 = vector.broadcast %454 : f32 to vector<1x16x16xf32>
    %456 = arith.mulf %453, %455 : vector<1x16x16xf32>
    %457 = arith.addf %451, %456 : vector<1x16x16xf32>
    %458 = vector.extract_strided_slice %0 {offsets = [0, 1, 3, 6], sizes = [1, 1, 16, 16], strides = [1, 1, 1, 1]} : vector<1x2x22x22xf32> to vector<1x1x16x16xf32>
    %459 = vector.shape_cast %458 : vector<1x1x16x16xf32> to vector<1x16x16xf32>
    %c76 = arith.constant 76 : index
    %460 = memref.load %arg2[%c76] : memref<98xf32, #tpu.memory_space<smem>>
    %461 = vector.broadcast %460 : f32 to vector<1x16x16xf32>
    %462 = arith.mulf %459, %461 : vector<1x16x16xf32>
    %463 = arith.addf %457, %462 : vector<1x16x16xf32>
    %464 = vector.extract_strided_slice %0 {offsets = [0, 1, 4, 0], sizes = [1, 1, 16, 16], strides = [1, 1, 1, 1]} : vector<1x2x22x22xf32> to vector<1x1x16x16xf32>
    %465 = vector.shape_cast %464 : vector<1x1x16x16xf32> to vector<1x16x16xf32>
    %c77 = arith.constant 77 : index
    %466 = memref.load %arg2[%c77] : memref<98xf32, #tpu.memory_space<smem>>
    %467 = vector.broadcast %466 : f32 to vector<1x16x16xf32>
    %468 = arith.mulf %465, %467 : vector<1x16x16xf32>
    %469 = arith.addf %463, %468 : vector<1x16x16xf32>
    %470 = vector.extract_strided_slice %0 {offsets = [0, 1, 4, 1], sizes = [1, 1, 16, 16], strides = [1, 1, 1, 1]} : vector<1x2x22x22xf32> to vector<1x1x16x16xf32>
    %471 = vector.shape_cast %470 : vector<1x1x16x16xf32> to vector<1x16x16xf32>
    %c78 = arith.constant 78 : index
    %472 = memref.load %arg2[%c78] : memref<98xf32, #tpu.memory_space<smem>>
    %473 = vector.broadcast %472 : f32 to vector<1x16x16xf32>
    %474 = arith.mulf %471, %473 : vector<1x16x16xf32>
    %475 = arith.addf %469, %474 : vector<1x16x16xf32>
    %476 = vector.extract_strided_slice %0 {offsets = [0, 1, 4, 2], sizes = [1, 1, 16, 16], strides = [1, 1, 1, 1]} : vector<1x2x22x22xf32> to vector<1x1x16x16xf32>
    %477 = vector.shape_cast %476 : vector<1x1x16x16xf32> to vector<1x16x16xf32>
    %c79 = arith.constant 79 : index
    %478 = memref.load %arg2[%c79] : memref<98xf32, #tpu.memory_space<smem>>
    %479 = vector.broadcast %478 : f32 to vector<1x16x16xf32>
    %480 = arith.mulf %477, %479 : vector<1x16x16xf32>
    %481 = arith.addf %475, %480 : vector<1x16x16xf32>
    %482 = vector.extract_strided_slice %0 {offsets = [0, 1, 4, 3], sizes = [1, 1, 16, 16], strides = [1, 1, 1, 1]} : vector<1x2x22x22xf32> to vector<1x1x16x16xf32>
    %483 = vector.shape_cast %482 : vector<1x1x16x16xf32> to vector<1x16x16xf32>
    %c80 = arith.constant 80 : index
    %484 = memref.load %arg2[%c80] : memref<98xf32, #tpu.memory_space<smem>>
    %485 = vector.broadcast %484 : f32 to vector<1x16x16xf32>
    %486 = arith.mulf %483, %485 : vector<1x16x16xf32>
    %487 = arith.addf %481, %486 : vector<1x16x16xf32>
    %488 = vector.extract_strided_slice %0 {offsets = [0, 1, 4, 4], sizes = [1, 1, 16, 16], strides = [1, 1, 1, 1]} : vector<1x2x22x22xf32> to vector<1x1x16x16xf32>
    %489 = vector.shape_cast %488 : vector<1x1x16x16xf32> to vector<1x16x16xf32>
    %c81 = arith.constant 81 : index
    %490 = memref.load %arg2[%c81] : memref<98xf32, #tpu.memory_space<smem>>
    %491 = vector.broadcast %490 : f32 to vector<1x16x16xf32>
    %492 = arith.mulf %489, %491 : vector<1x16x16xf32>
    %493 = arith.addf %487, %492 : vector<1x16x16xf32>
    %494 = vector.extract_strided_slice %0 {offsets = [0, 1, 4, 5], sizes = [1, 1, 16, 16], strides = [1, 1, 1, 1]} : vector<1x2x22x22xf32> to vector<1x1x16x16xf32>
    %495 = vector.shape_cast %494 : vector<1x1x16x16xf32> to vector<1x16x16xf32>
    %c82 = arith.constant 82 : index
    %496 = memref.load %arg2[%c82] : memref<98xf32, #tpu.memory_space<smem>>
    %497 = vector.broadcast %496 : f32 to vector<1x16x16xf32>
    %498 = arith.mulf %495, %497 : vector<1x16x16xf32>
    %499 = arith.addf %493, %498 : vector<1x16x16xf32>
    %500 = vector.extract_strided_slice %0 {offsets = [0, 1, 4, 6], sizes = [1, 1, 16, 16], strides = [1, 1, 1, 1]} : vector<1x2x22x22xf32> to vector<1x1x16x16xf32>
    %501 = vector.shape_cast %500 : vector<1x1x16x16xf32> to vector<1x16x16xf32>
    %c83 = arith.constant 83 : index
    %502 = memref.load %arg2[%c83] : memref<98xf32, #tpu.memory_space<smem>>
    %503 = vector.broadcast %502 : f32 to vector<1x16x16xf32>
    %504 = arith.mulf %501, %503 : vector<1x16x16xf32>
    %505 = arith.addf %499, %504 : vector<1x16x16xf32>
    %506 = vector.extract_strided_slice %0 {offsets = [0, 1, 5, 0], sizes = [1, 1, 16, 16], strides = [1, 1, 1, 1]} : vector<1x2x22x22xf32> to vector<1x1x16x16xf32>
    %507 = vector.shape_cast %506 : vector<1x1x16x16xf32> to vector<1x16x16xf32>
    %c84 = arith.constant 84 : index
    %508 = memref.load %arg2[%c84] : memref<98xf32, #tpu.memory_space<smem>>
    %509 = vector.broadcast %508 : f32 to vector<1x16x16xf32>
    %510 = arith.mulf %507, %509 : vector<1x16x16xf32>
    %511 = arith.addf %505, %510 : vector<1x16x16xf32>
    %512 = vector.extract_strided_slice %0 {offsets = [0, 1, 5, 1], sizes = [1, 1, 16, 16], strides = [1, 1, 1, 1]} : vector<1x2x22x22xf32> to vector<1x1x16x16xf32>
    %513 = vector.shape_cast %512 : vector<1x1x16x16xf32> to vector<1x16x16xf32>
    %c85 = arith.constant 85 : index
    %514 = memref.load %arg2[%c85] : memref<98xf32, #tpu.memory_space<smem>>
    %515 = vector.broadcast %514 : f32 to vector<1x16x16xf32>
    %516 = arith.mulf %513, %515 : vector<1x16x16xf32>
    %517 = arith.addf %511, %516 : vector<1x16x16xf32>
    %518 = vector.extract_strided_slice %0 {offsets = [0, 1, 5, 2], sizes = [1, 1, 16, 16], strides = [1, 1, 1, 1]} : vector<1x2x22x22xf32> to vector<1x1x16x16xf32>
    %519 = vector.shape_cast %518 : vector<1x1x16x16xf32> to vector<1x16x16xf32>
    %c86 = arith.constant 86 : index
    %520 = memref.load %arg2[%c86] : memref<98xf32, #tpu.memory_space<smem>>
    %521 = vector.broadcast %520 : f32 to vector<1x16x16xf32>
    %522 = arith.mulf %519, %521 : vector<1x16x16xf32>
    %523 = arith.addf %517, %522 : vector<1x16x16xf32>
    %524 = vector.extract_strided_slice %0 {offsets = [0, 1, 5, 3], sizes = [1, 1, 16, 16], strides = [1, 1, 1, 1]} : vector<1x2x22x22xf32> to vector<1x1x16x16xf32>
    %525 = vector.shape_cast %524 : vector<1x1x16x16xf32> to vector<1x16x16xf32>
    %c87 = arith.constant 87 : index
    %526 = memref.load %arg2[%c87] : memref<98xf32, #tpu.memory_space<smem>>
    %527 = vector.broadcast %526 : f32 to vector<1x16x16xf32>
    %528 = arith.mulf %525, %527 : vector<1x16x16xf32>
    %529 = arith.addf %523, %528 : vector<1x16x16xf32>
    %530 = vector.extract_strided_slice %0 {offsets = [0, 1, 5, 4], sizes = [1, 1, 16, 16], strides = [1, 1, 1, 1]} : vector<1x2x22x22xf32> to vector<1x1x16x16xf32>
    %531 = vector.shape_cast %530 : vector<1x1x16x16xf32> to vector<1x16x16xf32>
    %c88 = arith.constant 88 : index
    %532 = memref.load %arg2[%c88] : memref<98xf32, #tpu.memory_space<smem>>
    %533 = vector.broadcast %532 : f32 to vector<1x16x16xf32>
    %534 = arith.mulf %531, %533 : vector<1x16x16xf32>
    %535 = arith.addf %529, %534 : vector<1x16x16xf32>
    %536 = vector.extract_strided_slice %0 {offsets = [0, 1, 5, 5], sizes = [1, 1, 16, 16], strides = [1, 1, 1, 1]} : vector<1x2x22x22xf32> to vector<1x1x16x16xf32>
    %537 = vector.shape_cast %536 : vector<1x1x16x16xf32> to vector<1x16x16xf32>
    %c89 = arith.constant 89 : index
    %538 = memref.load %arg2[%c89] : memref<98xf32, #tpu.memory_space<smem>>
    %539 = vector.broadcast %538 : f32 to vector<1x16x16xf32>
    %540 = arith.mulf %537, %539 : vector<1x16x16xf32>
    %541 = arith.addf %535, %540 : vector<1x16x16xf32>
    %542 = vector.extract_strided_slice %0 {offsets = [0, 1, 5, 6], sizes = [1, 1, 16, 16], strides = [1, 1, 1, 1]} : vector<1x2x22x22xf32> to vector<1x1x16x16xf32>
    %543 = vector.shape_cast %542 : vector<1x1x16x16xf32> to vector<1x16x16xf32>
    %c90 = arith.constant 90 : index
    %544 = memref.load %arg2[%c90] : memref<98xf32, #tpu.memory_space<smem>>
    %545 = vector.broadcast %544 : f32 to vector<1x16x16xf32>
    %546 = arith.mulf %543, %545 : vector<1x16x16xf32>
    %547 = arith.addf %541, %546 : vector<1x16x16xf32>
    %548 = vector.extract_strided_slice %0 {offsets = [0, 1, 6, 0], sizes = [1, 1, 16, 16], strides = [1, 1, 1, 1]} : vector<1x2x22x22xf32> to vector<1x1x16x16xf32>
    %549 = vector.shape_cast %548 : vector<1x1x16x16xf32> to vector<1x16x16xf32>
    %c91 = arith.constant 91 : index
    %550 = memref.load %arg2[%c91] : memref<98xf32, #tpu.memory_space<smem>>
    %551 = vector.broadcast %550 : f32 to vector<1x16x16xf32>
    %552 = arith.mulf %549, %551 : vector<1x16x16xf32>
    %553 = arith.addf %547, %552 : vector<1x16x16xf32>
    %554 = vector.extract_strided_slice %0 {offsets = [0, 1, 6, 1], sizes = [1, 1, 16, 16], strides = [1, 1, 1, 1]} : vector<1x2x22x22xf32> to vector<1x1x16x16xf32>
    %555 = vector.shape_cast %554 : vector<1x1x16x16xf32> to vector<1x16x16xf32>
    %c92 = arith.constant 92 : index
    %556 = memref.load %arg2[%c92] : memref<98xf32, #tpu.memory_space<smem>>
    %557 = vector.broadcast %556 : f32 to vector<1x16x16xf32>
    %558 = arith.mulf %555, %557 : vector<1x16x16xf32>
    %559 = arith.addf %553, %558 : vector<1x16x16xf32>
    %560 = vector.extract_strided_slice %0 {offsets = [0, 1, 6, 2], sizes = [1, 1, 16, 16], strides = [1, 1, 1, 1]} : vector<1x2x22x22xf32> to vector<1x1x16x16xf32>
    %561 = vector.shape_cast %560 : vector<1x1x16x16xf32> to vector<1x16x16xf32>
    %c93 = arith.constant 93 : index
    %562 = memref.load %arg2[%c93] : memref<98xf32, #tpu.memory_space<smem>>
    %563 = vector.broadcast %562 : f32 to vector<1x16x16xf32>
    %564 = arith.mulf %561, %563 : vector<1x16x16xf32>
    %565 = arith.addf %559, %564 : vector<1x16x16xf32>
    %566 = vector.extract_strided_slice %0 {offsets = [0, 1, 6, 3], sizes = [1, 1, 16, 16], strides = [1, 1, 1, 1]} : vector<1x2x22x22xf32> to vector<1x1x16x16xf32>
    %567 = vector.shape_cast %566 : vector<1x1x16x16xf32> to vector<1x16x16xf32>
    %c94 = arith.constant 94 : index
    %568 = memref.load %arg2[%c94] : memref<98xf32, #tpu.memory_space<smem>>
    %569 = vector.broadcast %568 : f32 to vector<1x16x16xf32>
    %570 = arith.mulf %567, %569 : vector<1x16x16xf32>
    %571 = arith.addf %565, %570 : vector<1x16x16xf32>
    %572 = vector.extract_strided_slice %0 {offsets = [0, 1, 6, 4], sizes = [1, 1, 16, 16], strides = [1, 1, 1, 1]} : vector<1x2x22x22xf32> to vector<1x1x16x16xf32>
    %573 = vector.shape_cast %572 : vector<1x1x16x16xf32> to vector<1x16x16xf32>
    %c95 = arith.constant 95 : index
    %574 = memref.load %arg2[%c95] : memref<98xf32, #tpu.memory_space<smem>>
    %575 = vector.broadcast %574 : f32 to vector<1x16x16xf32>
    %576 = arith.mulf %573, %575 : vector<1x16x16xf32>
    %577 = arith.addf %571, %576 : vector<1x16x16xf32>
    %578 = vector.extract_strided_slice %0 {offsets = [0, 1, 6, 5], sizes = [1, 1, 16, 16], strides = [1, 1, 1, 1]} : vector<1x2x22x22xf32> to vector<1x1x16x16xf32>
    %579 = vector.shape_cast %578 : vector<1x1x16x16xf32> to vector<1x16x16xf32>
    %c96 = arith.constant 96 : index
    %580 = memref.load %arg2[%c96] : memref<98xf32, #tpu.memory_space<smem>>
    %581 = vector.broadcast %580 : f32 to vector<1x16x16xf32>
    %582 = arith.mulf %579, %581 : vector<1x16x16xf32>
    %583 = arith.addf %577, %582 : vector<1x16x16xf32>
    %584 = vector.extract_strided_slice %0 {offsets = [0, 1, 6, 6], sizes = [1, 1, 16, 16], strides = [1, 1, 1, 1]} : vector<1x2x22x22xf32> to vector<1x1x16x16xf32>
    %585 = vector.shape_cast %584 : vector<1x1x16x16xf32> to vector<1x16x16xf32>
    %c97 = arith.constant 97 : index
    %586 = memref.load %arg2[%c97] : memref<98xf32, #tpu.memory_space<smem>>
    %587 = vector.broadcast %586 : f32 to vector<1x16x16xf32>
    %588 = arith.mulf %585, %587 : vector<1x16x16xf32>
    %589 = arith.addf %583, %588 : vector<1x16x16xf32>
    %590 = arith.negf %589 : vector<1x16x16xf32>
    %591 = math.exp %590 : vector<1x16x16xf32>
    %cst_4 = arith.constant 1.000000e+00 : f32
    %592 = vector.broadcast %cst_4 : f32 to vector<1x16x16xf32>
    %593 = arith.addf %592, %591 : vector<1x16x16xf32>
    %594 = arith.divf %592, %593 : vector<1x16x16xf32>
    %c0_5 = arith.constant 0 : index
    %c0_6 = arith.constant 0 : index
    %c0_7 = arith.constant 0 : index
    %595 = vector.load %arg3[%c0_5, %c0_6, %c0_7] : memref<1x16x16xf32, #tpu.memory_space<vmem>>, vector<1x16x16xf32>
    tpu.vector_store %arg3[%c0_5, %c0_6, %c0_7], %594 {strides = array<i32>} : memref<1x16x16xf32, #tpu.memory_space<vmem>>, vector<1x16x16xf32>,
    return
  }
  func.func @transform_0(%arg0: i32) -> (i32, i32, i32, i32) {
    %c0_i32 = arith.constant 0 : i32
    %c0_i32_0 = arith.constant 0 : i32
    %c0_i32_1 = arith.constant 0 : i32
    %c0_i32_2 = arith.constant 0 : i32
    return %arg0, %c0_i32, %c0_i32_0, %c0_i32_1 : i32, i32, i32, i32
  }
  func.func @transform_1(%arg0: i32) -> i32 {
    %c0_i32 = arith.constant 0 : i32
    %c0_i32_0 = arith.constant 0 : i32
    return %c0_i32 : i32
  }
  func.func @transform_2(%arg0: i32) -> (i32, i32, i32) {
    %c0_i32 = arith.constant 0 : i32
    %c0_i32_0 = arith.constant 0 : i32
    %c0_i32_1 = arith.constant 0 : i32
    return %arg0, %c0_i32, %c0_i32_0 : i32, i32, i32
  }
}

</mosaic_0001>

<llo_original>
// kernel: squeeze.2
$region0: #{squeeze.2}
  %s0 = inlined_call_operand.vmem [shape: f32[64], index: 0, kind: input, shape index: {}]
  %s1 = inlined_call_operand.vmem [shape: f32[2,32], index: 1, kind: output, shape index: {}]
  $region1: #{squeeze.2} parent=0
    #allocation0 [shape = 'u8[4096]{0}', space=vmem, size = 0x1000, scoped, tag = 'scoped mem for output reshape']
    #allocation1 [shape = 'u8[4096]{0}', space=vmem, size = 0x1000, scoped, tag = 'scoped mem for input reshape']
    %s3 = sshllo.u32 0, 1
    %v4 = vld [vmem:[%s0] sm:%s3]
    %5 = vst [vmem:[#allocation1] sm:%s3] %v4
    %v6 = vld [vmem:[#allocation1] sm:$0x1]
    %vm7 = vcmask 261120
    %8 = vst.msk [vmem:[#allocation0] sm:$0x1] %vm7, %v6
    %v9 = vld [vmem:[#allocation1] sm:$0x1]
    %10 = vrot.lane.b32.xlu0 %v9, 96
    %v11 = vpop.permute.xlu0 %10
    %vm12 = vcmask 261120
    %s13 = scalar_lea.vmem [#allocation0], 1
    %14 = vst.msk [vmem:[%s13] sm:$0x1] %vm12, %v11
    %s16 = sshllo.u32 0, 2
    %v18 = vld [vmem:[#allocation0] sm:%s16]
    %s19 = sshllo.u32 0, 2
    %20 = vst [vmem:[%s1] sm:%s19] %v18

// kernel: cbam_forward.5
$region0: #{cbam_forward.5}
  #allocation0 [shape = 'u32[]', space=smem, size = 0x4, offset = 0x4, fixed_abs, tag = 'smem constant byte address 0x4 - core index']
  #allocation1 [shape = 'u32[144,128]{1,0:T(1,128)}', space=vmem, size = 0x12000, scoped, tag = 'internal scratch']
  %s0 = inlined_call_operand.vmem [shape: f32[64,256], index: 0, kind: input, shape index: {}]
  %s1 = inlined_call_operand.vmem [shape: f32[64,1], index: 1, kind: output, shape index: {0}]
  %s2 = inlined_call_operand.vmem [shape: f32[64,1], index: 2, kind: output, shape index: {1}]
  %3 = xla_tuple %s1, %s2
  %s4 = sld [smem:[#allocation0]]
  $region34: #{cbam_forward.5} parent=0
    _
  %s6 = ssub.s32 1, %s4
  %s7 = scalar_select 0, %s6, %s4
  // Predicated region
  $region2: #{cbam_forward.5} parent=0 // pred_check
    _
  $region3: #{cbam_forward.5} parent=0 // pred_check_branch
    %9 = sbr.rel (0) target = $region5
  $region4: #{cbam_forward.5} parent=0 // pred_region
    _
  $region5: #{cbam_forward.5} parent=0 // pred_fallthru
    _
  %v10 = vld [vmem:[%s0] sm:$0xff]
  %v11 = vld [vmem:[%s0 + $0x8] sm:$0xff]
  %v12 = vld [vmem:[%s0 + $0x10] sm:$0xff]
  %v13 = vld [vmem:[%s0 + $0x18] sm:$0xff]
  %v14 = vld [vmem:[%s0 + $0x20] sm:$0xff]
  %v15 = vld [vmem:[%s0 + $0x28] sm:$0xff]
  %v16 = vld [vmem:[%s0 + $0x30] sm:$0xff]
  %v17 = vld [vmem:[%s0 + $0x38] sm:$0xff]
  %v18 = vld [vmem:[%s0 + $0x40] sm:$0xff]
  %v19 = vld [vmem:[%s0 + $0x48] sm:$0xff]
  %v20 = vld [vmem:[%s0 + $0x50] sm:$0xff]
  %v21 = vld [vmem:[%s0 + $0x58] sm:$0xff]
  %v22 = vld [vmem:[%s0 + $0x60] sm:$0xff]
  %v23 = vld [vmem:[%s0 + $0x68] sm:$0xff]
  %v24 = vld [vmem:[%s0 + $0x70] sm:$0xff]
  %v25 = vld [vmem:[%s0 + $0x78] sm:$0xff]
  %v26 = vadd.f32 %v10, %v11
  %27 = vadd.xlane.f32.xlu0 %v26
  %v28 = vpop.xlane.xlu0 %27
  %v29 = vadd.f32 %v12, %v13
  %30 = vadd.xlane.f32.xlu0 %v29
  %v31 = vpop.xlane.xlu0 %30
  %v32 = vadd.f32 %v14, %v15
  %33 = vadd.xlane.f32.xlu0 %v32
  %v34 = vpop.xlane.xlu0 %33
  %v35 = vadd.f32 %v16, %v17
  %36 = vadd.xlane.f32.xlu0 %v35
  %v37 = vpop.xlane.xlu0 %36
  %v38 = vadd.f32 %v18, %v19
  %39 = vadd.xlane.f32.xlu0 %v38
  %v40 = vpop.xlane.xlu0 %39
  %v41 = vadd.f32 %v20, %v21
  %42 = vadd.xlane.f32.xlu0 %v41
  %v43 = vpop.xlane.xlu0 %42
  %v44 = vadd.f32 %v22, %v23
  %45 = vadd.xlane.f32.xlu0 %v44
  %v46 = vpop.xlane.xlu0 %45
  %v47 = vadd.f32 %v24, %v25
  %48 = vadd.xlane.f32.xlu0 %v47
  %v49 = vpop.xlane.xlu0 %48
  %v50 = vmax.f32 %v10, %v11
  %51 = vmax.xlane.f32.xlu0 %v50
  %v52 = vpop.xlane.xlu0 %51
  %v53 = vmax.f32 %v12, %v13
  %54 = vmax.xlane.f32.xlu0 %v53
  %v55 = vpop.xlane.xlu0 %54
  %v56 = vmax.f32 %v14, %v15
  %57 = vmax.xlane.f32.xlu0 %v56
  %v58 = vpop.xlane.xlu0 %57
  %v59 = vmax.f32 %v16, %v17
  %60 = vmax.xlane.f32.xlu0 %v59
  %v61 = vpop.xlane.xlu0 %60
  %v62 = vmax.f32 %v18, %v19
  %63 = vmax.xlane.f32.xlu0 %v62
  %v64 = vpop.xlane.xlu0 %63
  %v65 = vmax.f32 %v20, %v21
  %66 = vmax.xlane.f32.xlu0 %v65
  %v67 = vpop.xlane.xlu0 %66
  %v68 = vmax.f32 %v22, %v23
  %69 = vmax.xlane.f32.xlu0 %v68
  %v70 = vpop.xlane.xlu0 %69
  %v71 = vmax.f32 %v24, %v25
  %72 = vmax.xlane.f32.xlu0 %v71
  %v73 = vpop.xlane.xlu0 %72
  %p74 = scmp.eq.s32.totalorder 0, 0
  // Predicated region
  $region6: #{cbam_forward.5} parent=0 // pred_check
    %p75 = pneg %p74
  $region7: #{cbam_forward.5} parent=0 // pred_check_branch
    %77 = sbr.rel (%p75) target = $region9
  $region8: #{cbam_forward.5} parent=0 // pred_region
    %vm78 = vcmask 7168
    %79 = vst.msk [vmem:[%s1] sm:$0xff] %vm78, %v28
    %80 = vst.msk [vmem:[%s1 + $0x8] sm:$0xff] %vm78, %v31
    %81 = vst.msk [vmem:[%s1 + $0x10] sm:$0xff] %vm78, %v34
    %82 = vst.msk [vmem:[%s1 + $0x18] sm:$0xff] %vm78, %v37
    %83 = vst.msk [vmem:[%s1 + $0x20] sm:$0xff] %vm78, %v40
    %84 = vst.msk [vmem:[%s1 + $0x28] sm:$0xff] %vm78, %v43
    %85 = vst.msk [vmem:[%s1 + $0x30] sm:$0xff] %vm78, %v46
    %86 = vst.msk [vmem:[%s1 + $0x38] sm:$0xff] %vm78, %v49
    %87 = vst.msk [vmem:[%s2] sm:$0xff] %vm78, %v52
    %88 = vst.msk [vmem:[%s2 + $0x8] sm:$0xff] %vm78, %v55
    %89 = vst.msk [vmem:[%s2 + $0x10] sm:$0xff] %vm78, %v58
    %90 = vst.msk [vmem:[%s2 + $0x18] sm:$0xff] %vm78, %v61
    %91 = vst.msk [vmem:[%s2 + $0x20] sm:$0xff] %vm78, %v64
    %92 = vst.msk [vmem:[%s2 + $0x28] sm:$0xff] %vm78, %v67
    %93 = vst.msk [vmem:[%s2 + $0x30] sm:$0xff] %vm78, %v70
    %94 = vst.msk [vmem:[%s2 + $0x38] sm:$0xff] %vm78, %v73
  $region9: #{cbam_forward.5} parent=0 // pred_fallthru
    _
  %p95 = scmp.gt.s32.totalorder 0, 0
  // Predicated region
  $region10: #{cbam_forward.5} parent=0 // pred_check
    %p96 = pneg %p95
  $region11: #{cbam_forward.5} parent=0 // pred_check_branch
    %98 = sbr.rel (%p96) target = $region13
  $region12: #{cbam_forward.5} parent=0 // pred_region
    %v99 = vld [vmem:[%s1] sm:$0xff]
    %v100 = vld [vmem:[%s1 + $0x8] sm:$0xff]
    %v101 = vld [vmem:[%s1 + $0x10] sm:$0xff]
    %v102 = vld [vmem:[%s1 + $0x18] sm:$0xff]
    %v103 = vld [vmem:[%s1 + $0x20] sm:$0xff]
    %v104 = vld [vmem:[%s1 + $0x28] sm:$0xff]
    %v105 = vld [vmem:[%s1 + $0x30] sm:$0xff]
    %v106 = vld [vmem:[%s1 + $0x38] sm:$0xff]
    %v107 = vadd.f32 %v99, %v28
    %v108 = vadd.f32 %v100, %v31
    %v109 = vadd.f32 %v101, %v34
    %v110 = vadd.f32 %v102, %v37
    %v111 = vadd.f32 %v103, %v40
    %v112 = vadd.f32 %v104, %v43
    %v113 = vadd.f32 %v105, %v46
    %v114 = vadd.f32 %v106, %v49
    %vm115 = vcmask 7168
    %116 = vst.msk [vmem:[%s1] sm:$0xff] %vm115, %v107
    %117 = vst.msk [vmem:[%s1 + $0x8] sm:$0xff] %vm115, %v108
    %118 = vst.msk [vmem:[%s1 + $0x10] sm:$0xff] %vm115, %v109
    %119 = vst.msk [vmem:[%s1 + $0x18] sm:$0xff] %vm115, %v110
    %120 = vst.msk [vmem:[%s1 + $0x20] sm:$0xff] %vm115, %v111
    %121 = vst.msk [vmem:[%s1 + $0x28] sm:$0xff] %vm115, %v112
    %122 = vst.msk [vmem:[%s1 + $0x30] sm:$0xff] %vm115, %v113
    %123 = vst.msk [vmem:[%s1 + $0x38] sm:$0xff] %vm115, %v114
    %v124 = vld [vmem:[%s2] sm:$0xff]
    %v125 = vld [vmem:[%s2 + $0x8] sm:$0xff]
    %v126 = vld [vmem:[%s2 + $0x10] sm:$0xff]
    %v127 = vld [vmem:[%s2 + $0x18] sm:$0xff]
    %v128 = vld [vmem:[%s2 + $0x20] sm:$0xff]
    %v129 = vld [vmem:[%s2 + $0x28] sm:$0xff]
    %v130 = vld [vmem:[%s2 + $0x30] sm:$0xff]
    %v131 = vld [vmem:[%s2 + $0x38] sm:$0xff]
    %v132 = vmax.f32 %v124, %v52
    %v133 = vmax.f32 %v125, %v55
    %v134 = vmax.f32 %v126, %v58
    %v135 = vmax.f32 %v127, %v61
    %v136 = vmax.f32 %v128, %v64
    %v137 = vmax.f32 %v129, %v67
    %v138 = vmax.f32 %v130, %v70
    %v139 = vmax.f32 %v131, %v73
    %140 = vst.msk [vmem:[%s2] sm:$0xff] %vm115, %v132
    %141 = vst.msk [vmem:[%s2 + $0x8] sm:$0xff] %vm115, %v133
    %142 = vst.msk [vmem:[%s2 + $0x10] sm:$0xff] %vm115, %v134
    %143 = vst.msk [vmem:[%s2 + $0x18] sm:$0xff] %vm115, %v135
    %144 = vst.msk [vmem:[%s2 + $0x20] sm:$0xff] %vm115, %v136
    %145 = vst.msk [vmem:[%s2 + $0x28] sm:$0xff] %vm115, %v137
    %146 = vst.msk [vmem:[%s2 + $0x30] sm:$0xff] %vm115, %v138
    %147 = vst.msk [vmem:[%s2 + $0x38] sm:$0xff] %vm115, %v139
  $region13: #{cbam_forward.5} parent=0 // pred_fallthru
    _
  // Predicated region
  $region14: #{cbam_forward.5} parent=0 // pred_check
    %p148 = pneg %p74
  $region15: #{cbam_forward.5} parent=0 // pred_check_branch
    %150 = sbr.rel (%p148) target = $region17
  $region16: #{cbam_forward.5} parent=0 // pred_region
    %v151 = vld [vmem:[%s1] sm:$0xff]
    %v152 = vld [vmem:[%s1 + $0x8] sm:$0xff]
    %v153 = vld [vmem:[%s1 + $0x10] sm:$0xff]
    %v154 = vld [vmem:[%s1 + $0x18] sm:$0xff]
    %v155 = vld [vmem:[%s1 + $0x20] sm:$0xff]
    %v156 = vld [vmem:[%s1 + $0x28] sm:$0xff]
    %v157 = vld [vmem:[%s1 + $0x30] sm:$0xff]
    %v158 = vld [vmem:[%s1 + $0x38] sm:$0xff]
    %v159 = vmul.f32 %v151, 0.00390625
    %v160 = vmul.f32 %v152, 0.00390625
    %v161 = vmul.f32 %v153, 0.00390625
    %v162 = vmul.f32 %v154, 0.00390625
    %v163 = vmul.f32 %v155, 0.00390625
    %v164 = vmul.f32 %v156, 0.00390625
    %v165 = vmul.f32 %v157, 0.00390625
    %v166 = vmul.f32 %v158, 0.00390625
    %vm167 = vcmask 7168
    %168 = vst.msk [vmem:[%s1] sm:$0xff] %vm167, %v159
    %169 = vst.msk [vmem:[%s1 + $0x8] sm:$0xff] %vm167, %v160
    %170 = vst.msk [vmem:[%s1 + $0x10] sm:$0xff] %vm167, %v161
    %171 = vst.msk [vmem:[%s1 + $0x18] sm:$0xff] %vm167, %v162
    %172 = vst.msk [vmem:[%s1 + $0x20] sm:$0xff] %vm167, %v163
    %173 = vst.msk [vmem:[%s1 + $0x28] sm:$0xff] %vm167, %v164
    %174 = vst.msk [vmem:[%s1 + $0x30] sm:$0xff] %vm167, %v165
    %175 = vst.msk [vmem:[%s1 + $0x38] sm:$0xff] %vm167, %v166
  $region17: #{cbam_forward.5} parent=0 // pred_fallthru
    _
  // Predicated region
  $region18: #{cbam_forward.5} parent=0 // pred_check
    _
  $region19: #{cbam_forward.5} parent=0 // pred_check_branch
    %177 = sbr.rel (0) target = $region21
  $region20: #{cbam_forward.5} parent=0 // pred_region
    _
  $region21: #{cbam_forward.5} parent=0 // pred_fallthru
    _
  // Predicated region
  $region22: #{cbam_forward.5} parent=0 // pred_check
    _
  $region23: #{cbam_forward.5} parent=0 // pred_check_branch
    %179 = sbr.rel (0) target = $region25
  $region24: #{cbam_forward.5} parent=0 // pred_region
    _
  $region25: #{cbam_forward.5} parent=0 // pred_fallthru
    _
  // Predicated region
  $region26: #{cbam_forward.5} parent=0 // pred_check
    _
  $region27: #{cbam_forward.5} parent=0 // pred_check_branch
    %181 = sbr.rel (0) target = $region29
  $region28: #{cbam_forward.5} parent=0 // pred_region
    _
  $region29: #{cbam_forward.5} parent=0 // pred_fallthru
    _
  // Predicated region
  $region30: #{cbam_forward.5} parent=0 // pred_check
    _
  $region31: #{cbam_forward.5} parent=0 // pred_check_branch
    %183 = sbr.rel (0) target = $region33
  $region32: #{cbam_forward.5} parent=0 // pred_region
    _
  $region33: #{cbam_forward.5} parent=0 // pred_fallthru
    _

// kernel: cbam_forward.6
$region0: #{cbam_forward.6}
  #allocation0 [shape = 'u32[]', space=smem, size = 0x4, offset = 0x4, fixed_abs, tag = 'smem constant byte address 0x4 - core index']
  #allocation1 [shape = 'u32[144,128]{1,0:T(1,128)}', space=vmem, size = 0x12000, scoped, tag = 'internal scratch']
  %s0 = inlined_call_operand.vmem [shape: f32[8,128], index: 0, kind: input, shape index: {}]
  %s1 = inlined_call_operand.vmem [shape: f32[8,128], index: 1, kind: input, shape index: {}]
  %s2 = inlined_call_operand.vmem [shape: f32[128,128], index: 2, kind: input, shape index: {}]
  %s3 = inlined_call_operand.vmem [shape: f32[128,128], index: 3, kind: input, shape index: {}]
  %s4 = inlined_call_operand.vmem [shape: f32[8,128], index: 4, kind: output, shape index: {}]
  %s5 = sld [smem:[#allocation0]]
  $region26: #{cbam_forward.6} parent=0
    _
  %s7 = ssub.s32 1, %s5
  %s8 = scalar_select 0, %s7, %s5
  // Predicated region
  $region2: #{cbam_forward.6} parent=0 // pred_check
    _
  $region3: #{cbam_forward.6} parent=0 // pred_check_branch
    %10 = sbr.rel (0) target = $region5
  $region4: #{cbam_forward.6} parent=0 // pred_region
    _
  $region5: #{cbam_forward.6} parent=0 // pred_fallthru
    _
  // Predicated region
  $region6: #{cbam_forward.6} parent=0 // pred_check
    _
  $region7: #{cbam_forward.6} parent=0 // pred_check_branch
    %12 = sbr.rel (0) target = $region9
  $region8: #{cbam_forward.6} parent=0 // pred_region
    _
  $region9: #{cbam_forward.6} parent=0 // pred_fallthru
    _
  // Predicated region
  $region10: #{cbam_forward.6} parent=0 // pred_check
    _
  $region11: #{cbam_forward.6} parent=0 // pred_check_branch
    %14 = sbr.rel (0) target = $region13
  $region12: #{cbam_forward.6} parent=0 // pred_region
    _
  $region13: #{cbam_forward.6} parent=0 // pred_fallthru
    _
  // Predicated region
  $region14: #{cbam_forward.6} parent=0 // pred_check
    _
  $region15: #{cbam_forward.6} parent=0 // pred_check_branch
    %16 = sbr.rel (0) target = $region17
  $region16: #{cbam_forward.6} parent=0 // pred_region
    _
  $region17: #{cbam_forward.6} parent=0 // pred_fallthru
    _
  %v17 = vld [vmem:[%s0] sm:$0xff]
  %v18 = vld [vmem:[%s2] sm:$0xff]
  %v19 = vld [vmem:[%s2 + $0x8] sm:$0xff]
  %v20 = vld [vmem:[%s2 + $0x10] sm:$0xff]
  %v21 = vld [vmem:[%s2 + $0x18] sm:$0xff]
  %v22 = vld [vmem:[%s2 + $0x20] sm:$0xff]
  %v23 = vld [vmem:[%s2 + $0x28] sm:$0xff]
  %v24 = vld [vmem:[%s2 + $0x30] sm:$0xff]
  %v25 = vld [vmem:[%s2 + $0x38] sm:$0xff]
  %v26 = vld [vmem:[%s2 + $0x40] sm:$0xff]
  %v27 = vld [vmem:[%s2 + $0x48] sm:$0xff]
  %v28 = vld [vmem:[%s2 + $0x50] sm:$0xff]
  %v29 = vld [vmem:[%s2 + $0x58] sm:$0xff]
  %v30 = vld [vmem:[%s2 + $0x60] sm:$0xff]
  %v31 = vld [vmem:[%s2 + $0x68] sm:$0xff]
  %v32 = vld [vmem:[%s2 + $0x70] sm:$0xff]
  %v33 = vld [vmem:[%s2 + $0x78] sm:$0xff]
  %34 = vmatprep.subr.mxu0 0.0
  %35 = vmatpush1.msra.mxu0 %v18
  %36 = vmatprep.subr.mxu0 0.0
  %37 = vmatpush1.msra.mxu0 %v19
  %38 = vmatprep.subr.mxu0 0.0
  %39 = vmatpush1.msra.mxu0 %v20
  %40 = vmatprep.subr.mxu0 0.0
  %41 = vmatpush1.msra.mxu0 %v21
  %42 = vmatprep.subr.mxu0 0.0
  %43 = vmatpush1.msra.mxu0 %v22
  %44 = vmatprep.subr.mxu0 0.0
  %45 = vmatpush1.msra.mxu0 %v23
  %46 = vmatprep.subr.mxu0 0.0
  %47 = vmatpush1.msra.mxu0 %v24
  %48 = vmatprep.subr.mxu0 0.0
  %49 = vmatpush1.msra.mxu0 %v25
  %50 = vmatprep.subr.mxu0 0.0
  %51 = vmatpush1.msra.mxu0 %v26
  %52 = vmatprep.subr.mxu0 0.0
  %53 = vmatpush1.msra.mxu0 %v27
  %54 = vmatprep.subr.mxu0 0.0
  %55 = vmatpush1.msra.mxu0 %v28
  %56 = vmatprep.subr.mxu0 0.0
  %57 = vmatpush1.msra.mxu0 %v29
  %58 = vmatprep.subr.mxu0 0.0
  %59 = vmatpush1.msra.mxu0 %v30
  %60 = vmatprep.subr.mxu0 0.0
  %61 = vmatpush1.msra.mxu0 %v31
  %62 = vmatprep.subr.mxu0 0.0
  %63 = vmatpush1.msra.mxu0 %v32
  %64 = vmatprep.subr.mxu0 0.0
  %65 = vmatpush1.msra.mxu0 %v33
  %66 = vmatprep.subr.mxu0 0.0
  %67 = vmatpush1.msra.mxu0 0.0
  %68 = vmatprep.subr.mxu0 0.0
  %69 = vmatpush1.msra.mxu0 0.0
  %70 = vmatprep.subr.mxu0 0.0
  %71 = vmatpush1.msra.mxu0 0.0
  %72 = vmatprep.subr.mxu0 0.0
  %73 = vmatpush1.msra.mxu0 0.0
  %74 = vmatprep.subr.mxu0 0.0
  %75 = vmatpush1.msra.mxu0 0.0
  %76 = vmatprep.subr.mxu0 0.0
  %77 = vmatpush1.msra.mxu0 0.0
  %78 = vmatprep.subr.mxu0 0.0
  %79 = vmatpush1.msra.mxu0 0.0
  %80 = vmatprep.subr.mxu0 0.0
  %81 = vmatpush1.msra.mxu0 0.0
  %82 = vmatprep.subr.mxu0 0.0
  %83 = vmatpush1.msra.mxu0 0.0
  %84 = vmatprep.subr.mxu0 0.0
  %85 = vmatpush1.msra.mxu0 0.0
  %86 = vmatprep.subr.mxu0 0.0
  %87 = vmatpush1.msra.mxu0 0.0
  %88 = vmatprep.subr.mxu0 0.0
  %89 = vmatpush1.msra.mxu0 0.0
  %90 = vmatprep.subr.mxu0 0.0
  %91 = vmatpush1.msra.mxu0 0.0
  %92 = vmatprep.subr.mxu0 0.0
  %93 = vmatpush1.msra.mxu0 0.0
  %94 = vmatprep.subr.mxu0 0.0
  %95 = vmatpush1.msra.mxu0 0.0
  %96 = vmatprep.subr.mxu0 0.0
  %97 = vmatpush1.msra.mxu0 0.0
  %98 = vmatprep.mubr.f32.mxu0 0.0
  %99 = vmatmul.mubr.f32.gmra.mrb[0].mxu0 %v17
  %v100 = vpop.f32.mrb[0].mxu0
  %v101 = vadd.f32 0.0, %v100
  %v102 = vpop.f32.mrb[0].mxu0
  %103 = vdwg.mxu0
  %v104 = vmax.f32 %v101, 0.0
  %v105 = vld [vmem:[%s3] sm:$0xff]
  %v106 = vld [vmem:[%s3 + $0x8] sm:$0xff]
  %v107 = vld [vmem:[%s3 + $0x10] sm:$0xff]
  %v108 = vld [vmem:[%s3 + $0x18] sm:$0xff]
  %v109 = vld [vmem:[%s3 + $0x20] sm:$0xff]
  %v110 = vld [vmem:[%s3 + $0x28] sm:$0xff]
  %v111 = vld [vmem:[%s3 + $0x30] sm:$0xff]
  %v112 = vld [vmem:[%s3 + $0x38] sm:$0xff]
  %v113 = vld [vmem:[%s3 + $0x40] sm:$0xff]
  %v114 = vld [vmem:[%s3 + $0x48] sm:$0xff]
  %v115 = vld [vmem:[%s3 + $0x50] sm:$0xff]
  %v116 = vld [vmem:[%s3 + $0x58] sm:$0xff]
  %v117 = vld [vmem:[%s3 + $0x60] sm:$0xff]
  %v118 = vld [vmem:[%s3 + $0x68] sm:$0xff]
  %v119 = vld [vmem:[%s3 + $0x70] sm:$0xff]
  %v120 = vld [vmem:[%s3 + $0x78] sm:$0xff]
  %v121 = vld [vmem:[%s1] sm:$0xff]
  %122 = vmatprep.subr.mxu0 0.0
  %123 = vmatpush1.msra.mxu0 %v18
  %124 = vmatprep.subr.mxu0 0.0
  %125 = vmatpush1.msra.mxu0 %v19
  %126 = vmatprep.subr.mxu0 0.0
  %127 = vmatpush1.msra.mxu0 %v20
  %128 = vmatprep.subr.mxu0 0.0
  %129 = vmatpush1.msra.mxu0 %v21
  %130 = vmatprep.subr.mxu0 0.0
  %131 = vmatpush1.msra.mxu0 %v22
  %132 = vmatprep.subr.mxu0 0.0
  %133 = vmatpush1.msra.mxu0 %v23
  %134 = vmatprep.subr.mxu0 0.0
  %135 = vmatpush1.msra.mxu0 %v24
  %136 = vmatprep.subr.mxu0 0.0
  %137 = vmatpush1.msra.mxu0 %v25
  %138 = vmatprep.subr.mxu0 0.0
  %139 = vmatpush1.msra.mxu0 %v26
  %140 = vmatprep.subr.mxu0 0.0
  %141 = vmatpush1.msra.mxu0 %v27
  %142 = vmatprep.subr.mxu0 0.0
  %143 = vmatpush1.msra.mxu0 %v28
  %144 = vmatprep.subr.mxu0 0.0
  %145 = vmatpush1.msra.mxu0 %v29
  %146 = vmatprep.subr.mxu0 0.0
  %147 = vmatpush1.msra.mxu0 %v30
  %148 = vmatprep.subr.mxu0 0.0
  %149 = vmatpush1.msra.mxu0 %v31
  %150 = vmatprep.subr.mxu0 0.0
  %151 = vmatpush1.msra.mxu0 %v32
  %152 = vmatprep.subr.mxu0 0.0
  %153 = vmatpush1.msra.mxu0 %v33
  %154 = vmatprep.subr.mxu0 0.0
  %155 = vmatpush1.msra.mxu0 0.0
  %156 = vmatprep.subr.mxu0 0.0
  %157 = vmatpush1.msra.mxu0 0.0
  %158 = vmatprep.subr.mxu0 0.0
  %159 = vmatpush1.msra.mxu0 0.0
  %160 = vmatprep.subr.mxu0 0.0
  %161 = vmatpush1.msra.mxu0 0.0
  %162 = vmatprep.subr.mxu0 0.0
  %163 = vmatpush1.msra.mxu0 0.0
  %164 = vmatprep.subr.mxu0 0.0
  %165 = vmatpush1.msra.mxu0 0.0
  %166 = vmatprep.subr.mxu0 0.0
  %167 = vmatpush1.msra.mxu0 0.0
  %168 = vmatprep.subr.mxu0 0.0
  %169 = vmatpush1.msra.mxu0 0.0
  %170 = vmatprep.subr.mxu0 0.0
  %171 = vmatpush1.msra.mxu0 0.0
  %172 = vmatprep.subr.mxu0 0.0
  %173 = vmatpush1.msra.mxu0 0.0
  %174 = vmatprep.subr.mxu0 0.0
  %175 = vmatpush1.msra.mxu0 0.0
  %176 = vmatprep.subr.mxu0 0.0
  %177 = vmatpush1.msra.mxu0 0.0
  %178 = vmatprep.subr.mxu0 0.0
  %179 = vmatpush1.msra.mxu0 0.0
  %180 = vmatprep.subr.mxu0 0.0
  %181 = vmatpush1.msra.mxu0 0.0
  %182 = vmatprep.subr.mxu0 0.0
  %183 = vmatpush1.msra.mxu0 0.0
  %184 = vmatprep.subr.mxu0 0.0
  %185 = vmatpush1.msra.mxu0 0.0
  %186 = vmatprep.mubr.f32.mxu0 0.0
  %187 = vmatmul.mubr.f32.gmra.mrb[0].mxu0 %v121
  %v188 = vpop.f32.mrb[0].mxu0
  %v189 = vadd.f32 0.0, %v188
  %v190 = vpop.f32.mrb[0].mxu0
  %191 = vdwg.mxu0
  %v192 = vmax.f32 %v189, 0.0
  %193 = vmatprep.subr.mxu0 0.0
  %194 = vmatpush1.msra.mxu0 %v105
  %195 = vmatprep.subr.mxu0 0.0
  %196 = vmatpush1.msra.mxu0 %v106
  %197 = vmatprep.subr.mxu0 0.0
  %198 = vmatpush1.msra.mxu0 %v107
  %199 = vmatprep.subr.mxu0 0.0
  %200 = vmatpush1.msra.mxu0 %v108
  %201 = vmatprep.subr.mxu0 0.0
  %202 = vmatpush1.msra.mxu0 %v109
  %203 = vmatprep.subr.mxu0 0.0
  %204 = vmatpush1.msra.mxu0 %v110
  %205 = vmatprep.subr.mxu0 0.0
  %206 = vmatpush1.msra.mxu0 %v111
  %207 = vmatprep.subr.mxu0 0.0
  %208 = vmatpush1.msra.mxu0 %v112
  %209 = vmatprep.subr.mxu0 0.0
  %210 = vmatpush1.msra.mxu0 %v113
  %211 = vmatprep.subr.mxu0 0.0
  %212 = vmatpush1.msra.mxu0 %v114
  %213 = vmatprep.subr.mxu0 0.0
  %214 = vmatpush1.msra.mxu0 %v115
  %215 = vmatprep.subr.mxu0 0.0
  %216 = vmatpush1.msra.mxu0 %v116
  %217 = vmatprep.subr.mxu0 0.0
  %218 = vmatpush1.msra.mxu0 %v117
  %219 = vmatprep.subr.mxu0 0.0
  %220 = vmatpush1.msra.mxu0 %v118
  %221 = vmatprep.subr.mxu0 0.0
  %222 = vmatpush1.msra.mxu0 %v119
  %223 = vmatprep.subr.mxu0 0.0
  %224 = vmatpush1.msra.mxu0 %v120
  %225 = vmatprep.subr.mxu0 0.0
  %226 = vmatpush1.msra.mxu0 0.0
  %227 = vmatprep.subr.mxu0 0.0
  %228 = vmatpush1.msra.mxu0 0.0
  %229 = vmatprep.subr.mxu0 0.0
  %230 = vmatpush1.msra.mxu0 0.0
  %231 = vmatprep.subr.mxu0 0.0
  %232 = vmatpush1.msra.mxu0 0.0
  %233 = vmatprep.subr.mxu0 0.0
  %234 = vmatpush1.msra.mxu0 0.0
  %235 = vmatprep.subr.mxu0 0.0
  %236 = vmatpush1.msra.mxu0 0.0
  %237 = vmatprep.subr.mxu0 0.0
  %238 = vmatpush1.msra.mxu0 0.0
  %239 = vmatprep.subr.mxu0 0.0
  %240 = vmatpush1.msra.mxu0 0.0
  %241 = vmatprep.subr.mxu0 0.0
  %242 = vmatpush1.msra.mxu0 0.0
  %243 = vmatprep.subr.mxu0 0.0
  %244 = vmatpush1.msra.mxu0 0.0
  %245 = vmatprep.subr.mxu0 0.0
  %246 = vmatpush1.msra.mxu0 0.0
  %247 = vmatprep.subr.mxu0 0.0
  %248 = vmatpush1.msra.mxu0 0.0
  %249 = vmatprep.subr.mxu0 0.0
  %250 = vmatpush1.msra.mxu0 0.0
  %251 = vmatprep.subr.mxu0 0.0
  %252 = vmatpush1.msra.mxu0 0.0
  %253 = vmatprep.subr.mxu0 0.0
  %254 = vmatpush1.msra.mxu0 0.0
  %255 = vmatprep.subr.mxu0 0.0
  %256 = vmatpush1.msra.mxu0 0.0
  %257 = vmatprep.mubr.f32.mxu0 0.0
  %258 = vmatmul.mubr.f32.gmra.mrb[0].mxu0 %v192
  %v259 = vpop.f32.mrb[0].mxu0
  %v260 = vadd.f32 0.0, %v259
  %v261 = vpop.f32.mrb[0].mxu0
  %262 = vdwg.mxu0
  %263 = vmatprep.subr.mxu0 0.0
  %264 = vmatpush1.msra.mxu0 %v105
  %265 = vmatprep.subr.mxu0 0.0
  %266 = vmatpush1.msra.mxu0 %v106
  %267 = vmatprep.subr.mxu0 0.0
  %268 = vmatpush1.msra.mxu0 %v107
  %269 = vmatprep.subr.mxu0 0.0
  %270 = vmatpush1.msra.mxu0 %v108
  %271 = vmatprep.subr.mxu0 0.0
  %272 = vmatpush1.msra.mxu0 %v109
  %273 = vmatprep.subr.mxu0 0.0
  %274 = vmatpush1.msra.mxu0 %v110
  %275 = vmatprep.subr.mxu0 0.0
  %276 = vmatpush1.msra.mxu0 %v111
  %277 = vmatprep.subr.mxu0 0.0
  %278 = vmatpush1.msra.mxu0 %v112
  %279 = vmatprep.subr.mxu0 0.0
  %280 = vmatpush1.msra.mxu0 %v113
  %281 = vmatprep.subr.mxu0 0.0
  %282 = vmatpush1.msra.mxu0 %v114
  %283 = vmatprep.subr.mxu0 0.0
  %284 = vmatpush1.msra.mxu0 %v115
  %285 = vmatprep.subr.mxu0 0.0
  %286 = vmatpush1.msra.mxu0 %v116
  %287 = vmatprep.subr.mxu0 0.0
  %288 = vmatpush1.msra.mxu0 %v117
  %289 = vmatprep.subr.mxu0 0.0
  %290 = vmatpush1.msra.mxu0 %v118
  %291 = vmatprep.subr.mxu0 0.0
  %292 = vmatpush1.msra.mxu0 %v119
  %293 = vmatprep.subr.mxu0 0.0
  %294 = vmatpush1.msra.mxu0 %v120
  %295 = vmatprep.subr.mxu0 0.0
  %296 = vmatpush1.msra.mxu0 0.0
  %297 = vmatprep.subr.mxu0 0.0
  %298 = vmatpush1.msra.mxu0 0.0
  %299 = vmatprep.subr.mxu0 0.0
  %300 = vmatpush1.msra.mxu0 0.0
  %301 = vmatprep.subr.mxu0 0.0
  %302 = vmatpush1.msra.mxu0 0.0
  %303 = vmatprep.subr.mxu0 0.0
  %304 = vmatpush1.msra.mxu0 0.0
  %305 = vmatprep.subr.mxu0 0.0
  %306 = vmatpush1.msra.mxu0 0.0
  %307 = vmatprep.subr.mxu0 0.0
  %308 = vmatpush1.msra.mxu0 0.0
  %309 = vmatprep.subr.mxu0 0.0
  %310 = vmatpush1.msra.mxu0 0.0
  %311 = vmatprep.subr.mxu0 0.0
  %312 = vmatpush1.msra.mxu0 0.0
  %313 = vmatprep.subr.mxu0 0.0
  %314 = vmatpush1.msra.mxu0 0.0
  %315 = vmatprep.subr.mxu0 0.0
  %316 = vmatpush1.msra.mxu0 0.0
  %317 = vmatprep.subr.mxu0 0.0
  %318 = vmatpush1.msra.mxu0 0.0
  %319 = vmatprep.subr.mxu0 0.0
  %320 = vmatpush1.msra.mxu0 0.0
  %321 = vmatprep.subr.mxu0 0.0
  %322 = vmatpush1.msra.mxu0 0.0
  %323 = vmatprep.subr.mxu0 0.0
  %324 = vmatpush1.msra.mxu0 0.0
  %325 = vmatprep.subr.mxu0 0.0
  %326 = vmatpush1.msra.mxu0 0.0
  %327 = vmatprep.mubr.f32.mxu0 0.0
  %328 = vmatmul.mubr.f32.gmra.mrb[0].mxu0 %v104
  %v329 = vpop.f32.mrb[0].mxu0
  %v330 = vadd.f32 %v260, %v329
  %v331 = vpop.f32.mrb[0].mxu0
  %332 = vdwg.mxu0
  %v333 = vxor.u32 %v330, 2147483648
  %v334 = vmul.f32 %v333, 1.442695
  %v335 = vpow.pop %v334
  %v336 = vadd.f32 %v335, 1.0
  %v337 = vrcp.pop %v336
  %v338 = vmul.f32 1.0, %v337
  %339 = vst [vmem:[%s4] sm:$0xff] %v338
  // Predicated region
  $region18: #{cbam_forward.6} parent=0 // pred_check
    _
  $region19: #{cbam_forward.6} parent=0 // pred_check_branch
    %341 = sbr.rel (0) target = $region21
  $region20: #{cbam_forward.6} parent=0 // pred_region
    _
  $region21: #{cbam_forward.6} parent=0 // pred_fallthru
    _
  // Predicated region
  $region22: #{cbam_forward.6} parent=0 // pred_check
    _
  $region23: #{cbam_forward.6} parent=0 // pred_check_branch
    %343 = sbr.rel (0) target = $region25
  $region24: #{cbam_forward.6} parent=0 // pred_region
    _
  $region25: #{cbam_forward.6} parent=0 // pred_fallthru
    _

// kernel: cbam_forward.7
$region0: #{cbam_forward.7}
  #allocation0 [shape = 'u32[]', space=smem, size = 0x4, offset = 0x4, fixed_abs, tag = 'smem constant byte address 0x4 - core index']
  #allocation1 [shape = 'u32[144,128]{1,0:T(1,128)}', space=vmem, size = 0x12000, scoped, tag = 'internal scratch']
  %s0 = inlined_call_operand.vmem [shape: f32[2,32,256], index: 0, kind: input, shape index: {}]
  %s1 = inlined_call_operand.vmem [shape: f32[2,32,1], index: 1, kind: input, shape index: {}]
  %s2 = inlined_call_operand.vmem [shape: f32[2,1,256], index: 2, kind: output, shape index: {0}]
  %s3 = inlined_call_operand.vmem [shape: f32[2,1,256], index: 3, kind: output, shape index: {1}]
  %4 = xla_tuple %s2, %s3
  %s5 = sld [smem:[#allocation0]]
  $region49: #{cbam_forward.7} parent=0
    _
  %s7 = ssub.s32 1, %s5
  %s8 = scalar_select 0, %s7, %s5
  loop: start=0, step=1, limit=4
  $region2: #{cbam_forward.7} parent=0 // loop_pre_header
    _
  $region3: #{cbam_forward.7} parent=0 // loop_header
    %s10 = sphi 0, %s14
    %p11 = scmp.ge.s32.totalorder %s10, 4
    %s17 = sphi 0, %s29
    %s18 = sphi 0, %s25
    %s19 = sphi 0, %s17
    %s20 = sphi 0, %s18
    %s21 = sphi 0, %s19
    %s22 = sphi 0, %s20
    %s34 = sphi 0, %s36
    %s37 = sphi 0, %s34
    %s38 = sphi 0, %s37
    %s54 = sphi 0, %s38
    %s60 = sphi 0, %s62
    %s63 = sphi 0, %s60
    %s64 = sphi 0, %s63
    %s80 = sphi 0, %s64
    %s88 = sphi 0, %s90
    %s91 = sphi 0, %s88
    %s92 = sphi 0, %s91
    %s108 = sphi 0, %s92
    %s116 = sphi 0, %s118
    %s119 = sphi 0, %s116
    %s120 = sphi 0, %s119
    %s136 = sphi 0, %s120
  $region4: #{cbam_forward.7} parent=0 // loop_header_branch
    %13 = sbr.rel (%p11) target = $region8
  $region5: #{cbam_forward.7} parent=0 // loop_body
    %s15 = ssub.s32 %s10, 1
    %s16 = ssub.s32 %s10, 2
    %s23 = sadd.s32 1, %s18
    %p24 = scmp.ge.s32.totalorder %s23, 1
    %s25 = scalar_select %p24, 0, %s23
    %s26 = sadd.s32 1, %s17
    %s27 = scalar_select %p24, %s26, %s17
    %p28 = scmp.ge.s32.totalorder %s27, 2
    %s29 = scalar_select %p28, 0, %s27
    %s30 = ssub.s32 %s17, %s29
    %s31 = ssub.s32 %s18, %s25
    %s32 = sor.u32 %s30, %s31
    %p33 = scmp.eq.s32.totalorder %s32, 0
    %s35 = sadd.s32 %s34, 1
    %s36 = scalar_select %p33, %s34, %s35
    %p39 = pneg %p33
    %p40 = scmp.eq.s32.totalorder %s10, 1
    %p41 = por %p39, %p40
    %p42 = scmp.ne.s32.totalorder %s34, %s37
    %p43 = scmp.eq.s32.totalorder %s10, 0
    %p44 = por %p42, %p43
    %p45 = scmp.ne.s32.totalorder %s34, %s37
    %p46 = scmp.eq.s32.totalorder %s15, 1
    %p47 = por %p45, %p46
    %p48 = scmp.ne.s32.totalorder %s37, %s38
    %p49 = scmp.eq.s32.totalorder %s15, 0
    %p50 = por %p48, %p49
    %p51 = scmp.ne.s32.totalorder %s37, %s38
    %p52 = scmp.eq.s32.totalorder %s16, 1
    %p53 = por %p51, %p52
    %p55 = scmp.ne.s32.totalorder %s38, %s54
    %p56 = scmp.eq.s32.totalorder %s16, 0
    %p57 = por %p55, %p56
    %s58 = ssub.s32 %s17, %s29
    %p59 = scmp.eq.s32.totalorder %s58, 0
    %s61 = sadd.s32 %s60, 1
    %s62 = scalar_select %p59, %s60, %s61
    %p65 = pneg %p59
    %p66 = scmp.eq.s32.totalorder %s10, 1
    %p67 = por %p65, %p66
    %p68 = scmp.ne.s32.totalorder %s60, %s63
    %p69 = scmp.eq.s32.totalorder %s10, 0
    %p70 = por %p68, %p69
    %p71 = scmp.ne.s32.totalorder %s60, %s63
    %p72 = scmp.eq.s32.totalorder %s15, 1
    %p73 = por %p71, %p72
    %p74 = scmp.ne.s32.totalorder %s63, %s64
    %p75 = scmp.eq.s32.totalorder %s15, 0
    %p76 = por %p74, %p75
    %p77 = scmp.ne.s32.totalorder %s63, %s64
    %p78 = scmp.eq.s32.totalorder %s16, 1
    %p79 = por %p77, %p78
    %p81 = scmp.ne.s32.totalorder %s64, %s80
    %p82 = scmp.eq.s32.totalorder %s16, 0
    %p83 = por %p81, %p82
    %s84 = ssub.s32 %s17, %s29
    %s85 = ssub.s32 %s18, %s25
    %s86 = sor.u32 %s84, %s85
    %p87 = scmp.eq.s32.totalorder %s86, 0
    %s89 = sadd.s32 %s88, 1
    %s90 = scalar_select %p87, %s88, %s89
    %p93 = pneg %p87
    %p94 = scmp.eq.s32.totalorder %s10, 1
    %p95 = por %p93, %p94
    %p96 = scmp.ne.s32.totalorder %s88, %s91
    %p97 = scmp.eq.s32.totalorder %s10, 0
    %p98 = por %p96, %p97
    %p99 = scmp.ne.s32.totalorder %s88, %s91
    %p100 = scmp.eq.s32.totalorder %s15, 1
    %p101 = por %p99, %p100
    %p102 = scmp.ne.s32.totalorder %s91, %s92
    %p103 = scmp.eq.s32.totalorder %s15, 0
    %p104 = por %p102, %p103
    %p105 = scmp.ne.s32.totalorder %s91, %s92
    %p106 = scmp.eq.s32.totalorder %s16, 1
    %p107 = por %p105, %p106
    %p109 = scmp.ne.s32.totalorder %s92, %s108
    %p110 = scmp.eq.s32.totalorder %s16, 0
    %p111 = por %p109, %p110
    %s112 = ssub.s32 %s17, %s29
    %s113 = ssub.s32 %s18, %s25
    %s114 = sor.u32 %s112, %s113
    %p115 = scmp.eq.s32.totalorder %s114, 0
    %s117 = sadd.s32 %s116, 1
    %s118 = scalar_select %p115, %s116, %s117
    %p121 = pneg %p115
    %p122 = scmp.eq.s32.totalorder %s10, 1
    %p123 = por %p121, %p122
    %p124 = scmp.ne.s32.totalorder %s116, %s119
    %p125 = scmp.eq.s32.totalorder %s10, 0
    %p126 = por %p124, %p125
    %p127 = scmp.ne.s32.totalorder %s116, %s119
    %p128 = scmp.eq.s32.totalorder %s15, 1
    %p129 = por %p127, %p128
    %p130 = scmp.ne.s32.totalorder %s119, %s120
    %p131 = scmp.eq.s32.totalorder %s15, 0
    %p132 = por %p130, %p131
    %p133 = scmp.ne.s32.totalorder %s119, %s120
    %p134 = scmp.eq.s32.totalorder %s16, 1
    %p135 = por %p133, %p134
    %p137 = scmp.ne.s32.totalorder %s120, %s136
    %p138 = scmp.eq.s32.totalorder %s16, 0
    %p139 = por %p137, %p138
    %p140 = scmp.le.s32.totalorder 1, %s10
    %p141 = scmp.lt.s32.totalorder %s10, 3
    %p142 = pnand %p140, %p141
    %p143 = pneg %p142
    // Predicated region
    $region9: #{cbam_forward.7} parent=5 // pred_check
      _
    $region10: #{cbam_forward.7} parent=5 // pred_check_branch
      %145 = sbr.rel (%p142) target = $region12
    $region11: #{cbam_forward.7} parent=5 // pred_region
      %s146 = ssub.s32 %s10, 1
    $region12: #{cbam_forward.7} parent=5 // pred_fallthru
      _
    %p147 = scmp.lt.s32.totalorder %s10, 2
    // Predicated region
    $region13: #{cbam_forward.7} parent=5 // pred_check
      %p148 = pneg %p147
    $region14: #{cbam_forward.7} parent=5 // pred_check_branch
      %150 = sbr.rel (%p148) target = $region16
    $region15: #{cbam_forward.7} parent=5 // pred_region
      // Predicated region
      $region17: #{cbam_forward.7} parent=15 // pred_check
        %p151 = pneg %p44
      $region18: #{cbam_forward.7} parent=15 // pred_check_branch
        %153 = sbr.rel (%p151) target = $region20
      $region19: #{cbam_forward.7} parent=15 // pred_region
        %s154 = smul.u32 2, %s18
        %p155 = scmp.lt.s32.totalorder %s17, 1
        %s156 = scalar_select %p155, %s17, 1
        %p157 = scmp.lt.s32.totalorder %s154, 1
        %s158 = scalar_select %p157, %s154, 1
        %s159 = smul.addr %s156, 8
        %s160 = sadd.s32 %s158, %s159
        %s161 = smul.addr %s160, 8
        %s162 = scalar_lea.vmem %s0, %s161
        %s163 = smul.u32 2, %s18
      $region20: #{cbam_forward.7} parent=15 // pred_fallthru
        _
      // Predicated region
      $region21: #{cbam_forward.7} parent=15 // pred_check
        %p164 = pneg %p70
      $region22: #{cbam_forward.7} parent=15 // pred_check_branch
        %166 = sbr.rel (%p164) target = $region24
      $region23: #{cbam_forward.7} parent=15 // pred_region
        %p167 = scmp.lt.s32.totalorder %s17, 1
        %s168 = scalar_select %p167, %s17, 1
        %s169 = smul.addr %s168, 4
        %s170 = smul.addr %s169, 8
        %s171 = scalar_lea.vmem %s1, %s170
      $region24: #{cbam_forward.7} parent=15 // pred_fallthru
        _
    $region16: #{cbam_forward.7} parent=5 // pred_fallthru
      _
    %p172 = scmp.le.s32.totalorder 1, %s10
    %p173 = scmp.lt.s32.totalorder %s10, 3
    %p174 = pnand %p172, %p173
    %p175 = pneg %p174
    // Predicated region
    $region25: #{cbam_forward.7} parent=5 // pred_check
      _
    $region26: #{cbam_forward.7} parent=5 // pred_check_branch
      %177 = sbr.rel (%p174) target = $region28
    $region27: #{cbam_forward.7} parent=5 // pred_region
      %s178 = ssub.s32 %s10, 1
      %s179 = smul.u32 2, %s20
      %p180 = scmp.lt.s32.totalorder %s19, 1
      %s181 = scalar_select %p180, %s19, 1
      %p182 = scmp.lt.s32.totalorder %s179, 1
      %s183 = scalar_select %p182, %s179, 1
      %s184 = smul.addr %s181, 8
      %s185 = sadd.s32 %s183, %s184
      %s186 = smul.addr %s185, 8
      %s187 = scalar_lea.vmem %s0, %s186
      %p188 = pneg %p50
      %p189 = pneg %p47
      %p190 = scmp.lt.s32.totalorder %s19, 1
      %s191 = scalar_select %p190, %s19, 1
      %s192 = smul.addr %s191, 4
      %s193 = smul.addr %s192, 8
      %s194 = scalar_lea.vmem %s1, %s193
      %p195 = pneg %p76
      %p196 = pneg %p73
      %p197 = pneg %p104
      %p198 = pneg %p101
      %s199 = smul.u32 2, %s20
      %p200 = scmp.lt.s32.totalorder %s19, 1
      %s201 = scalar_select %p200, %s19, 1
      %p202 = scmp.lt.s32.totalorder %s199, 1
      %s203 = scalar_select %p202, %s199, 1
      %s204 = smul.addr %s201, 2
      %s205 = sadd.s32 %s203, %s204
      %s206 = scalar_lea.vmem %s2, %s205
      %p207 = pneg %p132
      %p208 = pneg %p129
      %s209 = smul.u32 2, %s20
      %p210 = scmp.lt.s32.totalorder %s19, 1
      %s211 = scalar_select %p210, %s19, 1
      %p212 = scmp.lt.s32.totalorder %s209, 1
      %s213 = scalar_select %p212, %s209, 1
      %s214 = smul.addr %s211, 2
      %s215 = sadd.s32 %s213, %s214
      %s216 = scalar_lea.vmem %s3, %s215
      %s217 = smul.u32 2, %s20
      %p218 = scmp.lt.s32.totalorder %s19, 1
      %s219 = scalar_select %p218, %s19, 1
      %p220 = scmp.lt.s32.totalorder %s217, 1
      %s221 = scalar_select %p220, %s217, 1
      %s222 = smul.addr %s219, 8
      %s223 = sadd.s32 %s221, %s222
      %s224 = smul.addr %s223, 8
      %s225 = scalar_lea.vmem %s0, %s224
      %s226 = smul.u32 2, %s20
      %p227 = scmp.lt.s32.totalorder %s19, 1
      %s228 = scalar_select %p227, %s19, 1
      %s229 = smul.addr %s228, 4
      %s230 = smul.addr %s229, 8
      %s231 = scalar_lea.vmem %s1, %s230
      %s232 = smul.u32 2, %s20
      %p233 = scmp.lt.s32.totalorder %s19, 1
      %s234 = scalar_select %p233, %s19, 1
      %p235 = scmp.lt.s32.totalorder %s232, 1
      %s236 = scalar_select %p235, %s232, 1
      %s237 = smul.addr %s234, 2
      %s238 = sadd.s32 %s236, %s237
      %s239 = scalar_lea.vmem %s2, %s238
      %s240 = smul.u32 2, %s20
      %s241 = smul.u32 2, %s20
      %p242 = scmp.lt.s32.totalorder %s19, 1
      %s243 = scalar_select %p242, %s19, 1
      %p244 = scmp.lt.s32.totalorder %s241, 1
      %s245 = scalar_select %p244, %s241, 1
      %s246 = smul.addr %s243, 2
      %s247 = sadd.s32 %s245, %s246
      %s248 = scalar_lea.vmem %s3, %s247
      %s249 = smul.u32 2, %s20
      %v250 = vld [vmem:[%s225] sm:$0xff]
      %v251 = vld [vmem:[%s225 + $0x8] sm:$0xff]
      %v252 = vld [vmem:[%s225 + $0x10] sm:$0xff]
      %v253 = vld [vmem:[%s225 + $0x18] sm:$0xff]
      %v254 = vld [vmem:[%s225 + $0x20] sm:$0xff]
      %v255 = vld [vmem:[%s225 + $0x28] sm:$0xff]
      %v256 = vld [vmem:[%s225 + $0x30] sm:$0xff]
      %v257 = vld [vmem:[%s225 + $0x38] sm:$0xff]
      %v258 = vld [vmem:[%s231] sm:$0xff]
      %v259 = vld [vmem:[%s231 + $0x8] sm:$0xff]
      %v260 = vld [vmem:[%s231 + $0x10] sm:$0xff]
      %v261 = vld [vmem:[%s231 + $0x18] sm:$0xff]
      %263 = vset.pattern.permute.xlu0 0
      %264 = vperm.xlu0 %263, %v258
      %v265 = vpop.permute.xlu0 %264
      %268 = vset.pattern.permute.xlu0 0
      %269 = vperm.xlu0 %268, %v259
      %v270 = vpop.permute.xlu0 %269
      %273 = vset.pattern.permute.xlu0 0
      %274 = vperm.xlu0 %273, %v260
      %v275 = vpop.permute.xlu0 %274
      %278 = vset.pattern.permute.xlu0 0
      %279 = vperm.xlu0 %278, %v261
      %v280 = vpop.permute.xlu0 %279
      %v282 = vmul.f32 %v250, %v265
      %v283 = vmul.f32 %v251, %v265
      %v284 = vmul.f32 %v252, %v270
      %v285 = vmul.f32 %v253, %v270
      %v286 = vmul.f32 %v254, %v275
      %v287 = vmul.f32 %v255, %v275
      %v288 = vmul.f32 %v256, %v280
      %v289 = vmul.f32 %v257, %v280
      %v290 = vadd.f32 %v282, %v284
      %v291 = vadd.f32 %v290, %v286
      %v292 = vadd.f32 %v291, %v288
      %v293 = vrot.slane %v292, 4
      %v294 = vadd.f32 %v292, %v293
      %v295 = vrot.slane %v294, 2
      %v296 = vadd.f32 %v294, %v295
      %v297 = vrot.slane %v296, 1
      %v298 = vadd.f32 %v296, %v297
      %v299 = vadd.f32 %v283, %v285
      %v300 = vadd.f32 %v299, %v287
      %v301 = vadd.f32 %v300, %v289
      %v302 = vrot.slane %v301, 4
      %v303 = vadd.f32 %v301, %v302
      %v304 = vrot.slane %v303, 2
      %v305 = vadd.f32 %v303, %v304
      %v306 = vrot.slane %v305, 1
      %v307 = vadd.f32 %v305, %v306
      %v308 = vmul.f32 %v298, 0.03125
      %v309 = vmul.f32 %v307, 0.03125
      %v312 = vcombine.low %v308, %v309
      %v314 = vunpack.c.l.s4 1966171168
      %v315 = vunpack.c.0.s8 %v314
      %v316 = vlaneseq
      %v317 = vshrl.u32 %v316, 7
      %v318 = vsub.s32 %v315, %v317
      %v319 = vrot.slane %v312, %v318
      %v321 = vunpack.c.l.s4 1966171168
      %v322 = vunpack.c.0.s8 %v321
      %v323 = vlaneseq
      %v324 = vshrl.u32 %v323, 7
      %v325 = vsub.s32 %v322, %v324
      %v326 = vrot.slane %v319, %v325
      %v328 = vlaneseq
      %vm329 = vcmp.ge.s32.totalorder %v328, 0
      %vm330 = vcmp.lt.s32.totalorder %v328, 256
      %vm331 = vmand %vm329, %vm330
      %332 = vst.msk [vmem:[%s239] sm:$0x3] %vm331, %v326
      %v333 = vmax.f32 %v282, %v286
      %v334 = vmax.f32 %v284, %v288
      %v335 = vmax.f32 %v333, %v334
      %v336 = vrot.slane %v335, 4
      %v337 = vmax.f32 %v335, %v336
      %v338 = vrot.slane %v337, 2
      %v339 = vmax.f32 %v337, %v338
      %v340 = vrot.slane %v339, 1
      %v341 = vmax.f32 %v339, %v340
      %v342 = vmax.f32 %v283, %v287
      %v343 = vmax.f32 %v285, %v289
      %v344 = vmax.f32 %v342, %v343
      %v345 = vrot.slane %v344, 4
      %v346 = vmax.f32 %v344, %v345
      %v347 = vrot.slane %v346, 2
      %v348 = vmax.f32 %v346, %v347
      %v349 = vrot.slane %v348, 1
      %v350 = vmax.f32 %v348, %v349
      %v353 = vcombine.low %v341, %v350
      %v355 = vunpack.c.l.s4 1966171168
      %v356 = vunpack.c.0.s8 %v355
      %v357 = vlaneseq
      %v358 = vshrl.u32 %v357, 7
      %v359 = vsub.s32 %v356, %v358
      %v360 = vrot.slane %v353, %v359
      %v362 = vunpack.c.l.s4 1966171168
      %v363 = vunpack.c.0.s8 %v362
      %v364 = vlaneseq
      %v365 = vshrl.u32 %v364, 7
      %v366 = vsub.s32 %v363, %v365
      %v367 = vrot.slane %v360, %v366
      %369 = vst.msk [vmem:[%s248] sm:$0x3] %vm331, %v367
      %s370 = smul.u32 2, %s20
      %p371 = scmp.lt.s32.totalorder %s19, 1
      %s372 = scalar_select %p371, %s19, 1
      %p373 = scmp.lt.s32.totalorder %s370, 1
      %s374 = scalar_select %p373, %s370, 1
      %s375 = smul.addr %s372, 2
      %s376 = sadd.s32 %s374, %s375
      %s377 = scalar_lea.vmem %s2, %s376
      %s378 = smul.u32 2, %s20
      %p379 = scmp.lt.s32.totalorder %s19, 1
      %s380 = scalar_select %p379, %s19, 1
      %p381 = scmp.lt.s32.totalorder %s378, 1
      %s382 = scalar_select %p381, %s378, 1
      %s383 = smul.addr %s380, 2
      %s384 = sadd.s32 %s382, %s383
      %s385 = scalar_lea.vmem %s3, %s384
      // Predicated region
      $region29: #{cbam_forward.7} parent=27 // pred_check
        %p386 = pneg %p101
      $region30: #{cbam_forward.7} parent=27 // pred_check_branch
        %388 = sbr.rel (%p386) target = $region32
      $region31: #{cbam_forward.7} parent=27 // pred_region
        %s389 = smul.u32 2, %s20
      $region32: #{cbam_forward.7} parent=27 // pred_fallthru
        _
      // Predicated region
      $region33: #{cbam_forward.7} parent=27 // pred_check
        %p390 = pneg %p129
      $region34: #{cbam_forward.7} parent=27 // pred_check_branch
        %392 = sbr.rel (%p390) target = $region36
      $region35: #{cbam_forward.7} parent=27 // pred_region
        %s393 = smul.u32 2, %s20
      $region36: #{cbam_forward.7} parent=27 // pred_fallthru
        _
    $region28: #{cbam_forward.7} parent=5 // pred_fallthru
      _
    %p394 = scmp.le.s32.totalorder 2, %s10
    // Predicated region
    $region37: #{cbam_forward.7} parent=5 // pred_check
      %p395 = pneg %p394
    $region38: #{cbam_forward.7} parent=5 // pred_check_branch
      %397 = sbr.rel (%p395) target = $region40
    $region39: #{cbam_forward.7} parent=5 // pred_region
      %s398 = ssub.s32 %s10, 2
      // Predicated region
      $region41: #{cbam_forward.7} parent=39 // pred_check
        %p399 = pneg %p107
      $region42: #{cbam_forward.7} parent=39 // pred_check_branch
        %401 = sbr.rel (%p399) target = $region44
      $region43: #{cbam_forward.7} parent=39 // pred_region
        %s402 = smul.u32 2, %s22
        %p403 = scmp.lt.s32.totalorder %s21, 1
        %s404 = scalar_select %p403, %s21, 1
        %p405 = scmp.lt.s32.totalorder %s402, 1
        %s406 = scalar_select %p405, %s402, 1
        %s407 = smul.addr %s404, 2
        %s408 = sadd.s32 %s406, %s407
        %s409 = scalar_lea.vmem %s2, %s408
      $region44: #{cbam_forward.7} parent=39 // pred_fallthru
        _
      // Predicated region
      $region45: #{cbam_forward.7} parent=39 // pred_check
        %p410 = pneg %p135
      $region46: #{cbam_forward.7} parent=39 // pred_check_branch
        %412 = sbr.rel (%p410) target = $region48
      $region47: #{cbam_forward.7} parent=39 // pred_region
        %s413 = smul.u32 2, %s22
        %p414 = scmp.lt.s32.totalorder %s21, 1
        %s415 = scalar_select %p414, %s21, 1
        %p416 = scmp.lt.s32.totalorder %s413, 1
        %s417 = scalar_select %p416, %s413, 1
        %s418 = smul.addr %s415, 2
        %s419 = sadd.s32 %s417, %s418
        %s420 = scalar_lea.vmem %s3, %s419
      $region48: #{cbam_forward.7} parent=39 // pred_fallthru
        _
    $region40: #{cbam_forward.7} parent=5 // pred_fallthru
      _
  $region6: #{cbam_forward.7} parent=0 // loop_footer
    %s14 = sadd.s32 1, %s10
  $region7: #{cbam_forward.7} parent=0 // loop_footer_branch
    %9 = sbr.rel target = $region3
  $region8: #{cbam_forward.7} parent=0 // loop_exit
    _

// kernel: cbam_forward.9
$region0: #{cbam_forward.9}
  #allocation0 [shape = 'u32[]', space=smem, size = 0x4, offset = 0x4, fixed_abs, tag = 'smem constant byte address 0x4 - core index']
  #allocation1 [shape = 'u32[144,128]{1,0:T(1,128)}', space=vmem, size = 0x12000, scoped, tag = 'internal scratch']
  %s0 = inlined_call_operand.vmem [shape: f32[2,32,256], index: 0, kind: input, shape index: {}]
  %s1 = inlined_call_operand.vmem [shape: f32[2,32,1], index: 1, kind: input, shape index: {}]
  %s2 = inlined_call_operand.vmem [shape: f32[2,1,256], index: 2, kind: input, shape index: {}]
  %s3 = inlined_call_operand.vmem [shape: f32[2,32,256], index: 3, kind: output, shape index: {}]
  %s4 = sld [smem:[#allocation0]]
  $region45: #{cbam_forward.9} parent=0
    _
  %s6 = ssub.s32 1, %s4
  %s7 = scalar_select 0, %s6, %s4
  loop: start=0, step=1, limit=4
  $region2: #{cbam_forward.9} parent=0 // loop_pre_header
    _
  $region3: #{cbam_forward.9} parent=0 // loop_header
    %s9 = sphi 0, %s13
    %p10 = scmp.ge.s32.totalorder %s9, 4
    %s16 = sphi 0, %s28
    %s17 = sphi 0, %s24
    %s18 = sphi 0, %s16
    %s19 = sphi 0, %s17
    %s20 = sphi 0, %s18
    %s21 = sphi 0, %s19
    %s33 = sphi 0, %s35
    %s36 = sphi 0, %s33
    %s37 = sphi 0, %s36
    %s53 = sphi 0, %s37
    %s59 = sphi 0, %s61
    %s62 = sphi 0, %s59
    %s63 = sphi 0, %s62
    %s79 = sphi 0, %s63
    %s87 = sphi 0, %s89
    %s90 = sphi 0, %s87
    %s91 = sphi 0, %s90
    %s107 = sphi 0, %s91
    %s115 = sphi 0, %s117
    %s118 = sphi 0, %s115
    %s119 = sphi 0, %s118
    %s135 = sphi 0, %s119
  $region4: #{cbam_forward.9} parent=0 // loop_header_branch
    %12 = sbr.rel (%p10) target = $region8
  $region5: #{cbam_forward.9} parent=0 // loop_body
    %s14 = ssub.s32 %s9, 1
    %s15 = ssub.s32 %s9, 2
    %s22 = sadd.s32 1, %s17
    %p23 = scmp.ge.s32.totalorder %s22, 1
    %s24 = scalar_select %p23, 0, %s22
    %s25 = sadd.s32 1, %s16
    %s26 = scalar_select %p23, %s25, %s16
    %p27 = scmp.ge.s32.totalorder %s26, 2
    %s28 = scalar_select %p27, 0, %s26
    %s29 = ssub.s32 %s16, %s28
    %s30 = ssub.s32 %s17, %s24
    %s31 = sor.u32 %s29, %s30
    %p32 = scmp.eq.s32.totalorder %s31, 0
    %s34 = sadd.s32 %s33, 1
    %s35 = scalar_select %p32, %s33, %s34
    %p38 = pneg %p32
    %p39 = scmp.eq.s32.totalorder %s9, 1
    %p40 = por %p38, %p39
    %p41 = scmp.ne.s32.totalorder %s33, %s36
    %p42 = scmp.eq.s32.totalorder %s9, 0
    %p43 = por %p41, %p42
    %p44 = scmp.ne.s32.totalorder %s33, %s36
    %p45 = scmp.eq.s32.totalorder %s14, 1
    %p46 = por %p44, %p45
    %p47 = scmp.ne.s32.totalorder %s36, %s37
    %p48 = scmp.eq.s32.totalorder %s14, 0
    %p49 = por %p47, %p48
    %p50 = scmp.ne.s32.totalorder %s36, %s37
    %p51 = scmp.eq.s32.totalorder %s15, 1
    %p52 = por %p50, %p51
    %p54 = scmp.ne.s32.totalorder %s37, %s53
    %p55 = scmp.eq.s32.totalorder %s15, 0
    %p56 = por %p54, %p55
    %s57 = ssub.s32 %s16, %s28
    %p58 = scmp.eq.s32.totalorder %s57, 0
    %s60 = sadd.s32 %s59, 1
    %s61 = scalar_select %p58, %s59, %s60
    %p64 = pneg %p58
    %p65 = scmp.eq.s32.totalorder %s9, 1
    %p66 = por %p64, %p65
    %p67 = scmp.ne.s32.totalorder %s59, %s62
    %p68 = scmp.eq.s32.totalorder %s9, 0
    %p69 = por %p67, %p68
    %p70 = scmp.ne.s32.totalorder %s59, %s62
    %p71 = scmp.eq.s32.totalorder %s14, 1
    %p72 = por %p70, %p71
    %p73 = scmp.ne.s32.totalorder %s62, %s63
    %p74 = scmp.eq.s32.totalorder %s14, 0
    %p75 = por %p73, %p74
    %p76 = scmp.ne.s32.totalorder %s62, %s63
    %p77 = scmp.eq.s32.totalorder %s15, 1
    %p78 = por %p76, %p77
    %p80 = scmp.ne.s32.totalorder %s63, %s79
    %p81 = scmp.eq.s32.totalorder %s15, 0
    %p82 = por %p80, %p81
    %s83 = ssub.s32 %s16, %s28
    %s84 = ssub.s32 %s17, %s24
    %s85 = sor.u32 %s83, %s84
    %p86 = scmp.eq.s32.totalorder %s85, 0
    %s88 = sadd.s32 %s87, 1
    %s89 = scalar_select %p86, %s87, %s88
    %p92 = pneg %p86
    %p93 = scmp.eq.s32.totalorder %s9, 1
    %p94 = por %p92, %p93
    %p95 = scmp.ne.s32.totalorder %s87, %s90
    %p96 = scmp.eq.s32.totalorder %s9, 0
    %p97 = por %p95, %p96
    %p98 = scmp.ne.s32.totalorder %s87, %s90
    %p99 = scmp.eq.s32.totalorder %s14, 1
    %p100 = por %p98, %p99
    %p101 = scmp.ne.s32.totalorder %s90, %s91
    %p102 = scmp.eq.s32.totalorder %s14, 0
    %p103 = por %p101, %p102
    %p104 = scmp.ne.s32.totalorder %s90, %s91
    %p105 = scmp.eq.s32.totalorder %s15, 1
    %p106 = por %p104, %p105
    %p108 = scmp.ne.s32.totalorder %s91, %s107
    %p109 = scmp.eq.s32.totalorder %s15, 0
    %p110 = por %p108, %p109
    %s111 = ssub.s32 %s16, %s28
    %s112 = ssub.s32 %s17, %s24
    %s113 = sor.u32 %s111, %s112
    %p114 = scmp.eq.s32.totalorder %s113, 0
    %s116 = sadd.s32 %s115, 1
    %s117 = scalar_select %p114, %s115, %s116
    %p120 = pneg %p114
    %p121 = scmp.eq.s32.totalorder %s9, 1
    %p122 = por %p120, %p121
    %p123 = scmp.ne.s32.totalorder %s115, %s118
    %p124 = scmp.eq.s32.totalorder %s9, 0
    %p125 = por %p123, %p124
    %p126 = scmp.ne.s32.totalorder %s115, %s118
    %p127 = scmp.eq.s32.totalorder %s14, 1
    %p128 = por %p126, %p127
    %p129 = scmp.ne.s32.totalorder %s118, %s119
    %p130 = scmp.eq.s32.totalorder %s14, 0
    %p131 = por %p129, %p130
    %p132 = scmp.ne.s32.totalorder %s118, %s119
    %p133 = scmp.eq.s32.totalorder %s15, 1
    %p134 = por %p132, %p133
    %p136 = scmp.ne.s32.totalorder %s119, %s135
    %p137 = scmp.eq.s32.totalorder %s15, 0
    %p138 = por %p136, %p137
    %p139 = scmp.le.s32.totalorder 1, %s9
    %p140 = scmp.lt.s32.totalorder %s9, 3
    %p141 = pnand %p139, %p140
    %p142 = pneg %p141
    // Predicated region
    $region9: #{cbam_forward.9} parent=5 // pred_check
      _
    $region10: #{cbam_forward.9} parent=5 // pred_check_branch
      %144 = sbr.rel (%p141) target = $region12
    $region11: #{cbam_forward.9} parent=5 // pred_region
      %s145 = ssub.s32 %s9, 1
    $region12: #{cbam_forward.9} parent=5 // pred_fallthru
      _
    %p146 = scmp.lt.s32.totalorder %s9, 2
    // Predicated region
    $region13: #{cbam_forward.9} parent=5 // pred_check
      %p147 = pneg %p146
    $region14: #{cbam_forward.9} parent=5 // pred_check_branch
      %149 = sbr.rel (%p147) target = $region16
    $region15: #{cbam_forward.9} parent=5 // pred_region
      // Predicated region
      $region17: #{cbam_forward.9} parent=15 // pred_check
        %p150 = pneg %p43
      $region18: #{cbam_forward.9} parent=15 // pred_check_branch
        %152 = sbr.rel (%p150) target = $region20
      $region19: #{cbam_forward.9} parent=15 // pred_region
        %s153 = smul.u32 2, %s17
        %p154 = scmp.lt.s32.totalorder %s16, 1
        %s155 = scalar_select %p154, %s16, 1
        %p156 = scmp.lt.s32.totalorder %s153, 1
        %s157 = scalar_select %p156, %s153, 1
        %s158 = smul.addr %s155, 8
        %s159 = sadd.s32 %s157, %s158
        %s160 = smul.addr %s159, 8
        %s161 = scalar_lea.vmem %s0, %s160
        %s162 = smul.u32 2, %s17
      $region20: #{cbam_forward.9} parent=15 // pred_fallthru
        _
      // Predicated region
      $region21: #{cbam_forward.9} parent=15 // pred_check
        %p163 = pneg %p69
      $region22: #{cbam_forward.9} parent=15 // pred_check_branch
        %165 = sbr.rel (%p163) target = $region24
      $region23: #{cbam_forward.9} parent=15 // pred_region
        %p166 = scmp.lt.s32.totalorder %s16, 1
        %s167 = scalar_select %p166, %s16, 1
        %s168 = smul.addr %s167, 4
        %s169 = smul.addr %s168, 8
        %s170 = scalar_lea.vmem %s1, %s169
      $region24: #{cbam_forward.9} parent=15 // pred_fallthru
        _
      // Predicated region
      $region25: #{cbam_forward.9} parent=15 // pred_check
        %p171 = pneg %p97
      $region26: #{cbam_forward.9} parent=15 // pred_check_branch
        %173 = sbr.rel (%p171) target = $region28
      $region27: #{cbam_forward.9} parent=15 // pred_region
        %s174 = smul.u32 2, %s17
        %p175 = scmp.lt.s32.totalorder %s16, 1
        %s176 = scalar_select %p175, %s16, 1
        %p177 = scmp.lt.s32.totalorder %s174, 1
        %s178 = scalar_select %p177, %s174, 1
        %s179 = smul.addr %s176, 2
        %s180 = sadd.s32 %s178, %s179
        %s181 = scalar_lea.vmem %s2, %s180
        %s182 = smul.u32 2, %s17
      $region28: #{cbam_forward.9} parent=15 // pred_fallthru
        _
    $region16: #{cbam_forward.9} parent=5 // pred_fallthru
      _
    %p183 = scmp.le.s32.totalorder 1, %s9
    %p184 = scmp.lt.s32.totalorder %s9, 3
    %p185 = pnand %p183, %p184
    %p186 = pneg %p185
    // Predicated region
    $region29: #{cbam_forward.9} parent=5 // pred_check
      _
    $region30: #{cbam_forward.9} parent=5 // pred_check_branch
      %188 = sbr.rel (%p185) target = $region32
    $region31: #{cbam_forward.9} parent=5 // pred_region
      %s189 = ssub.s32 %s9, 1
      %s190 = smul.u32 2, %s19
      %p191 = scmp.lt.s32.totalorder %s18, 1
      %s192 = scalar_select %p191, %s18, 1
      %p193 = scmp.lt.s32.totalorder %s190, 1
      %s194 = scalar_select %p193, %s190, 1
      %s195 = smul.addr %s192, 8
      %s196 = sadd.s32 %s194, %s195
      %s197 = smul.addr %s196, 8
      %s198 = scalar_lea.vmem %s0, %s197
      %p199 = pneg %p49
      %p200 = pneg %p46
      %p201 = scmp.lt.s32.totalorder %s18, 1
      %s202 = scalar_select %p201, %s18, 1
      %s203 = smul.addr %s202, 4
      %s204 = smul.addr %s203, 8
      %s205 = scalar_lea.vmem %s1, %s204
      %p206 = pneg %p75
      %p207 = pneg %p72
      %s208 = smul.u32 2, %s19
      %p209 = scmp.lt.s32.totalorder %s18, 1
      %s210 = scalar_select %p209, %s18, 1
      %p211 = scmp.lt.s32.totalorder %s208, 1
      %s212 = scalar_select %p211, %s208, 1
      %s213 = smul.addr %s210, 2
      %s214 = sadd.s32 %s212, %s213
      %s215 = scalar_lea.vmem %s2, %s214
      %p216 = pneg %p103
      %p217 = pneg %p100
      %p218 = pneg %p131
      %p219 = pneg %p128
      %s220 = smul.u32 2, %s19
      %p221 = scmp.lt.s32.totalorder %s18, 1
      %s222 = scalar_select %p221, %s18, 1
      %p223 = scmp.lt.s32.totalorder %s220, 1
      %s224 = scalar_select %p223, %s220, 1
      %s225 = smul.addr %s222, 8
      %s226 = sadd.s32 %s224, %s225
      %s227 = smul.addr %s226, 8
      %s228 = scalar_lea.vmem %s3, %s227
      %s229 = smul.u32 2, %s19
      %p230 = scmp.lt.s32.totalorder %s18, 1
      %s231 = scalar_select %p230, %s18, 1
      %p232 = scmp.lt.s32.totalorder %s229, 1
      %s233 = scalar_select %p232, %s229, 1
      %s234 = smul.addr %s231, 8
      %s235 = sadd.s32 %s233, %s234
      %s236 = smul.addr %s235, 8
      %s237 = scalar_lea.vmem %s0, %s236
      %s238 = smul.u32 2, %s19
      %p239 = scmp.lt.s32.totalorder %s18, 1
      %s240 = scalar_select %p239, %s18, 1
      %s241 = smul.addr %s240, 4
      %s242 = smul.addr %s241, 8
      %s243 = scalar_lea.vmem %s1, %s242
      %s244 = smul.u32 2, %s19
      %p245 = scmp.lt.s32.totalorder %s18, 1
      %s246 = scalar_select %p245, %s18, 1
      %p247 = scmp.lt.s32.totalorder %s244, 1
      %s248 = scalar_select %p247, %s244, 1
      %s249 = smul.addr %s246, 2
      %s250 = sadd.s32 %s248, %s249
      %s251 = scalar_lea.vmem %s2, %s250
      %s252 = smul.u32 2, %s19
      %s253 = smul.u32 2, %s19
      %p254 = scmp.lt.s32.totalorder %s18, 1
      %s255 = scalar_select %p254, %s18, 1
      %p256 = scmp.lt.s32.totalorder %s253, 1
      %s257 = scalar_select %p256, %s253, 1
      %s258 = smul.addr %s255, 8
      %s259 = sadd.s32 %s257, %s258
      %s260 = smul.addr %s259, 8
      %s261 = scalar_lea.vmem %s3, %s260
      %s262 = smul.u32 2, %s19
      %v263 = vld [vmem:[%s237] sm:$0xff]
      %v264 = vld [vmem:[%s237 + $0x8] sm:$0xff]
      %v265 = vld [vmem:[%s237 + $0x10] sm:$0xff]
      %v266 = vld [vmem:[%s237 + $0x18] sm:$0xff]
      %v267 = vld [vmem:[%s237 + $0x20] sm:$0xff]
      %v268 = vld [vmem:[%s237 + $0x28] sm:$0xff]
      %v269 = vld [vmem:[%s237 + $0x30] sm:$0xff]
      %v270 = vld [vmem:[%s237 + $0x38] sm:$0xff]
      %v271 = vld [vmem:[%s243] sm:$0xff]
      %v272 = vld [vmem:[%s243 + $0x8] sm:$0xff]
      %v273 = vld [vmem:[%s243 + $0x10] sm:$0xff]
      %v274 = vld [vmem:[%s243 + $0x18] sm:$0xff]
      %276 = vset.pattern.permute.xlu0 0
      %277 = vperm.xlu0 %276, %v271
      %v278 = vpop.permute.xlu0 %277
      %281 = vset.pattern.permute.xlu0 0
      %282 = vperm.xlu0 %281, %v272
      %v283 = vpop.permute.xlu0 %282
      %286 = vset.pattern.permute.xlu0 0
      %287 = vperm.xlu0 %286, %v273
      %v288 = vpop.permute.xlu0 %287
      %291 = vset.pattern.permute.xlu0 0
      %292 = vperm.xlu0 %291, %v274
      %v293 = vpop.permute.xlu0 %292
      %v295 = vmul.f32 %v263, %v278
      %v296 = vmul.f32 %v264, %v278
      %v297 = vmul.f32 %v265, %v283
      %v298 = vmul.f32 %v266, %v283
      %v299 = vmul.f32 %v267, %v288
      %v300 = vmul.f32 %v268, %v288
      %v301 = vmul.f32 %v269, %v293
      %v302 = vmul.f32 %v270, %v293
      %v303 = vld [vmem:[%s251] sm:$0x3]
      %v305 = vlaneseq
      %v306 = vshrl.u32 %v305, 7
      %v307 = vsub.s32 0, %v306
      %v308 = vrot.slane %v303, %v307
      %v309 = vlaneseq
      %v310 = vshrl.u32 %v309, 7
      %v311 = vsub.s32 1, %v310
      %v312 = vrot.slane %v303, %v311
      %v315 = vmul.f32 %v295, %v308
      %v316 = vmul.f32 %v296, %v312
      %v317 = vmul.f32 %v297, %v308
      %v318 = vmul.f32 %v298, %v312
      %v319 = vmul.f32 %v299, %v308
      %v320 = vmul.f32 %v300, %v312
      %v321 = vmul.f32 %v301, %v308
      %v322 = vmul.f32 %v302, %v312
      %323 = vst [vmem:[%s261] sm:$0xff] %v315
      %324 = vst [vmem:[%s261 + $0x8] sm:$0xff] %v316
      %325 = vst [vmem:[%s261 + $0x10] sm:$0xff] %v317
      %326 = vst [vmem:[%s261 + $0x18] sm:$0xff] %v318
      %327 = vst [vmem:[%s261 + $0x20] sm:$0xff] %v319
      %328 = vst [vmem:[%s261 + $0x28] sm:$0xff] %v320
      %329 = vst [vmem:[%s261 + $0x30] sm:$0xff] %v321
      %330 = vst [vmem:[%s261 + $0x38] sm:$0xff] %v322
      %s331 = smul.u32 2, %s19
      %p332 = scmp.lt.s32.totalorder %s18, 1
      %s333 = scalar_select %p332, %s18, 1
      %p334 = scmp.lt.s32.totalorder %s331, 1
      %s335 = scalar_select %p334, %s331, 1
      %s336 = smul.addr %s333, 8
      %s337 = sadd.s32 %s335, %s336
      %s338 = smul.addr %s337, 8
      %s339 = scalar_lea.vmem %s3, %s338
      // Predicated region
      $region33: #{cbam_forward.9} parent=31 // pred_check
        %p340 = pneg %p128
      $region34: #{cbam_forward.9} parent=31 // pred_check_branch
        %342 = sbr.rel (%p340) target = $region36
      $region35: #{cbam_forward.9} parent=31 // pred_region
        %s343 = smul.u32 2, %s19
      $region36: #{cbam_forward.9} parent=31 // pred_fallthru
        _
    $region32: #{cbam_forward.9} parent=5 // pred_fallthru
      _
    %p344 = scmp.le.s32.totalorder 2, %s9
    // Predicated region
    $region37: #{cbam_forward.9} parent=5 // pred_check
      %p345 = pneg %p344
    $region38: #{cbam_forward.9} parent=5 // pred_check_branch
      %347 = sbr.rel (%p345) target = $region40
    $region39: #{cbam_forward.9} parent=5 // pred_region
      %s348 = ssub.s32 %s9, 2
      // Predicated region
      $region41: #{cbam_forward.9} parent=39 // pred_check
        %p349 = pneg %p134
      $region42: #{cbam_forward.9} parent=39 // pred_check_branch
        %351 = sbr.rel (%p349) target = $region44
      $region43: #{cbam_forward.9} parent=39 // pred_region
        %s352 = smul.u32 2, %s21
        %p353 = scmp.lt.s32.totalorder %s20, 1
        %s354 = scalar_select %p353, %s20, 1
        %p355 = scmp.lt.s32.totalorder %s352, 1
        %s356 = scalar_select %p355, %s352, 1
        %s357 = smul.addr %s354, 8
        %s358 = sadd.s32 %s356, %s357
        %s359 = smul.addr %s358, 8
        %s360 = scalar_lea.vmem %s3, %s359
      $region44: #{cbam_forward.9} parent=39 // pred_fallthru
        _
    $region40: #{cbam_forward.9} parent=5 // pred_fallthru
      _
  $region6: #{cbam_forward.9} parent=0 // loop_footer
    %s13 = sadd.s32 1, %s9
  $region7: #{cbam_forward.9} parent=0 // loop_footer_branch
    %8 = sbr.rel target = $region3
  $region8: #{cbam_forward.9} parent=0 // loop_exit
    _

// kernel: cbam_forward.8
$region0: #{cbam_forward.8}
  #allocation0 [shape = 'u32[]', space=smem, size = 0x4, offset = 0x4, fixed_abs, tag = 'smem constant byte address 0x4 - core index']
  #allocation1 [shape = 'u32[144,128]{1,0:T(1,128)}', space=vmem, size = 0x12000, scoped, tag = 'internal scratch']
  %s0 = inlined_call_operand.vmem [shape: f32[2,2,22,22], index: 0, kind: input, shape index: {}]
  %s1 = inlined_call_operand.vmem [shape: f32[98], index: 1, kind: input, shape index: {}]
  %s2 = inlined_call_operand.vmem [shape: f32[2,16,16], index: 2, kind: output, shape index: {}]
  %s3 = sld [smem:[#allocation0]]
  $region45: #{cbam_forward.8} parent=0
    _
  %s5 = ssub.s32 1, %s3
  %s6 = scalar_select 0, %s5, %s3
  $region1: #{cbam_forward.8} parent=0
    #allocation2 [shape = 'u8[512]{0}', space=smem, size = 0x200, scoped, tag = 'input window, operand 1, single buffered']
    #allocation3 [shape = 's32[2]{0}', space=sflag, size = 0x8, scoped, tag = 'scoped memory for cbam_forward.8']
    %7 = vsyncpa [#allocation3], 0
    loop: start=0, step=1, limit=4
    $region2: #{cbam_forward.8} parent=1 // loop_pre_header
      _
    $region3: #{cbam_forward.8} parent=1 // loop_header
      %s9 = sphi 0, %s13
      %p10 = scmp.ge.s32.totalorder %s9, 4
      %s19 = sphi 0, %s21
      %s22 = sphi 0, %s19
      %s23 = sphi 0, %s22
      %s39 = sphi 0, %s23
      %s43 = sphi 0, %s43
      %s45 = sphi 0, %s43
      %s46 = sphi 0, %s45
      %s60 = sphi 0, %s46
      %s66 = sphi 0, %s68
      %s69 = sphi 0, %s66
      %s70 = sphi 0, %s69
      %s86 = sphi 0, %s70
    $region4: #{cbam_forward.8} parent=1 // loop_header_branch
      %12 = sbr.rel (%p10) target = $region8
    $region5: #{cbam_forward.8} parent=1 // loop_body
      %s14 = ssub.s32 %s9, 1
      %s15 = ssub.s32 %s9, 2
      %s16 = sadd.s32 %s9, 1
      %s17 = ssub.s32 %s9, %s16
      %p18 = scmp.eq.s32.totalorder %s17, 0
      %s20 = sadd.s32 %s19, 1
      %s21 = scalar_select %p18, %s19, %s20
      %p24 = pneg %p18
      %p25 = scmp.eq.s32.totalorder %s9, 1
      %p26 = por %p24, %p25
      %p27 = scmp.ne.s32.totalorder %s19, %s22
      %p28 = scmp.eq.s32.totalorder %s9, 0
      %p29 = por %p27, %p28
      %p30 = scmp.ne.s32.totalorder %s19, %s22
      %p31 = scmp.eq.s32.totalorder %s14, 1
      %p32 = por %p30, %p31
      %p33 = scmp.ne.s32.totalorder %s22, %s23
      %p34 = scmp.eq.s32.totalorder %s14, 0
      %p35 = por %p33, %p34
      %p36 = scmp.ne.s32.totalorder %s22, %s23
      %p37 = scmp.eq.s32.totalorder %s15, 1
      %p38 = por %p36, %p37
      %p40 = scmp.ne.s32.totalorder %s23, %s39
      %p41 = scmp.eq.s32.totalorder %s15, 0
      %p42 = por %p40, %p41
      %s44 = sadd.s32 %s43, 1
      %p47 = scmp.eq.s32.totalorder %s9, 1
      %p48 = scmp.ne.s32.totalorder %s43, %s45
      %p49 = scmp.eq.s32.totalorder %s9, 0
      %p50 = por %p48, %p49
      %p51 = scmp.ne.s32.totalorder %s43, %s45
      %p52 = scmp.eq.s32.totalorder %s14, 1
      %p53 = por %p51, %p52
      %p54 = scmp.ne.s32.totalorder %s45, %s46
      %p55 = scmp.eq.s32.totalorder %s14, 0
      %p56 = por %p54, %p55
      %p57 = scmp.ne.s32.totalorder %s45, %s46
      %p58 = scmp.eq.s32.totalorder %s15, 1
      %p59 = por %p57, %p58
      %p61 = scmp.ne.s32.totalorder %s46, %s60
      %p62 = scmp.eq.s32.totalorder %s15, 0
      %p63 = por %p61, %p62
      %s64 = ssub.s32 %s9, %s16
      %p65 = scmp.eq.s32.totalorder %s64, 0
      %s67 = sadd.s32 %s66, 1
      %s68 = scalar_select %p65, %s66, %s67
      %p71 = pneg %p65
      %p72 = scmp.eq.s32.totalorder %s9, 1
      %p73 = por %p71, %p72
      %p74 = scmp.ne.s32.totalorder %s66, %s69
      %p75 = scmp.eq.s32.totalorder %s9, 0
      %p76 = por %p74, %p75
      %p77 = scmp.ne.s32.totalorder %s66, %s69
      %p78 = scmp.eq.s32.totalorder %s14, 1
      %p79 = por %p77, %p78
      %p80 = scmp.ne.s32.totalorder %s69, %s70
      %p81 = scmp.eq.s32.totalorder %s14, 0
      %p82 = por %p80, %p81
      %p83 = scmp.ne.s32.totalorder %s69, %s70
      %p84 = scmp.eq.s32.totalorder %s15, 1
      %p85 = por %p83, %p84
      %p87 = scmp.ne.s32.totalorder %s70, %s86
      %p88 = scmp.eq.s32.totalorder %s15, 0
      %p89 = por %p87, %p88
      %p90 = scmp.le.s32.totalorder 1, %s9
      %p91 = scmp.lt.s32.totalorder %s9, 3
      %p92 = pnand %p90, %p91
      %p93 = pneg %p92
      // Predicated region
      $region9: #{cbam_forward.8} parent=5 // pred_check
        _
      $region10: #{cbam_forward.8} parent=5 // pred_check_branch
        %95 = sbr.rel (%p92) target = $region12
      $region11: #{cbam_forward.8} parent=5 // pred_region
        %s96 = ssub.s32 %s9, 1
        // Predicated region
        $region13: #{cbam_forward.8} parent=11 // pred_check
          %p97 = pneg %p56
        $region14: #{cbam_forward.8} parent=11 // pred_check_branch
          %99 = sbr.rel (%p97) target = $region16
        $region15: #{cbam_forward.8} parent=11 // pred_region
          %s101 = ssub.s32 16, 16
          %102 = vsyncadd [#allocation3], %s101
          %s104 = sshll.u32 %s1, 4
          %s105 = int_to_ptr.vmem [resolvable:$true] %s104
          %107 = dma.vmem_to_smem %s105, 16, [#allocation2], [#allocation3]
        $region16: #{cbam_forward.8} parent=11 // pred_fallthru
          _
      $region12: #{cbam_forward.8} parent=5 // pred_fallthru
        _
      %p108 = scmp.lt.s32.totalorder %s9, 2
      // Predicated region
      $region17: #{cbam_forward.8} parent=5 // pred_check
        %p109 = pneg %p108
      $region18: #{cbam_forward.8} parent=5 // pred_check_branch
        %111 = sbr.rel (%p109) target = $region20
      $region19: #{cbam_forward.8} parent=5 // pred_region
        // Predicated region
        $region21: #{cbam_forward.8} parent=19 // pred_check
          %p112 = pneg %p29
        $region22: #{cbam_forward.8} parent=19 // pred_check_branch
          %114 = sbr.rel (%p112) target = $region24
        $region23: #{cbam_forward.8} parent=19 // pred_region
          %p115 = scmp.lt.s32.totalorder %s9, 1
          %s116 = scalar_select %p115, %s9, 1
          %s117 = smul.addr %s116, 6
          %s118 = smul.addr %s117, 8
          %s119 = scalar_lea.vmem %s0, %s118
        $region24: #{cbam_forward.8} parent=19 // pred_fallthru
          _
      $region20: #{cbam_forward.8} parent=5 // pred_fallthru
        _
      %p120 = scmp.le.s32.totalorder 1, %s9
      %p121 = scmp.lt.s32.totalorder %s9, 3
      %p122 = pnand %p120, %p121
      %p123 = pneg %p122
      // Predicated region
      $region25: #{cbam_forward.8} parent=5 // pred_check
        _
      $region26: #{cbam_forward.8} parent=5 // pred_check_branch
        %125 = sbr.rel (%p122) target = $region28
      $region27: #{cbam_forward.8} parent=5 // pred_region
        %s126 = ssub.s32 %s9, 1
        // Predicated region
        $region29: #{cbam_forward.8} parent=27 // pred_check
          %p127 = pneg %p56
        $region30: #{cbam_forward.8} parent=27 // pred_check_branch
          %129 = sbr.rel (%p127) target = $region32
        $region31: #{cbam_forward.8} parent=27 // pred_region
          %130 = dma.done [#allocation3], 16
        $region32: #{cbam_forward.8} parent=27 // pred_fallthru
          _
        %131 = sfence
        %p132 = scmp.lt.s32.totalorder %s14, 1
        %s133 = scalar_select %p132, %s14, 1
        %s134 = smul.addr %s133, 6
        %s135 = smul.addr %s134, 8
        %s136 = scalar_lea.vmem %s0, %s135
        %p137 = pneg %p35
        %p138 = pneg %p32
        %p139 = pneg %p56
        %p140 = pneg %p53
        %p141 = pneg %p82
        %p142 = pneg %p79
        %p143 = scmp.lt.s32.totalorder %s14, 1
        %s144 = scalar_select %p143, %s14, 1
        %s145 = smul.addr %s144, 2
        %s146 = smul.addr %s145, 8
        %s147 = scalar_lea.vmem %s2, %s146
        %p148 = scmp.lt.s32.totalorder %s14, 1
        %s149 = scalar_select %p148, %s14, 1
        %s150 = smul.addr %s149, 6
        %s151 = smul.addr %s150, 8
        %s152 = scalar_lea.vmem %s0, %s151
        %p153 = scmp.lt.s32.totalorder %s14, 1
        %s154 = scalar_select %p153, %s14, 1
        %s155 = smul.addr %s154, 2
        %s156 = smul.addr %s155, 8
        %s157 = scalar_lea.vmem %s2, %s156
        %v158 = vld [vmem:[%s152] sm:$0xff]
        %v159 = vld [vmem:[%s152 + $0x8] sm:$0xff]
        %v160 = vld [vmem:[%s152 + $0x10] sm:$0x3f]
        %v161 = vld [vmem:[%s152 + $0x18] sm:$0xff]
        %v162 = vld [vmem:[%s152 + $0x20] sm:$0xff]
        %v163 = vld [vmem:[%s152 + $0x28] sm:$0x3f]
        %s164 = sld [smem:[#allocation2]]
        %v165 = vstv %s164
        %v166 = vmul.f32 %v158, %v165
        %v167 = vmul.f32 %v159, %v165
        %v168 = vadd.f32 %v166, 0.0
        %v169 = vadd.f32 %v167, 0.0
        %s170 = sld [smem:[#allocation2 + $0x1]]
        %v171 = vstv %s170
        %v172 = vmul.f32 %v158, %v171
        %v173 = vmul.f32 %v159, %v171
        %176 = vrot.lane.b32.xlu0 %v172, 127
        %v177 = vpop.permute.xlu0 %176
        %178 = vrot.lane.b32.xlu0 %v173, 127
        %v179 = vpop.permute.xlu0 %178
        %v182 = vadd.f32 %v168, %v177
        %v183 = vadd.f32 %v169, %v179
        %s184 = sld [smem:[#allocation2 + $0x2]]
        %v185 = vstv %s184
        %v186 = vmul.f32 %v158, %v185
        %v187 = vmul.f32 %v159, %v185
        %190 = vrot.lane.b32.xlu0 %v186, 126
        %v191 = vpop.permute.xlu0 %190
        %192 = vrot.lane.b32.xlu0 %v187, 126
        %v193 = vpop.permute.xlu0 %192
        %v196 = vadd.f32 %v182, %v191
        %v197 = vadd.f32 %v183, %v193
        %s198 = sld [smem:[#allocation2 + $0x3]]
        %v199 = vstv %s198
        %v200 = vmul.f32 %v158, %v199
        %v201 = vmul.f32 %v159, %v199
        %204 = vrot.lane.b32.xlu0 %v200, 125
        %v205 = vpop.permute.xlu0 %204
        %206 = vrot.lane.b32.xlu0 %v201, 125
        %v207 = vpop.permute.xlu0 %206
        %v210 = vadd.f32 %v196, %v205
        %v211 = vadd.f32 %v197, %v207
        %s212 = sld [smem:[#allocation2 + $0x4]]
        %v213 = vstv %s212
        %v214 = vmul.f32 %v158, %v213
        %v215 = vmul.f32 %v159, %v213
        %218 = vrot.lane.b32.xlu0 %v214, 124
        %v219 = vpop.permute.xlu0 %218
        %220 = vrot.lane.b32.xlu0 %v215, 124
        %v221 = vpop.permute.xlu0 %220
        %v224 = vadd.f32 %v210, %v219
        %v225 = vadd.f32 %v211, %v221
        %s226 = sld [smem:[#allocation2 + $0x5]]
        %v227 = vstv %s226
        %v228 = vmul.f32 %v158, %v227
        %v229 = vmul.f32 %v159, %v227
        %232 = vrot.lane.b32.xlu0 %v228, 123
        %v233 = vpop.permute.xlu0 %232
        %234 = vrot.lane.b32.xlu0 %v229, 123
        %v235 = vpop.permute.xlu0 %234
        %v238 = vadd.f32 %v224, %v233
        %v239 = vadd.f32 %v225, %v235
        %s240 = sld [smem:[#allocation2 + $0x6]]
        %v241 = vstv %s240
        %v242 = vmul.f32 %v158, %v241
        %v243 = vmul.f32 %v159, %v241
        %246 = vrot.lane.b32.xlu0 %v242, 122
        %v247 = vpop.permute.xlu0 %246
        %248 = vrot.lane.b32.xlu0 %v243, 122
        %v249 = vpop.permute.xlu0 %248
        %v252 = vadd.f32 %v238, %v247
        %v253 = vadd.f32 %v239, %v249
        %s254 = sld [smem:[#allocation2 + $0x7]]
        %v255 = vstv %s254
        %v256 = vmul.f32 %v158, %v255
        %v257 = vmul.f32 %v159, %v255
        %v258 = vmul.f32 %v160, %v255
        %vm262 = vcmask 1046528
        %v263 = vrot.slane %v256, 1
        %v264 = vrot.slane %v257, 1
        %v265 = vsel %vm262, %v263, %v264
        %v266 = vrot.slane %v258, 1
        %v267 = vsel %vm262, %v264, %v266
        %v270 = vadd.f32 %v252, %v265
        %v271 = vadd.f32 %v253, %v267
        %s272 = sld [smem:[#allocation2 + $0x8]]
        %v273 = vstv %s272
        %v274 = vmul.f32 %v158, %v273
        %v275 = vmul.f32 %v159, %v273
        %v276 = vmul.f32 %v160, %v273
        %v280 = vrot.slane %v274, 1
        %v281 = vrot.slane %v275, 1
        %v282 = vsel %vm262, %v280, %v281
        %v283 = vrot.slane %v276, 1
        %v284 = vsel %vm262, %v281, %v283
        %285 = vrot.lane.b32.xlu0 %v282, 127
        %v286 = vpop.permute.xlu0 %285
        %287 = vrot.lane.b32.xlu0 %v284, 127
        %v288 = vpop.permute.xlu0 %287
        %v291 = vadd.f32 %v270, %v286
        %v292 = vadd.f32 %v271, %v288
        %s293 = sld [smem:[#allocation2 + $0x9]]
        %v294 = vstv %s293
        %v295 = vmul.f32 %v158, %v294
        %v296 = vmul.f32 %v159, %v294
        %v297 = vmul.f32 %v160, %v294
        %v301 = vrot.slane %v295, 1
        %v302 = vrot.slane %v296, 1
        %v303 = vsel %vm262, %v301, %v302
        %v304 = vrot.slane %v297, 1
        %v305 = vsel %vm262, %v302, %v304
        %306 = vrot.lane.b32.xlu0 %v303, 126
        %v307 = vpop.permute.xlu0 %306
        %308 = vrot.lane.b32.xlu0 %v305, 126
        %v309 = vpop.permute.xlu0 %308
        %v312 = vadd.f32 %v291, %v307
        %v313 = vadd.f32 %v292, %v309
        %s314 = sld [smem:[#allocation2 + $0xa]]
        %v315 = vstv %s314
        %v316 = vmul.f32 %v158, %v315
        %v317 = vmul.f32 %v159, %v315
        %v318 = vmul.f32 %v160, %v315
        %v322 = vrot.slane %v316, 1
        %v323 = vrot.slane %v317, 1
        %v324 = vsel %vm262, %v322, %v323
        %v325 = vrot.slane %v318, 1
        %v326 = vsel %vm262, %v323, %v325
        %327 = vrot.lane.b32.xlu0 %v324, 125
        %v328 = vpop.permute.xlu0 %327
        %329 = vrot.lane.b32.xlu0 %v326, 125
        %v330 = vpop.permute.xlu0 %329
        %v333 = vadd.f32 %v312, %v328
        %v334 = vadd.f32 %v313, %v330
        %s335 = sld [smem:[#allocation2 + $0xb]]
        %v336 = vstv %s335
        %v337 = vmul.f32 %v158, %v336
        %v338 = vmul.f32 %v159, %v336
        %v339 = vmul.f32 %v160, %v336
        %v343 = vrot.slane %v337, 1
        %v344 = vrot.slane %v338, 1
        %v345 = vsel %vm262, %v343, %v344
        %v346 = vrot.slane %v339, 1
        %v347 = vsel %vm262, %v344, %v346
        %348 = vrot.lane.b32.xlu0 %v345, 124
        %v349 = vpop.permute.xlu0 %348
        %350 = vrot.lane.b32.xlu0 %v347, 124
        %v351 = vpop.permute.xlu0 %350
        %v354 = vadd.f32 %v333, %v349
        %v355 = vadd.f32 %v334, %v351
        %s356 = sld [smem:[#allocation2 + $0xc]]
        %v357 = vstv %s356
        %v358 = vmul.f32 %v158, %v357
        %v359 = vmul.f32 %v159, %v357
        %v360 = vmul.f32 %v160, %v357
        %v364 = vrot.slane %v358, 1
        %v365 = vrot.slane %v359, 1
        %v366 = vsel %vm262, %v364, %v365
        %v367 = vrot.slane %v360, 1
        %v368 = vsel %vm262, %v365, %v367
        %369 = vrot.lane.b32.xlu0 %v366, 123
        %v370 = vpop.permute.xlu0 %369
        %371 = vrot.lane.b32.xlu0 %v368, 123
        %v372 = vpop.permute.xlu0 %371
        %v375 = vadd.f32 %v354, %v370
        %v376 = vadd.f32 %v355, %v372
        %s377 = sld [smem:[#allocation2 + $0xd]]
        %v378 = vstv %s377
        %v379 = vmul.f32 %v158, %v378
        %v380 = vmul.f32 %v159, %v378
        %v381 = vmul.f32 %v160, %v378
        %v385 = vrot.slane %v379, 1
        %v386 = vrot.slane %v380, 1
        %v387 = vsel %vm262, %v385, %v386
        %v388 = vrot.slane %v381, 1
        %v389 = vsel %vm262, %v386, %v388
        %390 = vrot.lane.b32.xlu0 %v387, 122
        %v391 = vpop.permute.xlu0 %390
        %392 = vrot.lane.b32.xlu0 %v389, 122
        %v393 = vpop.permute.xlu0 %392
        %v396 = vadd.f32 %v375, %v391
        %v397 = vadd.f32 %v376, %v393
        %s398 = sld [smem:[#allocation2 + $0xe]]
        %v399 = vstv %s398
        %v400 = vmul.f32 %v158, %v399
        %v401 = vmul.f32 %v159, %v399
        %v402 = vmul.f32 %v160, %v399
        %vm406 = vcmask 1045504
        %v407 = vrot.slane %v400, 2
        %v408 = vrot.slane %v401, 2
        %v409 = vsel %vm406, %v407, %v408
        %v410 = vrot.slane %v402, 2
        %v411 = vsel %vm406, %v408, %v410
        %v414 = vadd.f32 %v396, %v409
        %v415 = vadd.f32 %v397, %v411
        %s416 = sld [smem:[#allocation2 + $0xf]]
        %v417 = vstv %s416
        %v418 = vmul.f32 %v158, %v417
        %v419 = vmul.f32 %v159, %v417
        %v420 = vmul.f32 %v160, %v417
        %v424 = vrot.slane %v418, 2
        %v425 = vrot.slane %v419, 2
        %v426 = vsel %vm406, %v424, %v425
        %v427 = vrot.slane %v420, 2
        %v428 = vsel %vm406, %v425, %v427
        %429 = vrot.lane.b32.xlu0 %v426, 127
        %v430 = vpop.permute.xlu0 %429
        %431 = vrot.lane.b32.xlu0 %v428, 127
        %v432 = vpop.permute.xlu0 %431
        %v435 = vadd.f32 %v414, %v430
        %v436 = vadd.f32 %v415, %v432
        %s437 = sld [smem:[#allocation2 + $0x10]]
        %v438 = vstv %s437
        %v439 = vmul.f32 %v158, %v438
        %v440 = vmul.f32 %v159, %v438
        %v441 = vmul.f32 %v160, %v438
        %v445 = vrot.slane %v439, 2
        %v446 = vrot.slane %v440, 2
        %v447 = vsel %vm406, %v445, %v446
        %v448 = vrot.slane %v441, 2
        %v449 = vsel %vm406, %v446, %v448
        %450 = vrot.lane.b32.xlu0 %v447, 126
        %v451 = vpop.permute.xlu0 %450
        %452 = vrot.lane.b32.xlu0 %v449, 126
        %v453 = vpop.permute.xlu0 %452
        %v456 = vadd.f32 %v435, %v451
        %v457 = vadd.f32 %v436, %v453
        %s458 = sld [smem:[#allocation2 + $0x11]]
        %v459 = vstv %s458
        %v460 = vmul.f32 %v158, %v459
        %v461 = vmul.f32 %v159, %v459
        %v462 = vmul.f32 %v160, %v459
        %v466 = vrot.slane %v460, 2
        %v467 = vrot.slane %v461, 2
        %v468 = vsel %vm406, %v466, %v467
        %v469 = vrot.slane %v462, 2
        %v470 = vsel %vm406, %v467, %v469
        %471 = vrot.lane.b32.xlu0 %v468, 125
        %v472 = vpop.permute.xlu0 %471
        %473 = vrot.lane.b32.xlu0 %v470, 125
        %v474 = vpop.permute.xlu0 %473
        %v477 = vadd.f32 %v456, %v472
        %v478 = vadd.f32 %v457, %v474
        %s479 = sld [smem:[#allocation2 + $0x12]]
        %v480 = vstv %s479
        %v481 = vmul.f32 %v158, %v480
        %v482 = vmul.f32 %v159, %v480
        %v483 = vmul.f32 %v160, %v480
        %v487 = vrot.slane %v481, 2
        %v488 = vrot.slane %v482, 2
        %v489 = vsel %vm406, %v487, %v488
        %v490 = vrot.slane %v483, 2
        %v491 = vsel %vm406, %v488, %v490
        %492 = vrot.lane.b32.xlu0 %v489, 124
        %v493 = vpop.permute.xlu0 %492
        %494 = vrot.lane.b32.xlu0 %v491, 124
        %v495 = vpop.permute.xlu0 %494
        %v498 = vadd.f32 %v477, %v493
        %v499 = vadd.f32 %v478, %v495
        %s500 = sld [smem:[#allocation2 + $0x13]]
        %v501 = vstv %s500
        %v502 = vmul.f32 %v158, %v501
        %v503 = vmul.f32 %v159, %v501
        %v504 = vmul.f32 %v160, %v501
        %v508 = vrot.slane %v502, 2
        %v509 = vrot.slane %v503, 2
        %v510 = vsel %vm406, %v508, %v509
        %v511 = vrot.slane %v504, 2
        %v512 = vsel %vm406, %v509, %v511
        %513 = vrot.lane.b32.xlu0 %v510, 123
        %v514 = vpop.permute.xlu0 %513
        %515 = vrot.lane.b32.xlu0 %v512, 123
        %v516 = vpop.permute.xlu0 %515
        %v519 = vadd.f32 %v498, %v514
        %v520 = vadd.f32 %v499, %v516
        %s521 = sld [smem:[#allocation2 + $0x14]]
        %v522 = vstv %s521
        %v523 = vmul.f32 %v158, %v522
        %v524 = vmul.f32 %v159, %v522
        %v525 = vmul.f32 %v160, %v522
        %v529 = vrot.slane %v523, 2
        %v530 = vrot.slane %v524, 2
        %v531 = vsel %vm406, %v529, %v530
        %v532 = vrot.slane %v525, 2
        %v533 = vsel %vm406, %v530, %v532
        %534 = vrot.lane.b32.xlu0 %v531, 122
        %v535 = vpop.permute.xlu0 %534
        %536 = vrot.lane.b32.xlu0 %v533, 122
        %v537 = vpop.permute.xlu0 %536
        %v540 = vadd.f32 %v519, %v535
        %v541 = vadd.f32 %v520, %v537
        %s542 = sld [smem:[#allocation2 + $0x15]]
        %v543 = vstv %s542
        %v544 = vmul.f32 %v158, %v543
        %v545 = vmul.f32 %v159, %v543
        %v546 = vmul.f32 %v160, %v543
        %vm550 = vcmask 1044480
        %v551 = vrot.slane %v544, 3
        %v552 = vrot.slane %v545, 3
        %v553 = vsel %vm550, %v551, %v552
        %v554 = vrot.slane %v546, 3
        %v555 = vsel %vm550, %v552, %v554
        %v558 = vadd.f32 %v540, %v553
        %v559 = vadd.f32 %v541, %v555
        %s560 = sld [smem:[#allocation2 + $0x16]]
        %v561 = vstv %s560
        %v562 = vmul.f32 %v158, %v561
        %v563 = vmul.f32 %v159, %v561
        %v564 = vmul.f32 %v160, %v561
        %v568 = vrot.slane %v562, 3
        %v569 = vrot.slane %v563, 3
        %v570 = vsel %vm550, %v568, %v569
        %v571 = vrot.slane %v564, 3
        %v572 = vsel %vm550, %v569, %v571
        %573 = vrot.lane.b32.xlu0 %v570, 127
        %v574 = vpop.permute.xlu0 %573
        %575 = vrot.lane.b32.xlu0 %v572, 127
        %v576 = vpop.permute.xlu0 %575
        %v579 = vadd.f32 %v558, %v574
        %v580 = vadd.f32 %v559, %v576
        %s581 = sld [smem:[#allocation2 + $0x17]]
        %v582 = vstv %s581
        %v583 = vmul.f32 %v158, %v582
        %v584 = vmul.f32 %v159, %v582
        %v585 = vmul.f32 %v160, %v582
        %v589 = vrot.slane %v583, 3
        %v590 = vrot.slane %v584, 3
        %v591 = vsel %vm550, %v589, %v590
        %v592 = vrot.slane %v585, 3
        %v593 = vsel %vm550, %v590, %v592
        %594 = vrot.lane.b32.xlu0 %v591, 126
        %v595 = vpop.permute.xlu0 %594
        %596 = vrot.lane.b32.xlu0 %v593, 126
        %v597 = vpop.permute.xlu0 %596
        %v600 = vadd.f32 %v579, %v595
        %v601 = vadd.f32 %v580, %v597
        %s602 = sld [smem:[#allocation2 + $0x18]]
        %v603 = vstv %s602
        %v604 = vmul.f32 %v158, %v603
        %v605 = vmul.f32 %v159, %v603
        %v606 = vmul.f32 %v160, %v603
        %v610 = vrot.slane %v604, 3
        %v611 = vrot.slane %v605, 3
        %v612 = vsel %vm550, %v610, %v611
        %v613 = vrot.slane %v606, 3
        %v614 = vsel %vm550, %v611, %v613
        %615 = vrot.lane.b32.xlu0 %v612, 125
        %v616 = vpop.permute.xlu0 %615
        %617 = vrot.lane.b32.xlu0 %v614, 125
        %v618 = vpop.permute.xlu0 %617
        %v621 = vadd.f32 %v600, %v616
        %v622 = vadd.f32 %v601, %v618
        %s623 = sld [smem:[#allocation2 + $0x19]]
        %v624 = vstv %s623
        %v625 = vmul.f32 %v158, %v624
        %v626 = vmul.f32 %v159, %v624
        %v627 = vmul.f32 %v160, %v624
        %v631 = vrot.slane %v625, 3
        %v632 = vrot.slane %v626, 3
        %v633 = vsel %vm550, %v631, %v632
        %v634 = vrot.slane %v627, 3
        %v635 = vsel %vm550, %v632, %v634
        %636 = vrot.lane.b32.xlu0 %v633, 124
        %v637 = vpop.permute.xlu0 %636
        %638 = vrot.lane.b32.xlu0 %v635, 124
        %v639 = vpop.permute.xlu0 %638
        %v642 = vadd.f32 %v621, %v637
        %v643 = vadd.f32 %v622, %v639
        %s644 = sld [smem:[#allocation2 + $0x1a]]
        %v645 = vstv %s644
        %v646 = vmul.f32 %v158, %v645
        %v647 = vmul.f32 %v159, %v645
        %v648 = vmul.f32 %v160, %v645
        %v652 = vrot.slane %v646, 3
        %v653 = vrot.slane %v647, 3
        %v654 = vsel %vm550, %v652, %v653
        %v655 = vrot.slane %v648, 3
        %v656 = vsel %vm550, %v653, %v655
        %657 = vrot.lane.b32.xlu0 %v654, 123
        %v658 = vpop.permute.xlu0 %657
        %659 = vrot.lane.b32.xlu0 %v656, 123
        %v660 = vpop.permute.xlu0 %659
        %v663 = vadd.f32 %v642, %v658
        %v664 = vadd.f32 %v643, %v660
        %s665 = sld [smem:[#allocation2 + $0x1b]]
        %v666 = vstv %s665
        %v667 = vmul.f32 %v158, %v666
        %v668 = vmul.f32 %v159, %v666
        %v669 = vmul.f32 %v160, %v666
        %v673 = vrot.slane %v667, 3
        %v674 = vrot.slane %v668, 3
        %v675 = vsel %vm550, %v673, %v674
        %v676 = vrot.slane %v669, 3
        %v677 = vsel %vm550, %v674, %v676
        %678 = vrot.lane.b32.xlu0 %v675, 122
        %v679 = vpop.permute.xlu0 %678
        %680 = vrot.lane.b32.xlu0 %v677, 122
        %v681 = vpop.permute.xlu0 %680
        %v684 = vadd.f32 %v663, %v679
        %v685 = vadd.f32 %v664, %v681
        %s686 = sld [smem:[#allocation2 + $0x1c]]
        %v687 = vstv %s686
        %v688 = vmul.f32 %v158, %v687
        %v689 = vmul.f32 %v159, %v687
        %v690 = vmul.f32 %v160, %v687
        %vm694 = vcmask 1043456
        %v695 = vrot.slane %v688, 4
        %v696 = vrot.slane %v689, 4
        %v697 = vsel %vm694, %v695, %v696
        %v698 = vrot.slane %v690, 4
        %v699 = vsel %vm694, %v696, %v698
        %v702 = vadd.f32 %v684, %v697
        %v703 = vadd.f32 %v685, %v699
        %s704 = sld [smem:[#allocation2 + $0x1d]]
        %v705 = vstv %s704
        %v706 = vmul.f32 %v158, %v705
        %v707 = vmul.f32 %v159, %v705
        %v708 = vmul.f32 %v160, %v705
        %v712 = vrot.slane %v706, 4
        %v713 = vrot.slane %v707, 4
        %v714 = vsel %vm694, %v712, %v713
        %v715 = vrot.slane %v708, 4
        %v716 = vsel %vm694, %v713, %v715
        %717 = vrot.lane.b32.xlu0 %v714, 127
        %v718 = vpop.permute.xlu0 %717
        %719 = vrot.lane.b32.xlu0 %v716, 127
        %v720 = vpop.permute.xlu0 %719
        %v723 = vadd.f32 %v702, %v718
        %v724 = vadd.f32 %v703, %v720
        %s725 = sld [smem:[#allocation2 + $0x1e]]
        %v726 = vstv %s725
        %v727 = vmul.f32 %v158, %v726
        %v728 = vmul.f32 %v159, %v726
        %v729 = vmul.f32 %v160, %v726
        %v733 = vrot.slane %v727, 4
        %v734 = vrot.slane %v728, 4
        %v735 = vsel %vm694, %v733, %v734
        %v736 = vrot.slane %v729, 4
        %v737 = vsel %vm694, %v734, %v736
        %738 = vrot.lane.b32.xlu0 %v735, 126
        %v739 = vpop.permute.xlu0 %738
        %740 = vrot.lane.b32.xlu0 %v737, 126
        %v741 = vpop.permute.xlu0 %740
        %v744 = vadd.f32 %v723, %v739
        %v745 = vadd.f32 %v724, %v741
        %s746 = sld [smem:[#allocation2 + $0x1f]]
        %v747 = vstv %s746
        %v748 = vmul.f32 %v158, %v747
        %v749 = vmul.f32 %v159, %v747
        %v750 = vmul.f32 %v160, %v747
        %v754 = vrot.slane %v748, 4
        %v755 = vrot.slane %v749, 4
        %v756 = vsel %vm694, %v754, %v755
        %v757 = vrot.slane %v750, 4
        %v758 = vsel %vm694, %v755, %v757
        %759 = vrot.lane.b32.xlu0 %v756, 125
        %v760 = vpop.permute.xlu0 %759
        %761 = vrot.lane.b32.xlu0 %v758, 125
        %v762 = vpop.permute.xlu0 %761
        %v765 = vadd.f32 %v744, %v760
        %v766 = vadd.f32 %v745, %v762
        %s767 = sld [smem:[#allocation2 + $0x20]]
        %v768 = vstv %s767
        %v769 = vmul.f32 %v158, %v768
        %v770 = vmul.f32 %v159, %v768
        %v771 = vmul.f32 %v160, %v768
        %v775 = vrot.slane %v769, 4
        %v776 = vrot.slane %v770, 4
        %v777 = vsel %vm694, %v775, %v776
        %v778 = vrot.slane %v771, 4
        %v779 = vsel %vm694, %v776, %v778
        %780 = vrot.lane.b32.xlu0 %v777, 124
        %v781 = vpop.permute.xlu0 %780
        %782 = vrot.lane.b32.xlu0 %v779, 124
        %v783 = vpop.permute.xlu0 %782
        %v786 = vadd.f32 %v765, %v781
        %v787 = vadd.f32 %v766, %v783
        %s788 = sld [smem:[#allocation2 + $0x21]]
        %v789 = vstv %s788
        %v790 = vmul.f32 %v158, %v789
        %v791 = vmul.f32 %v159, %v789
        %v792 = vmul.f32 %v160, %v789
        %v796 = vrot.slane %v790, 4
        %v797 = vrot.slane %v791, 4
        %v798 = vsel %vm694, %v796, %v797
        %v799 = vrot.slane %v792, 4
        %v800 = vsel %vm694, %v797, %v799
        %801 = vrot.lane.b32.xlu0 %v798, 123
        %v802 = vpop.permute.xlu0 %801
        %803 = vrot.lane.b32.xlu0 %v800, 123
        %v804 = vpop.permute.xlu0 %803
        %v807 = vadd.f32 %v786, %v802
        %v808 = vadd.f32 %v787, %v804
        %s809 = sld [smem:[#allocation2 + $0x22]]
        %v810 = vstv %s809
        %v811 = vmul.f32 %v158, %v810
        %v812 = vmul.f32 %v159, %v810
        %v813 = vmul.f32 %v160, %v810
        %v817 = vrot.slane %v811, 4
        %v818 = vrot.slane %v812, 4
        %v819 = vsel %vm694, %v817, %v818
        %v820 = vrot.slane %v813, 4
        %v821 = vsel %vm694, %v818, %v820
        %822 = vrot.lane.b32.xlu0 %v819, 122
        %v823 = vpop.permute.xlu0 %822
        %824 = vrot.lane.b32.xlu0 %v821, 122
        %v825 = vpop.permute.xlu0 %824
        %v828 = vadd.f32 %v807, %v823
        %v829 = vadd.f32 %v808, %v825
        %s830 = sld [smem:[#allocation2 + $0x23]]
        %v831 = vstv %s830
        %v832 = vmul.f32 %v158, %v831
        %v833 = vmul.f32 %v159, %v831
        %v834 = vmul.f32 %v160, %v831
        %vm838 = vcmask 1042432
        %v839 = vrot.slane %v832, 5
        %v840 = vrot.slane %v833, 5
        %v841 = vsel %vm838, %v839, %v840
        %v842 = vrot.slane %v834, 5
        %v843 = vsel %vm838, %v840, %v842
        %v846 = vadd.f32 %v828, %v841
        %v847 = vadd.f32 %v829, %v843
        %s848 = sld [smem:[#allocation2 + $0x24]]
        %v849 = vstv %s848
        %v850 = vmul.f32 %v158, %v849
        %v851 = vmul.f32 %v159, %v849
        %v852 = vmul.f32 %v160, %v849
        %v856 = vrot.slane %v850, 5
        %v857 = vrot.slane %v851, 5
        %v858 = vsel %vm838, %v856, %v857
        %v859 = vrot.slane %v852, 5
        %v860 = vsel %vm838, %v857, %v859
        %861 = vrot.lane.b32.xlu0 %v858, 127
        %v862 = vpop.permute.xlu0 %861
        %863 = vrot.lane.b32.xlu0 %v860, 127
        %v864 = vpop.permute.xlu0 %863
        %v867 = vadd.f32 %v846, %v862
        %v868 = vadd.f32 %v847, %v864
        %s869 = sld [smem:[#allocation2 + $0x25]]
        %v870 = vstv %s869
        %v871 = vmul.f32 %v158, %v870
        %v872 = vmul.f32 %v159, %v870
        %v873 = vmul.f32 %v160, %v870
        %v877 = vrot.slane %v871, 5
        %v878 = vrot.slane %v872, 5
        %v879 = vsel %vm838, %v877, %v878
        %v880 = vrot.slane %v873, 5
        %v881 = vsel %vm838, %v878, %v880
        %882 = vrot.lane.b32.xlu0 %v879, 126
        %v883 = vpop.permute.xlu0 %882
        %884 = vrot.lane.b32.xlu0 %v881, 126
        %v885 = vpop.permute.xlu0 %884
        %v888 = vadd.f32 %v867, %v883
        %v889 = vadd.f32 %v868, %v885
        %s890 = sld [smem:[#allocation2 + $0x26]]
        %v891 = vstv %s890
        %v892 = vmul.f32 %v158, %v891
        %v893 = vmul.f32 %v159, %v891
        %v894 = vmul.f32 %v160, %v891
        %v898 = vrot.slane %v892, 5
        %v899 = vrot.slane %v893, 5
        %v900 = vsel %vm838, %v898, %v899
        %v901 = vrot.slane %v894, 5
        %v902 = vsel %vm838, %v899, %v901
        %903 = vrot.lane.b32.xlu0 %v900, 125
        %v904 = vpop.permute.xlu0 %903
        %905 = vrot.lane.b32.xlu0 %v902, 125
        %v906 = vpop.permute.xlu0 %905
        %v909 = vadd.f32 %v888, %v904
        %v910 = vadd.f32 %v889, %v906
        %s911 = sld [smem:[#allocation2 + $0x27]]
        %v912 = vstv %s911
        %v913 = vmul.f32 %v158, %v912
        %v914 = vmul.f32 %v159, %v912
        %v915 = vmul.f32 %v160, %v912
        %v919 = vrot.slane %v913, 5
        %v920 = vrot.slane %v914, 5
        %v921 = vsel %vm838, %v919, %v920
        %v922 = vrot.slane %v915, 5
        %v923 = vsel %vm838, %v920, %v922
        %924 = vrot.lane.b32.xlu0 %v921, 124
        %v925 = vpop.permute.xlu0 %924
        %926 = vrot.lane.b32.xlu0 %v923, 124
        %v927 = vpop.permute.xlu0 %926
        %v930 = vadd.f32 %v909, %v925
        %v931 = vadd.f32 %v910, %v927
        %s932 = sld [smem:[#allocation2 + $0x28]]
        %v933 = vstv %s932
        %v934 = vmul.f32 %v158, %v933
        %v935 = vmul.f32 %v159, %v933
        %v936 = vmul.f32 %v160, %v933
        %v940 = vrot.slane %v934, 5
        %v941 = vrot.slane %v935, 5
        %v942 = vsel %vm838, %v940, %v941
        %v943 = vrot.slane %v936, 5
        %v944 = vsel %vm838, %v941, %v943
        %945 = vrot.lane.b32.xlu0 %v942, 123
        %v946 = vpop.permute.xlu0 %945
        %947 = vrot.lane.b32.xlu0 %v944, 123
        %v948 = vpop.permute.xlu0 %947
        %v951 = vadd.f32 %v930, %v946
        %v952 = vadd.f32 %v931, %v948
        %s953 = sld [smem:[#allocation2 + $0x29]]
        %v954 = vstv %s953
        %v955 = vmul.f32 %v158, %v954
        %v956 = vmul.f32 %v159, %v954
        %v957 = vmul.f32 %v160, %v954
        %v961 = vrot.slane %v955, 5
        %v962 = vrot.slane %v956, 5
        %v963 = vsel %vm838, %v961, %v962
        %v964 = vrot.slane %v957, 5
        %v965 = vsel %vm838, %v962, %v964
        %966 = vrot.lane.b32.xlu0 %v963, 122
        %v967 = vpop.permute.xlu0 %966
        %968 = vrot.lane.b32.xlu0 %v965, 122
        %v969 = vpop.permute.xlu0 %968
        %v972 = vadd.f32 %v951, %v967
        %v973 = vadd.f32 %v952, %v969
        %s974 = sld [smem:[#allocation2 + $0x2a]]
        %v975 = vstv %s974
        %v976 = vmul.f32 %v158, %v975
        %v977 = vmul.f32 %v159, %v975
        %v978 = vmul.f32 %v160, %v975
        %vm982 = vcmask 1041408
        %v983 = vrot.slane %v976, 6
        %v984 = vrot.slane %v977, 6
        %v985 = vsel %vm982, %v983, %v984
        %v986 = vrot.slane %v978, 6
        %v987 = vsel %vm982, %v984, %v986
        %v990 = vadd.f32 %v972, %v985
        %v991 = vadd.f32 %v973, %v987
        %s992 = sld [smem:[#allocation2 + $0x2b]]
        %v993 = vstv %s992
        %v994 = vmul.f32 %v158, %v993
        %v995 = vmul.f32 %v159, %v993
        %v996 = vmul.f32 %v160, %v993
        %v1000 = vrot.slane %v994, 6
        %v1001 = vrot.slane %v995, 6
        %v1002 = vsel %vm982, %v1000, %v1001
        %v1003 = vrot.slane %v996, 6
        %v1004 = vsel %vm982, %v1001, %v1003
        %1005 = vrot.lane.b32.xlu0 %v1002, 127
        %v1006 = vpop.permute.xlu0 %1005
        %1007 = vrot.lane.b32.xlu0 %v1004, 127
        %v1008 = vpop.permute.xlu0 %1007
        %v1011 = vadd.f32 %v990, %v1006
        %v1012 = vadd.f32 %v991, %v1008
        %s1013 = sld [smem:[#allocation2 + $0x2c]]
        %v1014 = vstv %s1013
        %v1015 = vmul.f32 %v158, %v1014
        %v1016 = vmul.f32 %v159, %v1014
        %v1017 = vmul.f32 %v160, %v1014
        %v1021 = vrot.slane %v1015, 6
        %v1022 = vrot.slane %v1016, 6
        %v1023 = vsel %vm982, %v1021, %v1022
        %v1024 = vrot.slane %v1017, 6
        %v1025 = vsel %vm982, %v1022, %v1024
        %1026 = vrot.lane.b32.xlu0 %v1023, 126
        %v1027 = vpop.permute.xlu0 %1026
        %1028 = vrot.lane.b32.xlu0 %v1025, 126
        %v1029 = vpop.permute.xlu0 %1028
        %v1032 = vadd.f32 %v1011, %v1027
        %v1033 = vadd.f32 %v1012, %v1029
        %s1034 = sld [smem:[#allocation2 + $0x2d]]
        %v1035 = vstv %s1034
        %v1036 = vmul.f32 %v158, %v1035
        %v1037 = vmul.f32 %v159, %v1035
        %v1038 = vmul.f32 %v160, %v1035
        %v1042 = vrot.slane %v1036, 6
        %v1043 = vrot.slane %v1037, 6
        %v1044 = vsel %vm982, %v1042, %v1043
        %v1045 = vrot.slane %v1038, 6
        %v1046 = vsel %vm982, %v1043, %v1045
        %1047 = vrot.lane.b32.xlu0 %v1044, 125
        %v1048 = vpop.permute.xlu0 %1047
        %1049 = vrot.lane.b32.xlu0 %v1046, 125
        %v1050 = vpop.permute.xlu0 %1049
        %v1053 = vadd.f32 %v1032, %v1048
        %v1054 = vadd.f32 %v1033, %v1050
        %s1055 = sld [smem:[#allocation2 + $0x2e]]
        %v1056 = vstv %s1055
        %v1057 = vmul.f32 %v158, %v1056
        %v1058 = vmul.f32 %v159, %v1056
        %v1059 = vmul.f32 %v160, %v1056
        %v1063 = vrot.slane %v1057, 6
        %v1064 = vrot.slane %v1058, 6
        %v1065 = vsel %vm982, %v1063, %v1064
        %v1066 = vrot.slane %v1059, 6
        %v1067 = vsel %vm982, %v1064, %v1066
        %1068 = vrot.lane.b32.xlu0 %v1065, 124
        %v1069 = vpop.permute.xlu0 %1068
        %1070 = vrot.lane.b32.xlu0 %v1067, 124
        %v1071 = vpop.permute.xlu0 %1070
        %v1074 = vadd.f32 %v1053, %v1069
        %v1075 = vadd.f32 %v1054, %v1071
        %s1076 = sld [smem:[#allocation2 + $0x2f]]
        %v1077 = vstv %s1076
        %v1078 = vmul.f32 %v158, %v1077
        %v1079 = vmul.f32 %v159, %v1077
        %v1080 = vmul.f32 %v160, %v1077
        %v1084 = vrot.slane %v1078, 6
        %v1085 = vrot.slane %v1079, 6
        %v1086 = vsel %vm982, %v1084, %v1085
        %v1087 = vrot.slane %v1080, 6
        %v1088 = vsel %vm982, %v1085, %v1087
        %1089 = vrot.lane.b32.xlu0 %v1086, 123
        %v1090 = vpop.permute.xlu0 %1089
        %1091 = vrot.lane.b32.xlu0 %v1088, 123
        %v1092 = vpop.permute.xlu0 %1091
        %v1095 = vadd.f32 %v1074, %v1090
        %v1096 = vadd.f32 %v1075, %v1092
        %s1097 = sld [smem:[#allocation2 + $0x30]]
        %v1098 = vstv %s1097
        %v1099 = vmul.f32 %v158, %v1098
        %v1100 = vmul.f32 %v159, %v1098
        %v1101 = vmul.f32 %v160, %v1098
        %v1105 = vrot.slane %v1099, 6
        %v1106 = vrot.slane %v1100, 6
        %v1107 = vsel %vm982, %v1105, %v1106
        %v1108 = vrot.slane %v1101, 6
        %v1109 = vsel %vm982, %v1106, %v1108
        %1110 = vrot.lane.b32.xlu0 %v1107, 122
        %v1111 = vpop.permute.xlu0 %1110
        %1112 = vrot.lane.b32.xlu0 %v1109, 122
        %v1113 = vpop.permute.xlu0 %1112
        %v1116 = vadd.f32 %v1095, %v1111
        %v1117 = vadd.f32 %v1096, %v1113
        %s1118 = sld [smem:[#allocation2 + $0x31]]
        %v1119 = vstv %s1118
        %v1120 = vmul.f32 %v161, %v1119
        %v1121 = vmul.f32 %v162, %v1119
        %v1122 = vadd.f32 %v1116, %v1120
        %v1123 = vadd.f32 %v1117, %v1121
        %s1124 = sld [smem:[#allocation2 + $0x32]]
        %v1125 = vstv %s1124
        %v1126 = vmul.f32 %v161, %v1125
        %v1127 = vmul.f32 %v162, %v1125
        %1130 = vrot.lane.b32.xlu0 %v1126, 127
        %v1131 = vpop.permute.xlu0 %1130
        %1132 = vrot.lane.b32.xlu0 %v1127, 127
        %v1133 = vpop.permute.xlu0 %1132
        %v1136 = vadd.f32 %v1122, %v1131
        %v1137 = vadd.f32 %v1123, %v1133
        %s1138 = sld [smem:[#allocation2 + $0x33]]
        %v1139 = vstv %s1138
        %v1140 = vmul.f32 %v161, %v1139
        %v1141 = vmul.f32 %v162, %v1139
        %1144 = vrot.lane.b32.xlu0 %v1140, 126
        %v1145 = vpop.permute.xlu0 %1144
        %1146 = vrot.lane.b32.xlu0 %v1141, 126
        %v1147 = vpop.permute.xlu0 %1146
        %v1150 = vadd.f32 %v1136, %v1145
        %v1151 = vadd.f32 %v1137, %v1147
        %s1152 = sld [smem:[#allocation2 + $0x34]]
        %v1153 = vstv %s1152
        %v1154 = vmul.f32 %v161, %v1153
        %v1155 = vmul.f32 %v162, %v1153
        %1158 = vrot.lane.b32.xlu0 %v1154, 125
        %v1159 = vpop.permute.xlu0 %1158
        %1160 = vrot.lane.b32.xlu0 %v1155, 125
        %v1161 = vpop.permute.xlu0 %1160
        %v1164 = vadd.f32 %v1150, %v1159
        %v1165 = vadd.f32 %v1151, %v1161
        %s1166 = sld [smem:[#allocation2 + $0x35]]
        %v1167 = vstv %s1166
        %v1168 = vmul.f32 %v161, %v1167
        %v1169 = vmul.f32 %v162, %v1167
        %1172 = vrot.lane.b32.xlu0 %v1168, 124
        %v1173 = vpop.permute.xlu0 %1172
        %1174 = vrot.lane.b32.xlu0 %v1169, 124
        %v1175 = vpop.permute.xlu0 %1174
        %v1178 = vadd.f32 %v1164, %v1173
        %v1179 = vadd.f32 %v1165, %v1175
        %s1180 = sld [smem:[#allocation2 + $0x36]]
        %v1181 = vstv %s1180
        %v1182 = vmul.f32 %v161, %v1181
        %v1183 = vmul.f32 %v162, %v1181
        %1186 = vrot.lane.b32.xlu0 %v1182, 123
        %v1187 = vpop.permute.xlu0 %1186
        %1188 = vrot.lane.b32.xlu0 %v1183, 123
        %v1189 = vpop.permute.xlu0 %1188
        %v1192 = vadd.f32 %v1178, %v1187
        %v1193 = vadd.f32 %v1179, %v1189
        %s1194 = sld [smem:[#allocation2 + $0x37]]
        %v1195 = vstv %s1194
        %v1196 = vmul.f32 %v161, %v1195
        %v1197 = vmul.f32 %v162, %v1195
        %1200 = vrot.lane.b32.xlu0 %v1196, 122
        %v1201 = vpop.permute.xlu0 %1200
        %1202 = vrot.lane.b32.xlu0 %v1197, 122
        %v1203 = vpop.permute.xlu0 %1202
        %v1206 = vadd.f32 %v1192, %v1201
        %v1207 = vadd.f32 %v1193, %v1203
        %s1208 = sld [smem:[#allocation2 + $0x38]]
        %v1209 = vstv %s1208
        %v1210 = vmul.f32 %v161, %v1209
        %v1211 = vmul.f32 %v162, %v1209
        %v1212 = vmul.f32 %v163, %v1209
        %v1216 = vrot.slane %v1210, 1
        %v1217 = vrot.slane %v1211, 1
        %v1218 = vsel %vm262, %v1216, %v1217
        %v1219 = vrot.slane %v1212, 1
        %v1220 = vsel %vm262, %v1217, %v1219
        %v1223 = vadd.f32 %v1206, %v1218
        %v1224 = vadd.f32 %v1207, %v1220
        %s1225 = sld [smem:[#allocation2 + $0x39]]
        %v1226 = vstv %s1225
        %v1227 = vmul.f32 %v161, %v1226
        %v1228 = vmul.f32 %v162, %v1226
        %v1229 = vmul.f32 %v163, %v1226
        %v1233 = vrot.slane %v1227, 1
        %v1234 = vrot.slane %v1228, 1
        %v1235 = vsel %vm262, %v1233, %v1234
        %v1236 = vrot.slane %v1229, 1
        %v1237 = vsel %vm262, %v1234, %v1236
        %1238 = vrot.lane.b32.xlu0 %v1235, 127
        %v1239 = vpop.permute.xlu0 %1238
        %1240 = vrot.lane.b32.xlu0 %v1237, 127
        %v1241 = vpop.permute.xlu0 %1240
        %v1244 = vadd.f32 %v1223, %v1239
        %v1245 = vadd.f32 %v1224, %v1241
        %s1246 = sld [smem:[#allocation2 + $0x3a]]
        %v1247 = vstv %s1246
        %v1248 = vmul.f32 %v161, %v1247
        %v1249 = vmul.f32 %v162, %v1247
        %v1250 = vmul.f32 %v163, %v1247
        %v1254 = vrot.slane %v1248, 1
        %v1255 = vrot.slane %v1249, 1
        %v1256 = vsel %vm262, %v1254, %v1255
        %v1257 = vrot.slane %v1250, 1
        %v1258 = vsel %vm262, %v1255, %v1257
        %1259 = vrot.lane.b32.xlu0 %v1256, 126
        %v1260 = vpop.permute.xlu0 %1259
        %1261 = vrot.lane.b32.xlu0 %v1258, 126
        %v1262 = vpop.permute.xlu0 %1261
        %v1265 = vadd.f32 %v1244, %v1260
        %v1266 = vadd.f32 %v1245, %v1262
        %s1267 = sld [smem:[#allocation2 + $0x3b]]
        %v1268 = vstv %s1267
        %v1269 = vmul.f32 %v161, %v1268
        %v1270 = vmul.f32 %v162, %v1268
        %v1271 = vmul.f32 %v163, %v1268
        %v1275 = vrot.slane %v1269, 1
        %v1276 = vrot.slane %v1270, 1
        %v1277 = vsel %vm262, %v1275, %v1276
        %v1278 = vrot.slane %v1271, 1
        %v1279 = vsel %vm262, %v1276, %v1278
        %1280 = vrot.lane.b32.xlu0 %v1277, 125
        %v1281 = vpop.permute.xlu0 %1280
        %1282 = vrot.lane.b32.xlu0 %v1279, 125
        %v1283 = vpop.permute.xlu0 %1282
        %v1286 = vadd.f32 %v1265, %v1281
        %v1287 = vadd.f32 %v1266, %v1283
        %s1288 = sld [smem:[#allocation2 + $0x3c]]
        %v1289 = vstv %s1288
        %v1290 = vmul.f32 %v161, %v1289
        %v1291 = vmul.f32 %v162, %v1289
        %v1292 = vmul.f32 %v163, %v1289
        %v1296 = vrot.slane %v1290, 1
        %v1297 = vrot.slane %v1291, 1
        %v1298 = vsel %vm262, %v1296, %v1297
        %v1299 = vrot.slane %v1292, 1
        %v1300 = vsel %vm262, %v1297, %v1299
        %1301 = vrot.lane.b32.xlu0 %v1298, 124
        %v1302 = vpop.permute.xlu0 %1301
        %1303 = vrot.lane.b32.xlu0 %v1300, 124
        %v1304 = vpop.permute.xlu0 %1303
        %v1307 = vadd.f32 %v1286, %v1302
        %v1308 = vadd.f32 %v1287, %v1304
        %s1309 = sld [smem:[#allocation2 + $0x3d]]
        %v1310 = vstv %s1309
        %v1311 = vmul.f32 %v161, %v1310
        %v1312 = vmul.f32 %v162, %v1310
        %v1313 = vmul.f32 %v163, %v1310
        %v1317 = vrot.slane %v1311, 1
        %v1318 = vrot.slane %v1312, 1
        %v1319 = vsel %vm262, %v1317, %v1318
        %v1320 = vrot.slane %v1313, 1
        %v1321 = vsel %vm262, %v1318, %v1320
        %1322 = vrot.lane.b32.xlu0 %v1319, 123
        %v1323 = vpop.permute.xlu0 %1322
        %1324 = vrot.lane.b32.xlu0 %v1321, 123
        %v1325 = vpop.permute.xlu0 %1324
        %v1328 = vadd.f32 %v1307, %v1323
        %v1329 = vadd.f32 %v1308, %v1325
        %s1330 = sld [smem:[#allocation2 + $0x3e]]
        %v1331 = vstv %s1330
        %v1332 = vmul.f32 %v161, %v1331
        %v1333 = vmul.f32 %v162, %v1331
        %v1334 = vmul.f32 %v163, %v1331
        %v1338 = vrot.slane %v1332, 1
        %v1339 = vrot.slane %v1333, 1
        %v1340 = vsel %vm262, %v1338, %v1339
        %v1341 = vrot.slane %v1334, 1
        %v1342 = vsel %vm262, %v1339, %v1341
        %1343 = vrot.lane.b32.xlu0 %v1340, 122
        %v1344 = vpop.permute.xlu0 %1343
        %1345 = vrot.lane.b32.xlu0 %v1342, 122
        %v1346 = vpop.permute.xlu0 %1345
        %v1349 = vadd.f32 %v1328, %v1344
        %v1350 = vadd.f32 %v1329, %v1346
        %s1351 = sld [smem:[#allocation2 + $0x3f]]
        %v1352 = vstv %s1351
        %v1353 = vmul.f32 %v161, %v1352
        %v1354 = vmul.f32 %v162, %v1352
        %v1355 = vmul.f32 %v163, %v1352
        %v1359 = vrot.slane %v1353, 2
        %v1360 = vrot.slane %v1354, 2
        %v1361 = vsel %vm406, %v1359, %v1360
        %v1362 = vrot.slane %v1355, 2
        %v1363 = vsel %vm406, %v1360, %v1362
        %v1366 = vadd.f32 %v1349, %v1361
        %v1367 = vadd.f32 %v1350, %v1363
        %s1368 = sld [smem:[#allocation2 + $0x40]]
        %v1369 = vstv %s1368
        %v1370 = vmul.f32 %v161, %v1369
        %v1371 = vmul.f32 %v162, %v1369
        %v1372 = vmul.f32 %v163, %v1369
        %v1376 = vrot.slane %v1370, 2
        %v1377 = vrot.slane %v1371, 2
        %v1378 = vsel %vm406, %v1376, %v1377
        %v1379 = vrot.slane %v1372, 2
        %v1380 = vsel %vm406, %v1377, %v1379
        %1381 = vrot.lane.b32.xlu0 %v1378, 127
        %v1382 = vpop.permute.xlu0 %1381
        %1383 = vrot.lane.b32.xlu0 %v1380, 127
        %v1384 = vpop.permute.xlu0 %1383
        %v1387 = vadd.f32 %v1366, %v1382
        %v1388 = vadd.f32 %v1367, %v1384
        %s1389 = sld [smem:[#allocation2 + $0x41]]
        %v1390 = vstv %s1389
        %v1391 = vmul.f32 %v161, %v1390
        %v1392 = vmul.f32 %v162, %v1390
        %v1393 = vmul.f32 %v163, %v1390
        %v1397 = vrot.slane %v1391, 2
        %v1398 = vrot.slane %v1392, 2
        %v1399 = vsel %vm406, %v1397, %v1398
        %v1400 = vrot.slane %v1393, 2
        %v1401 = vsel %vm406, %v1398, %v1400
        %1402 = vrot.lane.b32.xlu0 %v1399, 126
        %v1403 = vpop.permute.xlu0 %1402
        %1404 = vrot.lane.b32.xlu0 %v1401, 126
        %v1405 = vpop.permute.xlu0 %1404
        %v1408 = vadd.f32 %v1387, %v1403
        %v1409 = vadd.f32 %v1388, %v1405
        %s1410 = sld [smem:[#allocation2 + $0x42]]
        %v1411 = vstv %s1410
        %v1412 = vmul.f32 %v161, %v1411
        %v1413 = vmul.f32 %v162, %v1411
        %v1414 = vmul.f32 %v163, %v1411
        %v1418 = vrot.slane %v1412, 2
        %v1419 = vrot.slane %v1413, 2
        %v1420 = vsel %vm406, %v1418, %v1419
        %v1421 = vrot.slane %v1414, 2
        %v1422 = vsel %vm406, %v1419, %v1421
        %1423 = vrot.lane.b32.xlu0 %v1420, 125
        %v1424 = vpop.permute.xlu0 %1423
        %1425 = vrot.lane.b32.xlu0 %v1422, 125
        %v1426 = vpop.permute.xlu0 %1425
        %v1429 = vadd.f32 %v1408, %v1424
        %v1430 = vadd.f32 %v1409, %v1426
        %s1431 = sld [smem:[#allocation2 + $0x43]]
        %v1432 = vstv %s1431
        %v1433 = vmul.f32 %v161, %v1432
        %v1434 = vmul.f32 %v162, %v1432
        %v1435 = vmul.f32 %v163, %v1432
        %v1439 = vrot.slane %v1433, 2
        %v1440 = vrot.slane %v1434, 2
        %v1441 = vsel %vm406, %v1439, %v1440
        %v1442 = vrot.slane %v1435, 2
        %v1443 = vsel %vm406, %v1440, %v1442
        %1444 = vrot.lane.b32.xlu0 %v1441, 124
        %v1445 = vpop.permute.xlu0 %1444
        %1446 = vrot.lane.b32.xlu0 %v1443, 124
        %v1447 = vpop.permute.xlu0 %1446
        %v1450 = vadd.f32 %v1429, %v1445
        %v1451 = vadd.f32 %v1430, %v1447
        %s1452 = sld [smem:[#allocation2 + $0x44]]
        %v1453 = vstv %s1452
        %v1454 = vmul.f32 %v161, %v1453
        %v1455 = vmul.f32 %v162, %v1453
        %v1456 = vmul.f32 %v163, %v1453
        %v1460 = vrot.slane %v1454, 2
        %v1461 = vrot.slane %v1455, 2
        %v1462 = vsel %vm406, %v1460, %v1461
        %v1463 = vrot.slane %v1456, 2
        %v1464 = vsel %vm406, %v1461, %v1463
        %1465 = vrot.lane.b32.xlu0 %v1462, 123
        %v1466 = vpop.permute.xlu0 %1465
        %1467 = vrot.lane.b32.xlu0 %v1464, 123
        %v1468 = vpop.permute.xlu0 %1467
        %v1471 = vadd.f32 %v1450, %v1466
        %v1472 = vadd.f32 %v1451, %v1468
        %s1473 = sld [smem:[#allocation2 + $0x45]]
        %v1474 = vstv %s1473
        %v1475 = vmul.f32 %v161, %v1474
        %v1476 = vmul.f32 %v162, %v1474
        %v1477 = vmul.f32 %v163, %v1474
        %v1481 = vrot.slane %v1475, 2
        %v1482 = vrot.slane %v1476, 2
        %v1483 = vsel %vm406, %v1481, %v1482
        %v1484 = vrot.slane %v1477, 2
        %v1485 = vsel %vm406, %v1482, %v1484
        %1486 = vrot.lane.b32.xlu0 %v1483, 122
        %v1487 = vpop.permute.xlu0 %1486
        %1488 = vrot.lane.b32.xlu0 %v1485, 122
        %v1489 = vpop.permute.xlu0 %1488
        %v1492 = vadd.f32 %v1471, %v1487
        %v1493 = vadd.f32 %v1472, %v1489
        %s1494 = sld [smem:[#allocation2 + $0x46]]
        %v1495 = vstv %s1494
        %v1496 = vmul.f32 %v161, %v1495
        %v1497 = vmul.f32 %v162, %v1495
        %v1498 = vmul.f32 %v163, %v1495
        %v1502 = vrot.slane %v1496, 3
        %v1503 = vrot.slane %v1497, 3
        %v1504 = vsel %vm550, %v1502, %v1503
        %v1505 = vrot.slane %v1498, 3
        %v1506 = vsel %vm550, %v1503, %v1505
        %v1509 = vadd.f32 %v1492, %v1504
        %v1510 = vadd.f32 %v1493, %v1506
        %s1511 = sld [smem:[#allocation2 + $0x47]]
        %v1512 = vstv %s1511
        %v1513 = vmul.f32 %v161, %v1512
        %v1514 = vmul.f32 %v162, %v1512
        %v1515 = vmul.f32 %v163, %v1512
        %v1519 = vrot.slane %v1513, 3
        %v1520 = vrot.slane %v1514, 3
        %v1521 = vsel %vm550, %v1519, %v1520
        %v1522 = vrot.slane %v1515, 3
        %v1523 = vsel %vm550, %v1520, %v1522
        %1524 = vrot.lane.b32.xlu0 %v1521, 127
        %v1525 = vpop.permute.xlu0 %1524
        %1526 = vrot.lane.b32.xlu0 %v1523, 127
        %v1527 = vpop.permute.xlu0 %1526
        %v1530 = vadd.f32 %v1509, %v1525
        %v1531 = vadd.f32 %v1510, %v1527
        %s1532 = sld [smem:[#allocation2 + $0x48]]
        %v1533 = vstv %s1532
        %v1534 = vmul.f32 %v161, %v1533
        %v1535 = vmul.f32 %v162, %v1533
        %v1536 = vmul.f32 %v163, %v1533
        %v1540 = vrot.slane %v1534, 3
        %v1541 = vrot.slane %v1535, 3
        %v1542 = vsel %vm550, %v1540, %v1541
        %v1543 = vrot.slane %v1536, 3
        %v1544 = vsel %vm550, %v1541, %v1543
        %1545 = vrot.lane.b32.xlu0 %v1542, 126
        %v1546 = vpop.permute.xlu0 %1545
        %1547 = vrot.lane.b32.xlu0 %v1544, 126
        %v1548 = vpop.permute.xlu0 %1547
        %v1551 = vadd.f32 %v1530, %v1546
        %v1552 = vadd.f32 %v1531, %v1548
        %s1553 = sld [smem:[#allocation2 + $0x49]]
        %v1554 = vstv %s1553
        %v1555 = vmul.f32 %v161, %v1554
        %v1556 = vmul.f32 %v162, %v1554
        %v1557 = vmul.f32 %v163, %v1554
        %v1561 = vrot.slane %v1555, 3
        %v1562 = vrot.slane %v1556, 3
        %v1563 = vsel %vm550, %v1561, %v1562
        %v1564 = vrot.slane %v1557, 3
        %v1565 = vsel %vm550, %v1562, %v1564
        %1566 = vrot.lane.b32.xlu0 %v1563, 125
        %v1567 = vpop.permute.xlu0 %1566
        %1568 = vrot.lane.b32.xlu0 %v1565, 125
        %v1569 = vpop.permute.xlu0 %1568
        %v1572 = vadd.f32 %v1551, %v1567
        %v1573 = vadd.f32 %v1552, %v1569
        %s1574 = sld [smem:[#allocation2 + $0x4a]]
        %v1575 = vstv %s1574
        %v1576 = vmul.f32 %v161, %v1575
        %v1577 = vmul.f32 %v162, %v1575
        %v1578 = vmul.f32 %v163, %v1575
        %v1582 = vrot.slane %v1576, 3
        %v1583 = vrot.slane %v1577, 3
        %v1584 = vsel %vm550, %v1582, %v1583
        %v1585 = vrot.slane %v1578, 3
        %v1586 = vsel %vm550, %v1583, %v1585
        %1587 = vrot.lane.b32.xlu0 %v1584, 124
        %v1588 = vpop.permute.xlu0 %1587
        %1589 = vrot.lane.b32.xlu0 %v1586, 124
        %v1590 = vpop.permute.xlu0 %1589
        %v1593 = vadd.f32 %v1572, %v1588
        %v1594 = vadd.f32 %v1573, %v1590
        %s1595 = sld [smem:[#allocation2 + $0x4b]]
        %v1596 = vstv %s1595
        %v1597 = vmul.f32 %v161, %v1596
        %v1598 = vmul.f32 %v162, %v1596
        %v1599 = vmul.f32 %v163, %v1596
        %v1603 = vrot.slane %v1597, 3
        %v1604 = vrot.slane %v1598, 3
        %v1605 = vsel %vm550, %v1603, %v1604
        %v1606 = vrot.slane %v1599, 3
        %v1607 = vsel %vm550, %v1604, %v1606
        %1608 = vrot.lane.b32.xlu0 %v1605, 123
        %v1609 = vpop.permute.xlu0 %1608
        %1610 = vrot.lane.b32.xlu0 %v1607, 123
        %v1611 = vpop.permute.xlu0 %1610
        %v1614 = vadd.f32 %v1593, %v1609
        %v1615 = vadd.f32 %v1594, %v1611
        %s1616 = sld [smem:[#allocation2 + $0x4c]]
        %v1617 = vstv %s1616
        %v1618 = vmul.f32 %v161, %v1617
        %v1619 = vmul.f32 %v162, %v1617
        %v1620 = vmul.f32 %v163, %v1617
        %v1624 = vrot.slane %v1618, 3
        %v1625 = vrot.slane %v1619, 3
        %v1626 = vsel %vm550, %v1624, %v1625
        %v1627 = vrot.slane %v1620, 3
        %v1628 = vsel %vm550, %v1625, %v1627
        %1629 = vrot.lane.b32.xlu0 %v1626, 122
        %v1630 = vpop.permute.xlu0 %1629
        %1631 = vrot.lane.b32.xlu0 %v1628, 122
        %v1632 = vpop.permute.xlu0 %1631
        %v1635 = vadd.f32 %v1614, %v1630
        %v1636 = vadd.f32 %v1615, %v1632
        %s1637 = sld [smem:[#allocation2 + $0x4d]]
        %v1638 = vstv %s1637
        %v1639 = vmul.f32 %v161, %v1638
        %v1640 = vmul.f32 %v162, %v1638
        %v1641 = vmul.f32 %v163, %v1638
        %v1645 = vrot.slane %v1639, 4
        %v1646 = vrot.slane %v1640, 4
        %v1647 = vsel %vm694, %v1645, %v1646
        %v1648 = vrot.slane %v1641, 4
        %v1649 = vsel %vm694, %v1646, %v1648
        %v1652 = vadd.f32 %v1635, %v1647
        %v1653 = vadd.f32 %v1636, %v1649
        %s1654 = sld [smem:[#allocation2 + $0x4e]]
        %v1655 = vstv %s1654
        %v1656 = vmul.f32 %v161, %v1655
        %v1657 = vmul.f32 %v162, %v1655
        %v1658 = vmul.f32 %v163, %v1655
        %v1662 = vrot.slane %v1656, 4
        %v1663 = vrot.slane %v1657, 4
        %v1664 = vsel %vm694, %v1662, %v1663
        %v1665 = vrot.slane %v1658, 4
        %v1666 = vsel %vm694, %v1663, %v1665
        %1667 = vrot.lane.b32.xlu0 %v1664, 127
        %v1668 = vpop.permute.xlu0 %1667
        %1669 = vrot.lane.b32.xlu0 %v1666, 127
        %v1670 = vpop.permute.xlu0 %1669
        %v1673 = vadd.f32 %v1652, %v1668
        %v1674 = vadd.f32 %v1653, %v1670
        %s1675 = sld [smem:[#allocation2 + $0x4f]]
        %v1676 = vstv %s1675
        %v1677 = vmul.f32 %v161, %v1676
        %v1678 = vmul.f32 %v162, %v1676
        %v1679 = vmul.f32 %v163, %v1676
        %v1683 = vrot.slane %v1677, 4
        %v1684 = vrot.slane %v1678, 4
        %v1685 = vsel %vm694, %v1683, %v1684
        %v1686 = vrot.slane %v1679, 4
        %v1687 = vsel %vm694, %v1684, %v1686
        %1688 = vrot.lane.b32.xlu0 %v1685, 126
        %v1689 = vpop.permute.xlu0 %1688
        %1690 = vrot.lane.b32.xlu0 %v1687, 126
        %v1691 = vpop.permute.xlu0 %1690
        %v1694 = vadd.f32 %v1673, %v1689
        %v1695 = vadd.f32 %v1674, %v1691
        %s1696 = sld [smem:[#allocation2 + $0x50]]
        %v1697 = vstv %s1696
        %v1698 = vmul.f32 %v161, %v1697
        %v1699 = vmul.f32 %v162, %v1697
        %v1700 = vmul.f32 %v163, %v1697
        %v1704 = vrot.slane %v1698, 4
        %v1705 = vrot.slane %v1699, 4
        %v1706 = vsel %vm694, %v1704, %v1705
        %v1707 = vrot.slane %v1700, 4
        %v1708 = vsel %vm694, %v1705, %v1707
        %1709 = vrot.lane.b32.xlu0 %v1706, 125
        %v1710 = vpop.permute.xlu0 %1709
        %1711 = vrot.lane.b32.xlu0 %v1708, 125
        %v1712 = vpop.permute.xlu0 %1711
        %v1715 = vadd.f32 %v1694, %v1710
        %v1716 = vadd.f32 %v1695, %v1712
        %s1717 = sld [smem:[#allocation2 + $0x51]]
        %v1718 = vstv %s1717
        %v1719 = vmul.f32 %v161, %v1718
        %v1720 = vmul.f32 %v162, %v1718
        %v1721 = vmul.f32 %v163, %v1718
        %v1725 = vrot.slane %v1719, 4
        %v1726 = vrot.slane %v1720, 4
        %v1727 = vsel %vm694, %v1725, %v1726
        %v1728 = vrot.slane %v1721, 4
        %v1729 = vsel %vm694, %v1726, %v1728
        %1730 = vrot.lane.b32.xlu0 %v1727, 124
        %v1731 = vpop.permute.xlu0 %1730
        %1732 = vrot.lane.b32.xlu0 %v1729, 124
        %v1733 = vpop.permute.xlu0 %1732
        %v1736 = vadd.f32 %v1715, %v1731
        %v1737 = vadd.f32 %v1716, %v1733
        %s1738 = sld [smem:[#allocation2 + $0x52]]
        %v1739 = vstv %s1738
        %v1740 = vmul.f32 %v161, %v1739
        %v1741 = vmul.f32 %v162, %v1739
        %v1742 = vmul.f32 %v163, %v1739
        %v1746 = vrot.slane %v1740, 4
        %v1747 = vrot.slane %v1741, 4
        %v1748 = vsel %vm694, %v1746, %v1747
        %v1749 = vrot.slane %v1742, 4
        %v1750 = vsel %vm694, %v1747, %v1749
        %1751 = vrot.lane.b32.xlu0 %v1748, 123
        %v1752 = vpop.permute.xlu0 %1751
        %1753 = vrot.lane.b32.xlu0 %v1750, 123
        %v1754 = vpop.permute.xlu0 %1753
        %v1757 = vadd.f32 %v1736, %v1752
        %v1758 = vadd.f32 %v1737, %v1754
        %s1759 = sld [smem:[#allocation2 + $0x53]]
        %v1760 = vstv %s1759
        %v1761 = vmul.f32 %v161, %v1760
        %v1762 = vmul.f32 %v162, %v1760
        %v1763 = vmul.f32 %v163, %v1760
        %v1767 = vrot.slane %v1761, 4
        %v1768 = vrot.slane %v1762, 4
        %v1769 = vsel %vm694, %v1767, %v1768
        %v1770 = vrot.slane %v1763, 4
        %v1771 = vsel %vm694, %v1768, %v1770
        %1772 = vrot.lane.b32.xlu0 %v1769, 122
        %v1773 = vpop.permute.xlu0 %1772
        %1774 = vrot.lane.b32.xlu0 %v1771, 122
        %v1775 = vpop.permute.xlu0 %1774
        %v1778 = vadd.f32 %v1757, %v1773
        %v1779 = vadd.f32 %v1758, %v1775
        %s1780 = sld [smem:[#allocation2 + $0x54]]
        %v1781 = vstv %s1780
        %v1782 = vmul.f32 %v161, %v1781
        %v1783 = vmul.f32 %v162, %v1781
        %v1784 = vmul.f32 %v163, %v1781
        %v1788 = vrot.slane %v1782, 5
        %v1789 = vrot.slane %v1783, 5
        %v1790 = vsel %vm838, %v1788, %v1789
        %v1791 = vrot.slane %v1784, 5
        %v1792 = vsel %vm838, %v1789, %v1791
        %v1795 = vadd.f32 %v1778, %v1790
        %v1796 = vadd.f32 %v1779, %v1792
        %s1797 = sld [smem:[#allocation2 + $0x55]]
        %v1798 = vstv %s1797
        %v1799 = vmul.f32 %v161, %v1798
        %v1800 = vmul.f32 %v162, %v1798
        %v1801 = vmul.f32 %v163, %v1798
        %v1805 = vrot.slane %v1799, 5
        %v1806 = vrot.slane %v1800, 5
        %v1807 = vsel %vm838, %v1805, %v1806
        %v1808 = vrot.slane %v1801, 5
        %v1809 = vsel %vm838, %v1806, %v1808
        %1810 = vrot.lane.b32.xlu0 %v1807, 127
        %v1811 = vpop.permute.xlu0 %1810
        %1812 = vrot.lane.b32.xlu0 %v1809, 127
        %v1813 = vpop.permute.xlu0 %1812
        %v1816 = vadd.f32 %v1795, %v1811
        %v1817 = vadd.f32 %v1796, %v1813
        %s1818 = sld [smem:[#allocation2 + $0x56]]
        %v1819 = vstv %s1818
        %v1820 = vmul.f32 %v161, %v1819
        %v1821 = vmul.f32 %v162, %v1819
        %v1822 = vmul.f32 %v163, %v1819
        %v1826 = vrot.slane %v1820, 5
        %v1827 = vrot.slane %v1821, 5
        %v1828 = vsel %vm838, %v1826, %v1827
        %v1829 = vrot.slane %v1822, 5
        %v1830 = vsel %vm838, %v1827, %v1829
        %1831 = vrot.lane.b32.xlu0 %v1828, 126
        %v1832 = vpop.permute.xlu0 %1831
        %1833 = vrot.lane.b32.xlu0 %v1830, 126
        %v1834 = vpop.permute.xlu0 %1833
        %v1837 = vadd.f32 %v1816, %v1832
        %v1838 = vadd.f32 %v1817, %v1834
        %s1839 = sld [smem:[#allocation2 + $0x57]]
        %v1840 = vstv %s1839
        %v1841 = vmul.f32 %v161, %v1840
        %v1842 = vmul.f32 %v162, %v1840
        %v1843 = vmul.f32 %v163, %v1840
        %v1847 = vrot.slane %v1841, 5
        %v1848 = vrot.slane %v1842, 5
        %v1849 = vsel %vm838, %v1847, %v1848
        %v1850 = vrot.slane %v1843, 5
        %v1851 = vsel %vm838, %v1848, %v1850
        %1852 = vrot.lane.b32.xlu0 %v1849, 125
        %v1853 = vpop.permute.xlu0 %1852
        %1854 = vrot.lane.b32.xlu0 %v1851, 125
        %v1855 = vpop.permute.xlu0 %1854
        %v1858 = vadd.f32 %v1837, %v1853
        %v1859 = vadd.f32 %v1838, %v1855
        %s1860 = sld [smem:[#allocation2 + $0x58]]
        %v1861 = vstv %s1860
        %v1862 = vmul.f32 %v161, %v1861
        %v1863 = vmul.f32 %v162, %v1861
        %v1864 = vmul.f32 %v163, %v1861
        %v1868 = vrot.slane %v1862, 5
        %v1869 = vrot.slane %v1863, 5
        %v1870 = vsel %vm838, %v1868, %v1869
        %v1871 = vrot.slane %v1864, 5
        %v1872 = vsel %vm838, %v1869, %v1871
        %1873 = vrot.lane.b32.xlu0 %v1870, 124
        %v1874 = vpop.permute.xlu0 %1873
        %1875 = vrot.lane.b32.xlu0 %v1872, 124
        %v1876 = vpop.permute.xlu0 %1875
        %v1879 = vadd.f32 %v1858, %v1874
        %v1880 = vadd.f32 %v1859, %v1876
        %s1881 = sld [smem:[#allocation2 + $0x59]]
        %v1882 = vstv %s1881
        %v1883 = vmul.f32 %v161, %v1882
        %v1884 = vmul.f32 %v162, %v1882
        %v1885 = vmul.f32 %v163, %v1882
        %v1889 = vrot.slane %v1883, 5
        %v1890 = vrot.slane %v1884, 5
        %v1891 = vsel %vm838, %v1889, %v1890
        %v1892 = vrot.slane %v1885, 5
        %v1893 = vsel %vm838, %v1890, %v1892
        %1894 = vrot.lane.b32.xlu0 %v1891, 123
        %v1895 = vpop.permute.xlu0 %1894
        %1896 = vrot.lane.b32.xlu0 %v1893, 123
        %v1897 = vpop.permute.xlu0 %1896
        %v1900 = vadd.f32 %v1879, %v1895
        %v1901 = vadd.f32 %v1880, %v1897
        %s1902 = sld [smem:[#allocation2 + $0x5a]]
        %v1903 = vstv %s1902
        %v1904 = vmul.f32 %v161, %v1903
        %v1905 = vmul.f32 %v162, %v1903
        %v1906 = vmul.f32 %v163, %v1903
        %v1910 = vrot.slane %v1904, 5
        %v1911 = vrot.slane %v1905, 5
        %v1912 = vsel %vm838, %v1910, %v1911
        %v1913 = vrot.slane %v1906, 5
        %v1914 = vsel %vm838, %v1911, %v1913
        %1915 = vrot.lane.b32.xlu0 %v1912, 122
        %v1916 = vpop.permute.xlu0 %1915
        %1917 = vrot.lane.b32.xlu0 %v1914, 122
        %v1918 = vpop.permute.xlu0 %1917
        %v1921 = vadd.f32 %v1900, %v1916
        %v1922 = vadd.f32 %v1901, %v1918
        %s1923 = sld [smem:[#allocation2 + $0x5b]]
        %v1924 = vstv %s1923
        %v1925 = vmul.f32 %v161, %v1924
        %v1926 = vmul.f32 %v162, %v1924
        %v1927 = vmul.f32 %v163, %v1924
        %v1931 = vrot.slane %v1925, 6
        %v1932 = vrot.slane %v1926, 6
        %v1933 = vsel %vm982, %v1931, %v1932
        %v1934 = vrot.slane %v1927, 6
        %v1935 = vsel %vm982, %v1932, %v1934
        %v1938 = vadd.f32 %v1921, %v1933
        %v1939 = vadd.f32 %v1922, %v1935
        %s1940 = sld [smem:[#allocation2 + $0x5c]]
        %v1941 = vstv %s1940
        %v1942 = vmul.f32 %v161, %v1941
        %v1943 = vmul.f32 %v162, %v1941
        %v1944 = vmul.f32 %v163, %v1941
        %v1948 = vrot.slane %v1942, 6
        %v1949 = vrot.slane %v1943, 6
        %v1950 = vsel %vm982, %v1948, %v1949
        %v1951 = vrot.slane %v1944, 6
        %v1952 = vsel %vm982, %v1949, %v1951
        %1953 = vrot.lane.b32.xlu0 %v1950, 127
        %v1954 = vpop.permute.xlu0 %1953
        %1955 = vrot.lane.b32.xlu0 %v1952, 127
        %v1956 = vpop.permute.xlu0 %1955
        %v1959 = vadd.f32 %v1938, %v1954
        %v1960 = vadd.f32 %v1939, %v1956
        %s1961 = sld [smem:[#allocation2 + $0x5d]]
        %v1962 = vstv %s1961
        %v1963 = vmul.f32 %v161, %v1962
        %v1964 = vmul.f32 %v162, %v1962
        %v1965 = vmul.f32 %v163, %v1962
        %v1969 = vrot.slane %v1963, 6
        %v1970 = vrot.slane %v1964, 6
        %v1971 = vsel %vm982, %v1969, %v1970
        %v1972 = vrot.slane %v1965, 6
        %v1973 = vsel %vm982, %v1970, %v1972
        %1974 = vrot.lane.b32.xlu0 %v1971, 126
        %v1975 = vpop.permute.xlu0 %1974
        %1976 = vrot.lane.b32.xlu0 %v1973, 126
        %v1977 = vpop.permute.xlu0 %1976
        %v1980 = vadd.f32 %v1959, %v1975
        %v1981 = vadd.f32 %v1960, %v1977
        %s1982 = sld [smem:[#allocation2 + $0x5e]]
        %v1983 = vstv %s1982
        %v1984 = vmul.f32 %v161, %v1983
        %v1985 = vmul.f32 %v162, %v1983
        %v1986 = vmul.f32 %v163, %v1983
        %v1990 = vrot.slane %v1984, 6
        %v1991 = vrot.slane %v1985, 6
        %v1992 = vsel %vm982, %v1990, %v1991
        %v1993 = vrot.slane %v1986, 6
        %v1994 = vsel %vm982, %v1991, %v1993
        %1995 = vrot.lane.b32.xlu0 %v1992, 125
        %v1996 = vpop.permute.xlu0 %1995
        %1997 = vrot.lane.b32.xlu0 %v1994, 125
        %v1998 = vpop.permute.xlu0 %1997
        %v2001 = vadd.f32 %v1980, %v1996
        %v2002 = vadd.f32 %v1981, %v1998
        %s2003 = sld [smem:[#allocation2 + $0x5f]]
        %v2004 = vstv %s2003
        %v2005 = vmul.f32 %v161, %v2004
        %v2006 = vmul.f32 %v162, %v2004
        %v2007 = vmul.f32 %v163, %v2004
        %v2011 = vrot.slane %v2005, 6
        %v2012 = vrot.slane %v2006, 6
        %v2013 = vsel %vm982, %v2011, %v2012
        %v2014 = vrot.slane %v2007, 6
        %v2015 = vsel %vm982, %v2012, %v2014
        %2016 = vrot.lane.b32.xlu0 %v2013, 124
        %v2017 = vpop.permute.xlu0 %2016
        %2018 = vrot.lane.b32.xlu0 %v2015, 124
        %v2019 = vpop.permute.xlu0 %2018
        %v2022 = vadd.f32 %v2001, %v2017
        %v2023 = vadd.f32 %v2002, %v2019
        %s2024 = sld [smem:[#allocation2 + $0x60]]
        %v2025 = vstv %s2024
        %v2026 = vmul.f32 %v161, %v2025
        %v2027 = vmul.f32 %v162, %v2025
        %v2028 = vmul.f32 %v163, %v2025
        %v2032 = vrot.slane %v2026, 6
        %v2033 = vrot.slane %v2027, 6
        %v2034 = vsel %vm982, %v2032, %v2033
        %v2035 = vrot.slane %v2028, 6
        %v2036 = vsel %vm982, %v2033, %v2035
        %2037 = vrot.lane.b32.xlu0 %v2034, 123
        %v2038 = vpop.permute.xlu0 %2037
        %2039 = vrot.lane.b32.xlu0 %v2036, 123
        %v2040 = vpop.permute.xlu0 %2039
        %v2043 = vadd.f32 %v2022, %v2038
        %v2044 = vadd.f32 %v2023, %v2040
        %s2045 = sld [smem:[#allocation2 + $0x61]]
        %v2046 = vstv %s2045
        %v2047 = vmul.f32 %v161, %v2046
        %v2048 = vmul.f32 %v162, %v2046
        %v2049 = vmul.f32 %v163, %v2046
        %v2053 = vrot.slane %v2047, 6
        %v2054 = vrot.slane %v2048, 6
        %v2055 = vsel %vm982, %v2053, %v2054
        %v2056 = vrot.slane %v2049, 6
        %v2057 = vsel %vm982, %v2054, %v2056
        %2058 = vrot.lane.b32.xlu0 %v2055, 122
        %v2059 = vpop.permute.xlu0 %2058
        %2060 = vrot.lane.b32.xlu0 %v2057, 122
        %v2061 = vpop.permute.xlu0 %2060
        %v2064 = vadd.f32 %v2043, %v2059
        %v2065 = vadd.f32 %v2044, %v2061
        %v2066 = vxor.u32 %v2064, 2147483648
        %v2067 = vxor.u32 %v2065, 2147483648
        %v2068 = vmul.f32 %v2066, 1.442695
        %v2069 = vpow.pop %v2068
        %v2070 = vmul.f32 %v2067, 1.442695
        %v2071 = vpow.pop %v2070
        %v2072 = vadd.f32 %v2069, 1.0
        %v2073 = vadd.f32 %v2071, 1.0
        %v2074 = vrcp.pop %v2072
        %v2075 = vmul.f32 1.0, %v2074
        %v2076 = vrcp.pop %v2073
        %v2077 = vmul.f32 1.0, %v2076
        %vm2078 = vcmask 130048
        %2079 = vst.msk [vmem:[%s157] sm:$0xff] %vm2078, %v2075
        %2080 = vst.msk [vmem:[%s157 + $0x8] sm:$0xff] %vm2078, %v2077
        %p2081 = scmp.lt.s32.totalorder %s14, 1
        %s2082 = scalar_select %p2081, %s14, 1
        %s2083 = smul.addr %s2082, 2
        %s2084 = smul.addr %s2083, 8
        %s2085 = scalar_lea.vmem %s2, %s2084
        // Predicated region
        $region33: #{cbam_forward.8} parent=27 // pred_check
          %p2086 = pneg %p79
        $region34: #{cbam_forward.8} parent=27 // pred_check_branch
          %2088 = sbr.rel (%p2086) target = $region36
        $region35: #{cbam_forward.8} parent=27 // pred_region
          _
        $region36: #{cbam_forward.8} parent=27 // pred_fallthru
          _
      $region28: #{cbam_forward.8} parent=5 // pred_fallthru
        _
      %p2089 = scmp.le.s32.totalorder 2, %s9
      // Predicated region
      $region37: #{cbam_forward.8} parent=5 // pred_check
        %p2090 = pneg %p2089
      $region38: #{cbam_forward.8} parent=5 // pred_check_branch
        %2092 = sbr.rel (%p2090) target = $region40
      $region39: #{cbam_forward.8} parent=5 // pred_region
        %s2093 = ssub.s32 %s9, 2
        // Predicated region
        $region41: #{cbam_forward.8} parent=39 // pred_check
          %p2094 = pneg %p85
        $region42: #{cbam_forward.8} parent=39 // pred_check_branch
          %2096 = sbr.rel (%p2094) target = $region44
        $region43: #{cbam_forward.8} parent=39 // pred_region
          %p2097 = scmp.lt.s32.totalorder %s15, 1
          %s2098 = scalar_select %p2097, %s15, 1
          %s2099 = smul.addr %s2098, 2
          %s2100 = smul.addr %s2099, 8
          %s2101 = scalar_lea.vmem %s2, %s2100
        $region44: #{cbam_forward.8} parent=39 // pred_fallthru
          _
      $region40: #{cbam_forward.8} parent=5 // pred_fallthru
        _
    $region6: #{cbam_forward.8} parent=1 // loop_footer
      %s13 = sadd.s32 1, %s9
    $region7: #{cbam_forward.8} parent=1 // loop_footer_branch
      %8 = sbr.rel target = $region3
    $region8: #{cbam_forward.8} parent=1 // loop_exit
      _
    %2102 = vsyncpa [#allocation3], 1
    %s2103 = scalar_lea.sflag [#allocation3], 1
    %2104 = vsyncpa %s2103, 1

</llo_original>
